<compile_context>
chip_gen: v7x
topology: tpu7x:2x2x1
jax: 0.10.0
libtpu: 0.0.40
codegen_flags: <defaults>
</compile_context>

<pallas_src>
import functools
import math

import jax
import jax.numpy as jnp
from jax import lax
from jax.experimental import pallas as pl
from jax.experimental.pallas import tpu as pltpu


# ----------------------------- kernel ---------------------------------------

def bigru_kernel(x_ref, len_ref, *rest, num_layers, hidden, matmul_dtype):
    """Fused bidirectional multi-layer GRU forward (eval mode)."""
    H = hidden
    o_ref = rest[-2]             # (Bt, S, Opad) padded, lane-dense output
    y_scr = rest[-1]             # (Bt, S, 2H) VMEM scratch for layer hand-off
    w_refs = rest[:-2]           # 4 refs per layer: w_ih_cat, b_x, w_hh_cat, b_hn

    Bt, S, _ = x_ref.shape
    B2 = 2 * Bt

    def mm(a, b):                # optional bf16 MXU inputs, f32 accumulation
        return jnp.dot(a.astype(matmul_dtype), b.astype(matmul_dtype),
                       preferred_element_type=jnp.float32)

    layer_in = x_ref[...]                                    # (Bt, S, Din)
    lengths = len_ref[...]                                   # (Bt, 1) int32

    # Direction-stacked row bookkeeping: rows [0,Bt) = fwd, [Bt,2Bt) = bwd.
    is_fwd = lax.broadcasted_iota(jnp.int32, (B2, 1), 0) < Bt   # (2Bt, 1) bool
    len_stk = jnp.concatenate([lengths, lengths], axis=0)       # (2Bt, 1)

    # Lane-dense zero init: pad lanes [2H, Opad) and padded timesteps stay 0.0.
    o_ref[...] = jnp.zeros_like(o_ref)

    for l in range(num_layers):
        w_ih, b_x, w_hh, b_hn = w_refs[4 * l:4 * l + 4]
        dst = o_ref if l == num_layers - 1 else y_scr

        # Fused input projection: BOTH directions, ALL timesteps, one matmul.
        Din = layer_in.shape[-1]
        xp = mm(layer_in.reshape(Bt * S, Din), w_ih[...]) + b_x[...]
        xp = xp.reshape(Bt, S, 6 * H)   # [..., :3H] fwd gates, [..., 3H:] bwd

        w_hh_v = w_hh[...]              # (H, 6H)   [fwd 3H | bwd 3H]
        b_hn_v = b_hn[...]              # (2Bt, H)  stacked hidden n-gate bias

        h = jnp.zeros((B2, H), jnp.float32)    # stacked [h_fwd ; h_bwd]
        # TODO(synk): lax.fori_loop(..., unroll=4..8) for production S.
        for i in range(S):              # fwd handles t = i, bwd handles t = S-1-i
            j = S - 1 - i
            # Off the serial chain: stacked input-side gates for this step.
            gx = jnp.concatenate([xp[:, i, :3 * H], xp[:, j, 3 * H:]], axis=0)
            # Serial chain: one recurrent matmul covers both directions.
            gh_both = mm(h, w_hh_v)                               # (2Bt, 6H)
            gh = jnp.where(is_fwd, gh_both[:, :3 * H], gh_both[:, 3 * H:])
            rz = jax.nn.sigmoid(gx[:, :2 * H] + gh[:, :2 * H])    # r,z fused
            r, z = rz[:, :H], rz[:, H:]
            n = jnp.tanh(gx[:, 2 * H:] + r * (gh[:, 2 * H:] + b_hn_v))
            h_new = n + z * (h - n)      # == (1-z)*n + z*h, one fewer vmul

            t_row = jnp.where(is_fwd, jnp.int32(i), jnp.int32(j))   # (2Bt, 1)
            valid = t_row < len_stk                 # packed-sequence masking
            out_v = jnp.where(valid, h_new, 0.0)    # padding_value = 0.0
            h = jnp.where(valid, h_new, h)
            dst[:, i, :H] = out_v[:Bt]              # forward half  at time i
            dst[:, j, H:2 * H] = out_v[Bt:]         # backward half at time j

        if l < num_layers - 1:
            layer_in = y_scr[...]     # (Bt, S, 2H); eval-mode dropout = identity


# ----------------------------- wrapper ---------------------------------------

def bigru_forward(params, X, lengths, *, batch_tile=None,
                  matmul_dtype=jnp.float32):
    # matmul_dtype=jnp.bfloat16 recommended for production H on v6e/v7x.
    B, S, In = X.shape
    H = params["hidden"]
    L = params["num_layers"]
    lengths = jnp.asarray(lengths, jnp.int32).reshape(B, 1)

    Bt = B if batch_tile is None else batch_tile    # split across v7x TCs when
    assert B % Bt == 0                              # B is large (keep Bt >= 8)
    Opad = max(128, -(-2 * H // 128) * 128)         # lane-dense output width

    # Per-layer fused weights prepared once in the wrapper:
    #   w_ih_cat : (Din, 6H)  columns [r_f z_f n_f | r_b z_b n_b]
    #   b_x      : (1, 6H)    b_ih (+ b_hh pre-summed for the r/z gates)
    #   w_hh_cat : (H, 6H)
    #   b_hn_stk : (2*Bt, H)  hidden-side n-gate bias, stacked per direction
    weight_args, weight_specs = [], []
    for l in range(L):
        w_ih, w_hh = params["w_ih"][l], params["w_hh"][l]
        b_ih, b_hh = params["b_ih"][l], params["b_hh"][l]
        w_ih_cat = jnp.concatenate([w_ih[0], w_ih[1]], axis=1)
        w_hh_cat = jnp.concatenate([w_hh[0], w_hh[1]], axis=1)
        b_x = jnp.concatenate(
            [jnp.concatenate([b_ih[d, :, :2 * H] + b_hh[d, :, :2 * H],
                              b_ih[d, :, 2 * H:]], axis=1) for d in (0, 1)],
            axis=1)                                                 # (1, 6H)
        b_hn_stk = jnp.concatenate(
            [jnp.broadcast_to(b_hh[d, :, 2 * H:], (Bt, H)) for d in (0, 1)],
            axis=0)                                                 # (2Bt, H)
        for arr in (w_ih_cat, b_x, w_hh_cat, b_hn_stk):
            weight_args.append(arr)
            weight_specs.append(pl.BlockSpec(arr.shape, lambda b: (0, 0)))

    kernel = functools.partial(bigru_kernel, num_layers=L, hidden=H,
                               matmul_dtype=matmul_dtype)

    y_pad = pl.pallas_call(
        kernel,
        out_shape=jax.ShapeDtypeStruct((B, S, Opad), jnp.float32),
        grid=(B // Bt,),
        in_specs=[pl.BlockSpec((Bt, S, In), lambda b: (b, 0, 0)),
                  pl.BlockSpec((Bt, 1), lambda b: (b, 0))] + weight_specs,
        out_specs=pl.BlockSpec((Bt, S, Opad), lambda b: (b, 0, 0)),
        scratch_shapes=[pltpu.VMEM((Bt, S, 2 * H), jnp.float32)],
        compiler_params=pltpu.CompilerParams(
            dimension_semantics=("parallel",),          # megacore when Bt < B
            vmem_limit_bytes=32 * 1024 * 1024),
    )(X, lengths, *weight_args)

    # Final 1-wide projection + ReLU in the wrapper so the kernel output stays
    # lane-dense.  y_pad[..., 2H:] is the zero padding added for lane density.
    y = jax.nn.relu(y_pad[..., :2 * H])                     # ReLU(Y)
    return jax.nn.relu(jnp.einsum("bsh,ho->bso", y, params["w_out"])
                       + params["b_out"])


# ----------------------------- params ----------------------------------------

def init_params(key, input_dim, hidden, num_layers=2, output_size=1):
    ks = jax.random.split(key, 4 * num_layers + 2)
    bound = 1.0 / math.sqrt(hidden)

    def u(k, shape):
        return jax.random.uniform(k, shape, jnp.float32, -bound, bound)

    w_ih, w_hh, b_ih, b_hh = [], [], [], []
    idx = 0
    for l in range(num_layers):
        in_l = input_dim if l == 0 else 2 * hidden
        # dim 0 = direction (0 fwd, 1 bwd); weights pre-transposed to x @ W form.
        w_ih.append(u(ks[idx + 0], (2, in_l, 3 * hidden)))
        w_hh.append(u(ks[idx + 1], (2, hidden, 3 * hidden)))
        b_ih.append(u(ks[idx + 2], (2, 1, 3 * hidden)))
        b_hh.append(u(ks[idx + 3], (2, 1, 3 * hidden)))
        idx += 4

    return {
        "w_ih": w_ih, "w_hh": w_hh, "b_ih": b_ih, "b_hh": b_hh,
        "w_out": u(ks[idx], (2 * hidden, output_size)),
        "b_out": u(ks[idx + 1], (output_size,)),
        "hidden": hidden, "num_layers": num_layers,
    }


# ----------------------------- pure-JAX reference ----------------------------

def reference_forward(params, X, lengths):
    B, S, _ = X.shape
    H = params["hidden"]
    lengths = jnp.asarray(lengths, jnp.int32).reshape(B, 1)

    def gru_dir(xs, w_ih, w_hh, b_ih, b_hh, reverse):
        h = jnp.zeros((B, H), jnp.float32)
        outs = [None] * S
        steps = range(S - 1, -1, -1) if reverse else range(S)
        for t in steps:
            gx = xs[:, t, :] @ w_ih + b_ih
            gh = h @ w_hh + b_hh
            r = jax.nn.sigmoid(gx[:, :H] + gh[:, :H])
            z = jax.nn.sigmoid(gx[:, H:2 * H] + gh[:, H:2 * H])
            n = jnp.tanh(gx[:, 2 * H:] + r * gh[:, 2 * H:])
            h_new = (1.0 - z) * n + z * h
            valid = t < lengths
            h = jnp.where(valid, h_new, h)
            outs[t] = jnp.where(valid, h, 0.0)
        return jnp.stack(outs, axis=1)

    y = X
    for l in range(params["num_layers"]):
        f = gru_dir(y, params["w_ih"][l][0], params["w_hh"][l][0],
                    params["b_ih"][l][0], params["b_hh"][l][0], False)
        b = gru_dir(y, params["w_ih"][l][1], params["w_hh"][l][1],
                    params["b_ih"][l][1], params["b_hh"][l][1], True)
        y = jnp.concatenate([f, b], axis=-1)
    y = jax.nn.relu(y)
    return jax.nn.relu(y @ params["w_out"] + params["b_out"])


# ----------------------------- main -------------------------------------------

if __name__ == "__main__":
    B, S, In = 2, 8, 16      # batch, sequence, num_inputs (scaled-down)
    H, L = 32, 2             # num_hiddens, num_layers (module default layers=2)

    key = jax.random.PRNGKey(0)
    pkey, xkey = jax.random.split(key)
    params = init_params(pkey, In, H, num_layers=L, output_size=1)
    X = jax.random.normal(xkey, (B, S, In), dtype=jnp.float32)
    lengths = jnp.array([S, 5], dtype=jnp.int32)   # variable lengths (packed seqs)

    out = bigru_forward(params, X, lengths)
    out = jax.block_until_ready(out)

    with jax.default_matmul_precision("highest"):
        ref = reference_forward(params, X, lengths)
    ref = jax.block_until_ready(ref)

    assert out.shape == (B, S, 1), out.shape
    assert bool(jnp.all(jnp.isfinite(out)))
    err = float(jnp.max(jnp.abs(out - ref)))
    assert err < 1e-2, err
    # padded positions (t >= length) must equal relu(0 @ W + b) = relu(b_out),
    # matching pad_packed_sequence(padding_value=0.0) -> relu -> linear -> relu
    pad_val = jnp.maximum(params["b_out"], 0.0)
    assert bool(jnp.allclose(out[1, 5:], pad_val, atol=1e-6))
    print("KERNEL_OK")
</pallas_src>

<mosaic_0001>
module attributes {stable_mosaic.version = 11 : i64} {
  func.func @bigru_kernel(%arg0: i32, %arg1: memref<2x8x16xf32, #tpu.memory_space<vmem>>, %arg2: memref<2x1xi32, #tpu.memory_space<vmem>>, %arg3: memref<16x192xf32, #tpu.memory_space<vmem>>, %arg4: memref<1x192xf32, #tpu.memory_space<vmem>>, %arg5: memref<32x192xf32, #tpu.memory_space<vmem>>, %arg6: memref<4x32xf32, #tpu.memory_space<vmem>>, %arg7: memref<64x192xf32, #tpu.memory_space<vmem>>, %arg8: memref<1x192xf32, #tpu.memory_space<vmem>>, %arg9: memref<32x192xf32, #tpu.memory_space<vmem>>, %arg10: memref<4x32xf32, #tpu.memory_space<vmem>>, %arg11: memref<2x8x128xf32, #tpu.memory_space<vmem>>, %arg12: memref<2x8x64xf32, #tpu.memory_space<vmem>>) attributes {dimension_semantics = [#tpu.dimension_semantics<parallel>], iteration_bounds = array<i64: 1>, scalar_prefetch = 0 : i64, scratch_operands = 1 : i64, tpu.core_type = #tpu.core_type<tc>, window_params = [{transform_indices = @transform_0, window_bounds = array<i64: 2, 8, 16>}, {transform_indices = @transform_1, window_bounds = array<i64: 2, 1>}, {pipeline_mode = #tpu.pipeline_mode<synchronous>, transform_indices = @transform_2, window_bounds = array<i64: 16, 192>}, {pipeline_mode = #tpu.pipeline_mode<synchronous>, transform_indices = @transform_3, window_bounds = array<i64: 1, 192>}, {pipeline_mode = #tpu.pipeline_mode<synchronous>, transform_indices = @transform_4, window_bounds = array<i64: 32, 192>}, {pipeline_mode = #tpu.pipeline_mode<synchronous>, transform_indices = @transform_5, window_bounds = array<i64: 4, 32>}, {pipeline_mode = #tpu.pipeline_mode<synchronous>, transform_indices = @transform_6, window_bounds = array<i64: 64, 192>}, {pipeline_mode = #tpu.pipeline_mode<synchronous>, transform_indices = @transform_7, window_bounds = array<i64: 1, 192>}, {pipeline_mode = #tpu.pipeline_mode<synchronous>, transform_indices = @transform_8, window_bounds = array<i64: 32, 192>}, {pipeline_mode = #tpu.pipeline_mode<synchronous>, transform_indices = @transform_9, window_bounds = array<i64: 4, 32>}, {transform_indices = @transform_10, window_bounds = array<i64: 2, 8, 128>}]} {
    %c0 = arith.constant 0 : index
    %c0_0 = arith.constant 0 : index
    %c0_1 = arith.constant 0 : index
    %0 = vector.load %arg1[%c0, %c0_0, %c0_1] : memref<2x8x16xf32, #tpu.memory_space<vmem>>, vector<2x8x16xf32>
    %c0_2 = arith.constant 0 : index
    %c0_3 = arith.constant 0 : index
    %1 = vector.load %arg2[%c0_2, %c0_3] : memref<2x1xi32, #tpu.memory_space<vmem>>, vector<2x1xi32>
    %2 = tpu.iota {dimensions = array<i32: 0>} : vector<4x1xi32>
    %c2_i32 = arith.constant 2 : i32
    %3 = vector.broadcast %c2_i32 : i32 to vector<4x1xi32>
    %4 = arith.cmpi slt, %2, %3 : vector<4x1xi32>
    %5 = tpu.concatenate %1, %1 in 0 : vector<2x1xi32>, vector<2x1xi32> -> vector<4x1xi32>
    %cst = arith.constant 0.000000e+00 : f32
    %6 = vector.broadcast %cst : f32 to vector<2x8x128xf32>
    %c0_4 = arith.constant 0 : index
    %c0_5 = arith.constant 0 : index
    %c0_6 = arith.constant 0 : index
    %7 = vector.load %arg11[%c0_4, %c0_5, %c0_6] : memref<2x8x128xf32, #tpu.memory_space<vmem>>, vector<2x8x128xf32>
    tpu.vector_store %arg11[%c0_4, %c0_5, %c0_6], %6 {strides = array<i32>} : memref<2x8x128xf32, #tpu.memory_space<vmem>>, vector<2x8x128xf32>,
    %8 = vector.shape_cast %0 : vector<2x8x16xf32> to vector<16x16xf32>
    %c0_7 = arith.constant 0 : index
    %c0_8 = arith.constant 0 : index
    %9 = vector.load %arg3[%c0_7, %c0_8] : memref<16x192xf32, #tpu.memory_space<vmem>>, vector<16x192xf32>
    %cst_9 = arith.constant dense<0.000000e+00> : vector<16x192xf32>
    %10 = tpu.matmul %8, %9, %cst_9 {dimension_numbers = #tpu.dot_dimension_numbers<[1], [0], [0], [1], [0, 0, 1, 1], [], []>} : vector<16x16xf32>, vector<16x192xf32>, vector<16x192xf32> -> vector<16x192xf32>
    %c0_10 = arith.constant 0 : index
    %c0_11 = arith.constant 0 : index
    %11 = vector.load %arg4[%c0_10, %c0_11] : memref<1x192xf32, #tpu.memory_space<vmem>>, vector<1x192xf32>
    %12 = vector.broadcast %11 : vector<1x192xf32> to vector<16x192xf32>
    %13 = arith.addf %10, %12 : vector<16x192xf32>
    %14 = vector.shape_cast %13 : vector<16x192xf32> to vector<2x8x192xf32>
    %c0_12 = arith.constant 0 : index
    %c0_13 = arith.constant 0 : index
    %15 = vector.load %arg5[%c0_12, %c0_13] : memref<32x192xf32, #tpu.memory_space<vmem>>, vector<32x192xf32>
    %c0_14 = arith.constant 0 : index
    %c0_15 = arith.constant 0 : index
    %16 = vector.load %arg6[%c0_14, %c0_15] : memref<4x32xf32, #tpu.memory_space<vmem>>, vector<4x32xf32>
    %cst_16 = arith.constant 0.000000e+00 : f32
    %17 = vector.broadcast %cst_16 : f32 to vector<4x32xf32>
    %18 = vector.extract_strided_slice %14 {offsets = [0, 0, 0], sizes = [2, 1, 96], strides = [1, 1, 1]} : vector<2x8x192xf32> to vector<2x1x96xf32>
    %19 = vector.shape_cast %18 : vector<2x1x96xf32> to vector<2x96xf32>
    %20 = vector.extract_strided_slice %14 {offsets = [0, 7, 96], sizes = [2, 1, 96], strides = [1, 1, 1]} : vector<2x8x192xf32> to vector<2x1x96xf32>
    %21 = vector.shape_cast %20 : vector<2x1x96xf32> to vector<2x96xf32>
    %22 = tpu.concatenate %19, %21 in 0 : vector<2x96xf32>, vector<2x96xf32> -> vector<4x96xf32>
    %cst_17 = arith.constant dense<0.000000e+00> : vector<4x192xf32>
    %23 = tpu.matmul %17, %15, %cst_17 {dimension_numbers = #tpu.dot_dimension_numbers<[1], [0], [0], [1], [0, 0, 1, 1], [], []>} : vector<4x32xf32>, vector<32x192xf32>, vector<4x192xf32> -> vector<4x192xf32>
    %24 = vector.extract_strided_slice %23 {offsets = [0, 0], sizes = [4, 96], strides = [1, 1]} : vector<4x192xf32> to vector<4x96xf32>
    %25 = vector.extract_strided_slice %23 {offsets = [0, 96], sizes = [4, 96], strides = [1, 1]} : vector<4x192xf32> to vector<4x96xf32>
    %26 = vector.shape_cast %4 : vector<4x1xi1> to vector<4x1xi1>
    %27 = vector.broadcast %26 : vector<4x1xi1> to vector<4x96xi1>
    %28 = arith.select %27, %24, %25 : vector<4x96xi1>, vector<4x96xf32>
    %29 = vector.extract_strided_slice %22 {offsets = [0, 0], sizes = [4, 64], strides = [1, 1]} : vector<4x96xf32> to vector<4x64xf32>
    %30 = vector.extract_strided_slice %28 {offsets = [0, 0], sizes = [4, 64], strides = [1, 1]} : vector<4x96xf32> to vector<4x64xf32>
    %31 = arith.addf %29, %30 : vector<4x64xf32>
    %32 = arith.negf %31 : vector<4x64xf32>
    %33 = math.exp %32 : vector<4x64xf32>
    %cst_18 = arith.constant 1.000000e+00 : f32
    %34 = vector.broadcast %cst_18 : f32 to vector<4x64xf32>
    %35 = arith.addf %34, %33 : vector<4x64xf32>
    %36 = arith.divf %34, %35 : vector<4x64xf32>
    %37 = vector.extract_strided_slice %36 {offsets = [0, 0], sizes = [4, 32], strides = [1, 1]} : vector<4x64xf32> to vector<4x32xf32>
    %38 = vector.extract_strided_slice %36 {offsets = [0, 32], sizes = [4, 32], strides = [1, 1]} : vector<4x64xf32> to vector<4x32xf32>
    %39 = vector.extract_strided_slice %22 {offsets = [0, 64], sizes = [4, 32], strides = [1, 1]} : vector<4x96xf32> to vector<4x32xf32>
    %40 = vector.extract_strided_slice %28 {offsets = [0, 64], sizes = [4, 32], strides = [1, 1]} : vector<4x96xf32> to vector<4x32xf32>
    %41 = arith.addf %40, %16 : vector<4x32xf32>
    %42 = arith.mulf %37, %41 : vector<4x32xf32>
    %43 = arith.addf %39, %42 : vector<4x32xf32>
    %44 = math.tanh %43 : vector<4x32xf32>
    %45 = arith.subf %17, %44 : vector<4x32xf32>
    %46 = arith.mulf %38, %45 : vector<4x32xf32>
    %47 = arith.addf %44, %46 : vector<4x32xf32>
    %c0_i32 = arith.constant 0 : i32
    %c7_i32 = arith.constant 7 : i32
    %48 = vector.broadcast %c0_i32 : i32 to vector<4x1xi32>
    %49 = vector.broadcast %c7_i32 : i32 to vector<4x1xi32>
    %50 = arith.select %4, %48, %49 : vector<4x1xi1>, vector<4x1xi32>
    %51 = arith.cmpi slt, %50, %5 : vector<4x1xi32>
    %cst_19 = arith.constant 0.000000e+00 : f32
    %52 = vector.shape_cast %51 : vector<4x1xi1> to vector<4x1xi1>
    %53 = vector.broadcast %52 : vector<4x1xi1> to vector<4x32xi1>
    %54 = vector.broadcast %cst_19 : f32 to vector<4x32xf32>
    %55 = arith.select %53, %47, %54 : vector<4x32xi1>, vector<4x32xf32>
    %56 = vector.shape_cast %51 : vector<4x1xi1> to vector<4x1xi1>
    %57 = vector.broadcast %56 : vector<4x1xi1> to vector<4x32xi1>
    %58 = arith.select %57, %47, %17 : vector<4x32xi1>, vector<4x32xf32>
    %59 = vector.extract_strided_slice %55 {offsets = [0, 0], sizes = [2, 32], strides = [1, 1]} : vector<4x32xf32> to vector<2x32xf32>
    %c0_20 = arith.constant 0 : index
    %c0_21 = arith.constant 0 : index
    %c0_22 = arith.constant 0 : index
    %60 = vector.load %arg12[%c0_20, %c0_21, %c0_22] : memref<2x8x64xf32, #tpu.memory_space<vmem>>, vector<2x1x32xf32>
    %61 = vector.shape_cast %60 : vector<2x1x32xf32> to vector<2x32xf32>
    %62 = vector.shape_cast %59 : vector<2x32xf32> to vector<2x1x32xf32>
    tpu.vector_store %arg12[%c0_20, %c0_21, %c0_22], %62 {strides = array<i32>} : memref<2x8x64xf32, #tpu.memory_space<vmem>>, vector<2x1x32xf32>,
    %63 = vector.extract_strided_slice %55 {offsets = [2, 0], sizes = [2, 32], strides = [1, 1]} : vector<4x32xf32> to vector<2x32xf32>
    %c0_23 = arith.constant 0 : index
    %c7 = arith.constant 7 : index
    %c32 = arith.constant 32 : index
    %64 = vector.load %arg12[%c0_23, %c7, %c32] : memref<2x8x64xf32, #tpu.memory_space<vmem>>, vector<2x1x32xf32>
    %65 = vector.shape_cast %64 : vector<2x1x32xf32> to vector<2x32xf32>
    %66 = vector.shape_cast %63 : vector<2x32xf32> to vector<2x1x32xf32>
    tpu.vector_store %arg12[%c0_23, %c7, %c32], %66 {strides = array<i32>} : memref<2x8x64xf32, #tpu.memory_space<vmem>>, vector<2x1x32xf32>,
    %67 = vector.extract_strided_slice %14 {offsets = [0, 1, 0], sizes = [2, 1, 96], strides = [1, 1, 1]} : vector<2x8x192xf32> to vector<2x1x96xf32>
    %68 = vector.shape_cast %67 : vector<2x1x96xf32> to vector<2x96xf32>
    %69 = vector.extract_strided_slice %14 {offsets = [0, 6, 96], sizes = [2, 1, 96], strides = [1, 1, 1]} : vector<2x8x192xf32> to vector<2x1x96xf32>
    %70 = vector.shape_cast %69 : vector<2x1x96xf32> to vector<2x96xf32>
    %71 = tpu.concatenate %68, %70 in 0 : vector<2x96xf32>, vector<2x96xf32> -> vector<4x96xf32>
    %cst_24 = arith.constant dense<0.000000e+00> : vector<4x192xf32>
    %72 = tpu.matmul %58, %15, %cst_24 {dimension_numbers = #tpu.dot_dimension_numbers<[1], [0], [0], [1], [0, 0, 1, 1], [], []>} : vector<4x32xf32>, vector<32x192xf32>, vector<4x192xf32> -> vector<4x192xf32>
    %73 = vector.extract_strided_slice %72 {offsets = [0, 0], sizes = [4, 96], strides = [1, 1]} : vector<4x192xf32> to vector<4x96xf32>
    %74 = vector.extract_strided_slice %72 {offsets = [0, 96], sizes = [4, 96], strides = [1, 1]} : vector<4x192xf32> to vector<4x96xf32>
    %75 = vector.shape_cast %4 : vector<4x1xi1> to vector<4x1xi1>
    %76 = vector.broadcast %75 : vector<4x1xi1> to vector<4x96xi1>
    %77 = arith.select %76, %73, %74 : vector<4x96xi1>, vector<4x96xf32>
    %78 = vector.extract_strided_slice %71 {offsets = [0, 0], sizes = [4, 64], strides = [1, 1]} : vector<4x96xf32> to vector<4x64xf32>
    %79 = vector.extract_strided_slice %77 {offsets = [0, 0], sizes = [4, 64], strides = [1, 1]} : vector<4x96xf32> to vector<4x64xf32>
    %80 = arith.addf %78, %79 : vector<4x64xf32>
    %81 = arith.negf %80 : vector<4x64xf32>
    %82 = math.exp %81 : vector<4x64xf32>
    %cst_25 = arith.constant 1.000000e+00 : f32
    %83 = vector.broadcast %cst_25 : f32 to vector<4x64xf32>
    %84 = arith.addf %83, %82 : vector<4x64xf32>
    %85 = arith.divf %83, %84 : vector<4x64xf32>
    %86 = vector.extract_strided_slice %85 {offsets = [0, 0], sizes = [4, 32], strides = [1, 1]} : vector<4x64xf32> to vector<4x32xf32>
    %87 = vector.extract_strided_slice %85 {offsets = [0, 32], sizes = [4, 32], strides = [1, 1]} : vector<4x64xf32> to vector<4x32xf32>
    %88 = vector.extract_strided_slice %71 {offsets = [0, 64], sizes = [4, 32], strides = [1, 1]} : vector<4x96xf32> to vector<4x32xf32>
    %89 = vector.extract_strided_slice %77 {offsets = [0, 64], sizes = [4, 32], strides = [1, 1]} : vector<4x96xf32> to vector<4x32xf32>
    %90 = arith.addf %89, %16 : vector<4x32xf32>
    %91 = arith.mulf %86, %90 : vector<4x32xf32>
    %92 = arith.addf %88, %91 : vector<4x32xf32>
    %93 = math.tanh %92 : vector<4x32xf32>
    %94 = arith.subf %58, %93 : vector<4x32xf32>
    %95 = arith.mulf %87, %94 : vector<4x32xf32>
    %96 = arith.addf %93, %95 : vector<4x32xf32>
    %c1_i32 = arith.constant 1 : i32
    %c6_i32 = arith.constant 6 : i32
    %97 = vector.broadcast %c1_i32 : i32 to vector<4x1xi32>
    %98 = vector.broadcast %c6_i32 : i32 to vector<4x1xi32>
    %99 = arith.select %4, %97, %98 : vector<4x1xi1>, vector<4x1xi32>
    %100 = arith.cmpi slt, %99, %5 : vector<4x1xi32>
    %cst_26 = arith.constant 0.000000e+00 : f32
    %101 = vector.shape_cast %100 : vector<4x1xi1> to vector<4x1xi1>
    %102 = vector.broadcast %101 : vector<4x1xi1> to vector<4x32xi1>
    %103 = vector.broadcast %cst_26 : f32 to vector<4x32xf32>
    %104 = arith.select %102, %96, %103 : vector<4x32xi1>, vector<4x32xf32>
    %105 = vector.shape_cast %100 : vector<4x1xi1> to vector<4x1xi1>
    %106 = vector.broadcast %105 : vector<4x1xi1> to vector<4x32xi1>
    %107 = arith.select %106, %96, %58 : vector<4x32xi1>, vector<4x32xf32>
    %108 = vector.extract_strided_slice %104 {offsets = [0, 0], sizes = [2, 32], strides = [1, 1]} : vector<4x32xf32> to vector<2x32xf32>
    %c0_27 = arith.constant 0 : index
    %c1 = arith.constant 1 : index
    %c0_28 = arith.constant 0 : index
    %109 = vector.load %arg12[%c0_27, %c1, %c0_28] : memref<2x8x64xf32, #tpu.memory_space<vmem>>, vector<2x1x32xf32>
    %110 = vector.shape_cast %109 : vector<2x1x32xf32> to vector<2x32xf32>
    %111 = vector.shape_cast %108 : vector<2x32xf32> to vector<2x1x32xf32>
    tpu.vector_store %arg12[%c0_27, %c1, %c0_28], %111 {strides = array<i32>} : memref<2x8x64xf32, #tpu.memory_space<vmem>>, vector<2x1x32xf32>,
    %112 = vector.extract_strided_slice %104 {offsets = [2, 0], sizes = [2, 32], strides = [1, 1]} : vector<4x32xf32> to vector<2x32xf32>
    %c0_29 = arith.constant 0 : index
    %c6 = arith.constant 6 : index
    %c32_30 = arith.constant 32 : index
    %113 = vector.load %arg12[%c0_29, %c6, %c32_30] : memref<2x8x64xf32, #tpu.memory_space<vmem>>, vector<2x1x32xf32>
    %114 = vector.shape_cast %113 : vector<2x1x32xf32> to vector<2x32xf32>
    %115 = vector.shape_cast %112 : vector<2x32xf32> to vector<2x1x32xf32>
    tpu.vector_store %arg12[%c0_29, %c6, %c32_30], %115 {strides = array<i32>} : memref<2x8x64xf32, #tpu.memory_space<vmem>>, vector<2x1x32xf32>,
    %116 = vector.extract_strided_slice %14 {offsets = [0, 2, 0], sizes = [2, 1, 96], strides = [1, 1, 1]} : vector<2x8x192xf32> to vector<2x1x96xf32>
    %117 = vector.shape_cast %116 : vector<2x1x96xf32> to vector<2x96xf32>
    %118 = vector.extract_strided_slice %14 {offsets = [0, 5, 96], sizes = [2, 1, 96], strides = [1, 1, 1]} : vector<2x8x192xf32> to vector<2x1x96xf32>
    %119 = vector.shape_cast %118 : vector<2x1x96xf32> to vector<2x96xf32>
    %120 = tpu.concatenate %117, %119 in 0 : vector<2x96xf32>, vector<2x96xf32> -> vector<4x96xf32>
    %cst_31 = arith.constant dense<0.000000e+00> : vector<4x192xf32>
    %121 = tpu.matmul %107, %15, %cst_31 {dimension_numbers = #tpu.dot_dimension_numbers<[1], [0], [0], [1], [0, 0, 1, 1], [], []>} : vector<4x32xf32>, vector<32x192xf32>, vector<4x192xf32> -> vector<4x192xf32>
    %122 = vector.extract_strided_slice %121 {offsets = [0, 0], sizes = [4, 96], strides = [1, 1]} : vector<4x192xf32> to vector<4x96xf32>
    %123 = vector.extract_strided_slice %121 {offsets = [0, 96], sizes = [4, 96], strides = [1, 1]} : vector<4x192xf32> to vector<4x96xf32>
    %124 = vector.shape_cast %4 : vector<4x1xi1> to vector<4x1xi1>
    %125 = vector.broadcast %124 : vector<4x1xi1> to vector<4x96xi1>
    %126 = arith.select %125, %122, %123 : vector<4x96xi1>, vector<4x96xf32>
    %127 = vector.extract_strided_slice %120 {offsets = [0, 0], sizes = [4, 64], strides = [1, 1]} : vector<4x96xf32> to vector<4x64xf32>
    %128 = vector.extract_strided_slice %126 {offsets = [0, 0], sizes = [4, 64], strides = [1, 1]} : vector<4x96xf32> to vector<4x64xf32>
    %129 = arith.addf %127, %128 : vector<4x64xf32>
    %130 = arith.negf %129 : vector<4x64xf32>
    %131 = math.exp %130 : vector<4x64xf32>
    %cst_32 = arith.constant 1.000000e+00 : f32
    %132 = vector.broadcast %cst_32 : f32 to vector<4x64xf32>
    %133 = arith.addf %132, %131 : vector<4x64xf32>
    %134 = arith.divf %132, %133 : vector<4x64xf32>
    %135 = vector.extract_strided_slice %134 {offsets = [0, 0], sizes = [4, 32], strides = [1, 1]} : vector<4x64xf32> to vector<4x32xf32>
    %136 = vector.extract_strided_slice %134 {offsets = [0, 32], sizes = [4, 32], strides = [1, 1]} : vector<4x64xf32> to vector<4x32xf32>
    %137 = vector.extract_strided_slice %120 {offsets = [0, 64], sizes = [4, 32], strides = [1, 1]} : vector<4x96xf32> to vector<4x32xf32>
    %138 = vector.extract_strided_slice %126 {offsets = [0, 64], sizes = [4, 32], strides = [1, 1]} : vector<4x96xf32> to vector<4x32xf32>
    %139 = arith.addf %138, %16 : vector<4x32xf32>
    %140 = arith.mulf %135, %139 : vector<4x32xf32>
    %141 = arith.addf %137, %140 : vector<4x32xf32>
    %142 = math.tanh %141 : vector<4x32xf32>
    %143 = arith.subf %107, %142 : vector<4x32xf32>
    %144 = arith.mulf %136, %143 : vector<4x32xf32>
    %145 = arith.addf %142, %144 : vector<4x32xf32>
    %c2_i32_33 = arith.constant 2 : i32
    %c5_i32 = arith.constant 5 : i32
    %146 = vector.broadcast %c2_i32_33 : i32 to vector<4x1xi32>
    %147 = vector.broadcast %c5_i32 : i32 to vector<4x1xi32>
    %148 = arith.select %4, %146, %147 : vector<4x1xi1>, vector<4x1xi32>
    %149 = arith.cmpi slt, %148, %5 : vector<4x1xi32>
    %cst_34 = arith.constant 0.000000e+00 : f32
    %150 = vector.shape_cast %149 : vector<4x1xi1> to vector<4x1xi1>
    %151 = vector.broadcast %150 : vector<4x1xi1> to vector<4x32xi1>
    %152 = vector.broadcast %cst_34 : f32 to vector<4x32xf32>
    %153 = arith.select %151, %145, %152 : vector<4x32xi1>, vector<4x32xf32>
    %154 = vector.shape_cast %149 : vector<4x1xi1> to vector<4x1xi1>
    %155 = vector.broadcast %154 : vector<4x1xi1> to vector<4x32xi1>
    %156 = arith.select %155, %145, %107 : vector<4x32xi1>, vector<4x32xf32>
    %157 = vector.extract_strided_slice %153 {offsets = [0, 0], sizes = [2, 32], strides = [1, 1]} : vector<4x32xf32> to vector<2x32xf32>
    %c0_35 = arith.constant 0 : index
    %c2 = arith.constant 2 : index
    %c0_36 = arith.constant 0 : index
    %158 = vector.load %arg12[%c0_35, %c2, %c0_36] : memref<2x8x64xf32, #tpu.memory_space<vmem>>, vector<2x1x32xf32>
    %159 = vector.shape_cast %158 : vector<2x1x32xf32> to vector<2x32xf32>
    %160 = vector.shape_cast %157 : vector<2x32xf32> to vector<2x1x32xf32>
    tpu.vector_store %arg12[%c0_35, %c2, %c0_36], %160 {strides = array<i32>} : memref<2x8x64xf32, #tpu.memory_space<vmem>>, vector<2x1x32xf32>,
    %161 = vector.extract_strided_slice %153 {offsets = [2, 0], sizes = [2, 32], strides = [1, 1]} : vector<4x32xf32> to vector<2x32xf32>
    %c0_37 = arith.constant 0 : index
    %c5 = arith.constant 5 : index
    %c32_38 = arith.constant 32 : index
    %162 = vector.load %arg12[%c0_37, %c5, %c32_38] : memref<2x8x64xf32, #tpu.memory_space<vmem>>, vector<2x1x32xf32>
    %163 = vector.shape_cast %162 : vector<2x1x32xf32> to vector<2x32xf32>
    %164 = vector.shape_cast %161 : vector<2x32xf32> to vector<2x1x32xf32>
    tpu.vector_store %arg12[%c0_37, %c5, %c32_38], %164 {strides = array<i32>} : memref<2x8x64xf32, #tpu.memory_space<vmem>>, vector<2x1x32xf32>,
    %165 = vector.extract_strided_slice %14 {offsets = [0, 3, 0], sizes = [2, 1, 96], strides = [1, 1, 1]} : vector<2x8x192xf32> to vector<2x1x96xf32>
    %166 = vector.shape_cast %165 : vector<2x1x96xf32> to vector<2x96xf32>
    %167 = vector.extract_strided_slice %14 {offsets = [0, 4, 96], sizes = [2, 1, 96], strides = [1, 1, 1]} : vector<2x8x192xf32> to vector<2x1x96xf32>
    %168 = vector.shape_cast %167 : vector<2x1x96xf32> to vector<2x96xf32>
    %169 = tpu.concatenate %166, %168 in 0 : vector<2x96xf32>, vector<2x96xf32> -> vector<4x96xf32>
    %cst_39 = arith.constant dense<0.000000e+00> : vector<4x192xf32>
    %170 = tpu.matmul %156, %15, %cst_39 {dimension_numbers = #tpu.dot_dimension_numbers<[1], [0], [0], [1], [0, 0, 1, 1], [], []>} : vector<4x32xf32>, vector<32x192xf32>, vector<4x192xf32> -> vector<4x192xf32>
    %171 = vector.extract_strided_slice %170 {offsets = [0, 0], sizes = [4, 96], strides = [1, 1]} : vector<4x192xf32> to vector<4x96xf32>
    %172 = vector.extract_strided_slice %170 {offsets = [0, 96], sizes = [4, 96], strides = [1, 1]} : vector<4x192xf32> to vector<4x96xf32>
    %173 = vector.shape_cast %4 : vector<4x1xi1> to vector<4x1xi1>
    %174 = vector.broadcast %173 : vector<4x1xi1> to vector<4x96xi1>
    %175 = arith.select %174, %171, %172 : vector<4x96xi1>, vector<4x96xf32>
    %176 = vector.extract_strided_slice %169 {offsets = [0, 0], sizes = [4, 64], strides = [1, 1]} : vector<4x96xf32> to vector<4x64xf32>
    %177 = vector.extract_strided_slice %175 {offsets = [0, 0], sizes = [4, 64], strides = [1, 1]} : vector<4x96xf32> to vector<4x64xf32>
    %178 = arith.addf %176, %177 : vector<4x64xf32>
    %179 = arith.negf %178 : vector<4x64xf32>
    %180 = math.exp %179 : vector<4x64xf32>
    %cst_40 = arith.constant 1.000000e+00 : f32
    %181 = vector.broadcast %cst_40 : f32 to vector<4x64xf32>
    %182 = arith.addf %181, %180 : vector<4x64xf32>
    %183 = arith.divf %181, %182 : vector<4x64xf32>
    %184 = vector.extract_strided_slice %183 {offsets = [0, 0], sizes = [4, 32], strides = [1, 1]} : vector<4x64xf32> to vector<4x32xf32>
    %185 = vector.extract_strided_slice %183 {offsets = [0, 32], sizes = [4, 32], strides = [1, 1]} : vector<4x64xf32> to vector<4x32xf32>
    %186 = vector.extract_strided_slice %169 {offsets = [0, 64], sizes = [4, 32], strides = [1, 1]} : vector<4x96xf32> to vector<4x32xf32>
    %187 = vector.extract_strided_slice %175 {offsets = [0, 64], sizes = [4, 32], strides = [1, 1]} : vector<4x96xf32> to vector<4x32xf32>
    %188 = arith.addf %187, %16 : vector<4x32xf32>
    %189 = arith.mulf %184, %188 : vector<4x32xf32>
    %190 = arith.addf %186, %189 : vector<4x32xf32>
    %191 = math.tanh %190 : vector<4x32xf32>
    %192 = arith.subf %156, %191 : vector<4x32xf32>
    %193 = arith.mulf %185, %192 : vector<4x32xf32>
    %194 = arith.addf %191, %193 : vector<4x32xf32>
    %c3_i32 = arith.constant 3 : i32
    %c4_i32 = arith.constant 4 : i32
    %195 = vector.broadcast %c3_i32 : i32 to vector<4x1xi32>
    %196 = vector.broadcast %c4_i32 : i32 to vector<4x1xi32>
    %197 = arith.select %4, %195, %196 : vector<4x1xi1>, vector<4x1xi32>
    %198 = arith.cmpi slt, %197, %5 : vector<4x1xi32>
    %cst_41 = arith.constant 0.000000e+00 : f32
    %199 = vector.shape_cast %198 : vector<4x1xi1> to vector<4x1xi1>
    %200 = vector.broadcast %199 : vector<4x1xi1> to vector<4x32xi1>
    %201 = vector.broadcast %cst_41 : f32 to vector<4x32xf32>
    %202 = arith.select %200, %194, %201 : vector<4x32xi1>, vector<4x32xf32>
    %203 = vector.shape_cast %198 : vector<4x1xi1> to vector<4x1xi1>
    %204 = vector.broadcast %203 : vector<4x1xi1> to vector<4x32xi1>
    %205 = arith.select %204, %194, %156 : vector<4x32xi1>, vector<4x32xf32>
    %206 = vector.extract_strided_slice %202 {offsets = [0, 0], sizes = [2, 32], strides = [1, 1]} : vector<4x32xf32> to vector<2x32xf32>
    %c0_42 = arith.constant 0 : index
    %c3 = arith.constant 3 : index
    %c0_43 = arith.constant 0 : index
    %207 = vector.load %arg12[%c0_42, %c3, %c0_43] : memref<2x8x64xf32, #tpu.memory_space<vmem>>, vector<2x1x32xf32>
    %208 = vector.shape_cast %207 : vector<2x1x32xf32> to vector<2x32xf32>
    %209 = vector.shape_cast %206 : vector<2x32xf32> to vector<2x1x32xf32>
    tpu.vector_store %arg12[%c0_42, %c3, %c0_43], %209 {strides = array<i32>} : memref<2x8x64xf32, #tpu.memory_space<vmem>>, vector<2x1x32xf32>,
    %210 = vector.extract_strided_slice %202 {offsets = [2, 0], sizes = [2, 32], strides = [1, 1]} : vector<4x32xf32> to vector<2x32xf32>
    %c0_44 = arith.constant 0 : index
    %c4 = arith.constant 4 : index
    %c32_45 = arith.constant 32 : index
    %211 = vector.load %arg12[%c0_44, %c4, %c32_45] : memref<2x8x64xf32, #tpu.memory_space<vmem>>, vector<2x1x32xf32>
    %212 = vector.shape_cast %211 : vector<2x1x32xf32> to vector<2x32xf32>
    %213 = vector.shape_cast %210 : vector<2x32xf32> to vector<2x1x32xf32>
    tpu.vector_store %arg12[%c0_44, %c4, %c32_45], %213 {strides = array<i32>} : memref<2x8x64xf32, #tpu.memory_space<vmem>>, vector<2x1x32xf32>,
    %214 = vector.extract_strided_slice %14 {offsets = [0, 4, 0], sizes = [2, 1, 96], strides = [1, 1, 1]} : vector<2x8x192xf32> to vector<2x1x96xf32>
    %215 = vector.shape_cast %214 : vector<2x1x96xf32> to vector<2x96xf32>
    %216 = vector.extract_strided_slice %14 {offsets = [0, 3, 96], sizes = [2, 1, 96], strides = [1, 1, 1]} : vector<2x8x192xf32> to vector<2x1x96xf32>
    %217 = vector.shape_cast %216 : vector<2x1x96xf32> to vector<2x96xf32>
    %218 = tpu.concatenate %215, %217 in 0 : vector<2x96xf32>, vector<2x96xf32> -> vector<4x96xf32>
    %cst_46 = arith.constant dense<0.000000e+00> : vector<4x192xf32>
    %219 = tpu.matmul %205, %15, %cst_46 {dimension_numbers = #tpu.dot_dimension_numbers<[1], [0], [0], [1], [0, 0, 1, 1], [], []>} : vector<4x32xf32>, vector<32x192xf32>, vector<4x192xf32> -> vector<4x192xf32>
    %220 = vector.extract_strided_slice %219 {offsets = [0, 0], sizes = [4, 96], strides = [1, 1]} : vector<4x192xf32> to vector<4x96xf32>
    %221 = vector.extract_strided_slice %219 {offsets = [0, 96], sizes = [4, 96], strides = [1, 1]} : vector<4x192xf32> to vector<4x96xf32>
    %222 = vector.shape_cast %4 : vector<4x1xi1> to vector<4x1xi1>
    %223 = vector.broadcast %222 : vector<4x1xi1> to vector<4x96xi1>
    %224 = arith.select %223, %220, %221 : vector<4x96xi1>, vector<4x96xf32>
    %225 = vector.extract_strided_slice %218 {offsets = [0, 0], sizes = [4, 64], strides = [1, 1]} : vector<4x96xf32> to vector<4x64xf32>
    %226 = vector.extract_strided_slice %224 {offsets = [0, 0], sizes = [4, 64], strides = [1, 1]} : vector<4x96xf32> to vector<4x64xf32>
    %227 = arith.addf %225, %226 : vector<4x64xf32>
    %228 = arith.negf %227 : vector<4x64xf32>
    %229 = math.exp %228 : vector<4x64xf32>
    %cst_47 = arith.constant 1.000000e+00 : f32
    %230 = vector.broadcast %cst_47 : f32 to vector<4x64xf32>
    %231 = arith.addf %230, %229 : vector<4x64xf32>
    %232 = arith.divf %230, %231 : vector<4x64xf32>
    %233 = vector.extract_strided_slice %232 {offsets = [0, 0], sizes = [4, 32], strides = [1, 1]} : vector<4x64xf32> to vector<4x32xf32>
    %234 = vector.extract_strided_slice %232 {offsets = [0, 32], sizes = [4, 32], strides = [1, 1]} : vector<4x64xf32> to vector<4x32xf32>
    %235 = vector.extract_strided_slice %218 {offsets = [0, 64], sizes = [4, 32], strides = [1, 1]} : vector<4x96xf32> to vector<4x32xf32>
    %236 = vector.extract_strided_slice %224 {offsets = [0, 64], sizes = [4, 32], strides = [1, 1]} : vector<4x96xf32> to vector<4x32xf32>
    %237 = arith.addf %236, %16 : vector<4x32xf32>
    %238 = arith.mulf %233, %237 : vector<4x32xf32>
    %239 = arith.addf %235, %238 : vector<4x32xf32>
    %240 = math.tanh %239 : vector<4x32xf32>
    %241 = arith.subf %205, %240 : vector<4x32xf32>
    %242 = arith.mulf %234, %241 : vector<4x32xf32>
    %243 = arith.addf %240, %242 : vector<4x32xf32>
    %c4_i32_48 = arith.constant 4 : i32
    %c3_i32_49 = arith.constant 3 : i32
    %244 = vector.broadcast %c4_i32_48 : i32 to vector<4x1xi32>
    %245 = vector.broadcast %c3_i32_49 : i32 to vector<4x1xi32>
    %246 = arith.select %4, %244, %245 : vector<4x1xi1>, vector<4x1xi32>
    %247 = arith.cmpi slt, %246, %5 : vector<4x1xi32>
    %cst_50 = arith.constant 0.000000e+00 : f32
    %248 = vector.shape_cast %247 : vector<4x1xi1> to vector<4x1xi1>
    %249 = vector.broadcast %248 : vector<4x1xi1> to vector<4x32xi1>
    %250 = vector.broadcast %cst_50 : f32 to vector<4x32xf32>
    %251 = arith.select %249, %243, %250 : vector<4x32xi1>, vector<4x32xf32>
    %252 = vector.shape_cast %247 : vector<4x1xi1> to vector<4x1xi1>
    %253 = vector.broadcast %252 : vector<4x1xi1> to vector<4x32xi1>
    %254 = arith.select %253, %243, %205 : vector<4x32xi1>, vector<4x32xf32>
    %255 = vector.extract_strided_slice %251 {offsets = [0, 0], sizes = [2, 32], strides = [1, 1]} : vector<4x32xf32> to vector<2x32xf32>
    %c0_51 = arith.constant 0 : index
    %c4_52 = arith.constant 4 : index
    %c0_53 = arith.constant 0 : index
    %256 = vector.load %arg12[%c0_51, %c4_52, %c0_53] : memref<2x8x64xf32, #tpu.memory_space<vmem>>, vector<2x1x32xf32>
    %257 = vector.shape_cast %256 : vector<2x1x32xf32> to vector<2x32xf32>
    %258 = vector.shape_cast %255 : vector<2x32xf32> to vector<2x1x32xf32>
    tpu.vector_store %arg12[%c0_51, %c4_52, %c0_53], %258 {strides = array<i32>} : memref<2x8x64xf32, #tpu.memory_space<vmem>>, vector<2x1x32xf32>,
    %259 = vector.extract_strided_slice %251 {offsets = [2, 0], sizes = [2, 32], strides = [1, 1]} : vector<4x32xf32> to vector<2x32xf32>
    %c0_54 = arith.constant 0 : index
    %c3_55 = arith.constant 3 : index
    %c32_56 = arith.constant 32 : index
    %260 = vector.load %arg12[%c0_54, %c3_55, %c32_56] : memref<2x8x64xf32, #tpu.memory_space<vmem>>, vector<2x1x32xf32>
    %261 = vector.shape_cast %260 : vector<2x1x32xf32> to vector<2x32xf32>
    %262 = vector.shape_cast %259 : vector<2x32xf32> to vector<2x1x32xf32>
    tpu.vector_store %arg12[%c0_54, %c3_55, %c32_56], %262 {strides = array<i32>} : memref<2x8x64xf32, #tpu.memory_space<vmem>>, vector<2x1x32xf32>,
    %263 = vector.extract_strided_slice %14 {offsets = [0, 5, 0], sizes = [2, 1, 96], strides = [1, 1, 1]} : vector<2x8x192xf32> to vector<2x1x96xf32>
    %264 = vector.shape_cast %263 : vector<2x1x96xf32> to vector<2x96xf32>
    %265 = vector.extract_strided_slice %14 {offsets = [0, 2, 96], sizes = [2, 1, 96], strides = [1, 1, 1]} : vector<2x8x192xf32> to vector<2x1x96xf32>
    %266 = vector.shape_cast %265 : vector<2x1x96xf32> to vector<2x96xf32>
    %267 = tpu.concatenate %264, %266 in 0 : vector<2x96xf32>, vector<2x96xf32> -> vector<4x96xf32>
    %cst_57 = arith.constant dense<0.000000e+00> : vector<4x192xf32>
    %268 = tpu.matmul %254, %15, %cst_57 {dimension_numbers = #tpu.dot_dimension_numbers<[1], [0], [0], [1], [0, 0, 1, 1], [], []>} : vector<4x32xf32>, vector<32x192xf32>, vector<4x192xf32> -> vector<4x192xf32>
    %269 = vector.extract_strided_slice %268 {offsets = [0, 0], sizes = [4, 96], strides = [1, 1]} : vector<4x192xf32> to vector<4x96xf32>
    %270 = vector.extract_strided_slice %268 {offsets = [0, 96], sizes = [4, 96], strides = [1, 1]} : vector<4x192xf32> to vector<4x96xf32>
    %271 = vector.shape_cast %4 : vector<4x1xi1> to vector<4x1xi1>
    %272 = vector.broadcast %271 : vector<4x1xi1> to vector<4x96xi1>
    %273 = arith.select %272, %269, %270 : vector<4x96xi1>, vector<4x96xf32>
    %274 = vector.extract_strided_slice %267 {offsets = [0, 0], sizes = [4, 64], strides = [1, 1]} : vector<4x96xf32> to vector<4x64xf32>
    %275 = vector.extract_strided_slice %273 {offsets = [0, 0], sizes = [4, 64], strides = [1, 1]} : vector<4x96xf32> to vector<4x64xf32>
    %276 = arith.addf %274, %275 : vector<4x64xf32>
    %277 = arith.negf %276 : vector<4x64xf32>
    %278 = math.exp %277 : vector<4x64xf32>
    %cst_58 = arith.constant 1.000000e+00 : f32
    %279 = vector.broadcast %cst_58 : f32 to vector<4x64xf32>
    %280 = arith.addf %279, %278 : vector<4x64xf32>
    %281 = arith.divf %279, %280 : vector<4x64xf32>
    %282 = vector.extract_strided_slice %281 {offsets = [0, 0], sizes = [4, 32], strides = [1, 1]} : vector<4x64xf32> to vector<4x32xf32>
    %283 = vector.extract_strided_slice %281 {offsets = [0, 32], sizes = [4, 32], strides = [1, 1]} : vector<4x64xf32> to vector<4x32xf32>
    %284 = vector.extract_strided_slice %267 {offsets = [0, 64], sizes = [4, 32], strides = [1, 1]} : vector<4x96xf32> to vector<4x32xf32>
    %285 = vector.extract_strided_slice %273 {offsets = [0, 64], sizes = [4, 32], strides = [1, 1]} : vector<4x96xf32> to vector<4x32xf32>
    %286 = arith.addf %285, %16 : vector<4x32xf32>
    %287 = arith.mulf %282, %286 : vector<4x32xf32>
    %288 = arith.addf %284, %287 : vector<4x32xf32>
    %289 = math.tanh %288 : vector<4x32xf32>
    %290 = arith.subf %254, %289 : vector<4x32xf32>
    %291 = arith.mulf %283, %290 : vector<4x32xf32>
    %292 = arith.addf %289, %291 : vector<4x32xf32>
    %c5_i32_59 = arith.constant 5 : i32
    %c2_i32_60 = arith.constant 2 : i32
    %293 = vector.broadcast %c5_i32_59 : i32 to vector<4x1xi32>
    %294 = vector.broadcast %c2_i32_60 : i32 to vector<4x1xi32>
    %295 = arith.select %4, %293, %294 : vector<4x1xi1>, vector<4x1xi32>
    %296 = arith.cmpi slt, %295, %5 : vector<4x1xi32>
    %cst_61 = arith.constant 0.000000e+00 : f32
    %297 = vector.shape_cast %296 : vector<4x1xi1> to vector<4x1xi1>
    %298 = vector.broadcast %297 : vector<4x1xi1> to vector<4x32xi1>
    %299 = vector.broadcast %cst_61 : f32 to vector<4x32xf32>
    %300 = arith.select %298, %292, %299 : vector<4x32xi1>, vector<4x32xf32>
    %301 = vector.shape_cast %296 : vector<4x1xi1> to vector<4x1xi1>
    %302 = vector.broadcast %301 : vector<4x1xi1> to vector<4x32xi1>
    %303 = arith.select %302, %292, %254 : vector<4x32xi1>, vector<4x32xf32>
    %304 = vector.extract_strided_slice %300 {offsets = [0, 0], sizes = [2, 32], strides = [1, 1]} : vector<4x32xf32> to vector<2x32xf32>
    %c0_62 = arith.constant 0 : index
    %c5_63 = arith.constant 5 : index
    %c0_64 = arith.constant 0 : index
    %305 = vector.load %arg12[%c0_62, %c5_63, %c0_64] : memref<2x8x64xf32, #tpu.memory_space<vmem>>, vector<2x1x32xf32>
    %306 = vector.shape_cast %305 : vector<2x1x32xf32> to vector<2x32xf32>
    %307 = vector.shape_cast %304 : vector<2x32xf32> to vector<2x1x32xf32>
    tpu.vector_store %arg12[%c0_62, %c5_63, %c0_64], %307 {strides = array<i32>} : memref<2x8x64xf32, #tpu.memory_space<vmem>>, vector<2x1x32xf32>,
    %308 = vector.extract_strided_slice %300 {offsets = [2, 0], sizes = [2, 32], strides = [1, 1]} : vector<4x32xf32> to vector<2x32xf32>
    %c0_65 = arith.constant 0 : index
    %c2_66 = arith.constant 2 : index
    %c32_67 = arith.constant 32 : index
    %309 = vector.load %arg12[%c0_65, %c2_66, %c32_67] : memref<2x8x64xf32, #tpu.memory_space<vmem>>, vector<2x1x32xf32>
    %310 = vector.shape_cast %309 : vector<2x1x32xf32> to vector<2x32xf32>
    %311 = vector.shape_cast %308 : vector<2x32xf32> to vector<2x1x32xf32>
    tpu.vector_store %arg12[%c0_65, %c2_66, %c32_67], %311 {strides = array<i32>} : memref<2x8x64xf32, #tpu.memory_space<vmem>>, vector<2x1x32xf32>,
    %312 = vector.extract_strided_slice %14 {offsets = [0, 6, 0], sizes = [2, 1, 96], strides = [1, 1, 1]} : vector<2x8x192xf32> to vector<2x1x96xf32>
    %313 = vector.shape_cast %312 : vector<2x1x96xf32> to vector<2x96xf32>
    %314 = vector.extract_strided_slice %14 {offsets = [0, 1, 96], sizes = [2, 1, 96], strides = [1, 1, 1]} : vector<2x8x192xf32> to vector<2x1x96xf32>
    %315 = vector.shape_cast %314 : vector<2x1x96xf32> to vector<2x96xf32>
    %316 = tpu.concatenate %313, %315 in 0 : vector<2x96xf32>, vector<2x96xf32> -> vector<4x96xf32>
    %cst_68 = arith.constant dense<0.000000e+00> : vector<4x192xf32>
    %317 = tpu.matmul %303, %15, %cst_68 {dimension_numbers = #tpu.dot_dimension_numbers<[1], [0], [0], [1], [0, 0, 1, 1], [], []>} : vector<4x32xf32>, vector<32x192xf32>, vector<4x192xf32> -> vector<4x192xf32>
    %318 = vector.extract_strided_slice %317 {offsets = [0, 0], sizes = [4, 96], strides = [1, 1]} : vector<4x192xf32> to vector<4x96xf32>
    %319 = vector.extract_strided_slice %317 {offsets = [0, 96], sizes = [4, 96], strides = [1, 1]} : vector<4x192xf32> to vector<4x96xf32>
    %320 = vector.shape_cast %4 : vector<4x1xi1> to vector<4x1xi1>
    %321 = vector.broadcast %320 : vector<4x1xi1> to vector<4x96xi1>
    %322 = arith.select %321, %318, %319 : vector<4x96xi1>, vector<4x96xf32>
    %323 = vector.extract_strided_slice %316 {offsets = [0, 0], sizes = [4, 64], strides = [1, 1]} : vector<4x96xf32> to vector<4x64xf32>
    %324 = vector.extract_strided_slice %322 {offsets = [0, 0], sizes = [4, 64], strides = [1, 1]} : vector<4x96xf32> to vector<4x64xf32>
    %325 = arith.addf %323, %324 : vector<4x64xf32>
    %326 = arith.negf %325 : vector<4x64xf32>
    %327 = math.exp %326 : vector<4x64xf32>
    %cst_69 = arith.constant 1.000000e+00 : f32
    %328 = vector.broadcast %cst_69 : f32 to vector<4x64xf32>
    %329 = arith.addf %328, %327 : vector<4x64xf32>
    %330 = arith.divf %328, %329 : vector<4x64xf32>
    %331 = vector.extract_strided_slice %330 {offsets = [0, 0], sizes = [4, 32], strides = [1, 1]} : vector<4x64xf32> to vector<4x32xf32>
    %332 = vector.extract_strided_slice %330 {offsets = [0, 32], sizes = [4, 32], strides = [1, 1]} : vector<4x64xf32> to vector<4x32xf32>
    %333 = vector.extract_strided_slice %316 {offsets = [0, 64], sizes = [4, 32], strides = [1, 1]} : vector<4x96xf32> to vector<4x32xf32>
    %334 = vector.extract_strided_slice %322 {offsets = [0, 64], sizes = [4, 32], strides = [1, 1]} : vector<4x96xf32> to vector<4x32xf32>
    %335 = arith.addf %334, %16 : vector<4x32xf32>
    %336 = arith.mulf %331, %335 : vector<4x32xf32>
    %337 = arith.addf %333, %336 : vector<4x32xf32>
    %338 = math.tanh %337 : vector<4x32xf32>
    %339 = arith.subf %303, %338 : vector<4x32xf32>
    %340 = arith.mulf %332, %339 : vector<4x32xf32>
    %341 = arith.addf %338, %340 : vector<4x32xf32>
    %c6_i32_70 = arith.constant 6 : i32
    %c1_i32_71 = arith.constant 1 : i32
    %342 = vector.broadcast %c6_i32_70 : i32 to vector<4x1xi32>
    %343 = vector.broadcast %c1_i32_71 : i32 to vector<4x1xi32>
    %344 = arith.select %4, %342, %343 : vector<4x1xi1>, vector<4x1xi32>
    %345 = arith.cmpi slt, %344, %5 : vector<4x1xi32>
    %cst_72 = arith.constant 0.000000e+00 : f32
    %346 = vector.shape_cast %345 : vector<4x1xi1> to vector<4x1xi1>
    %347 = vector.broadcast %346 : vector<4x1xi1> to vector<4x32xi1>
    %348 = vector.broadcast %cst_72 : f32 to vector<4x32xf32>
    %349 = arith.select %347, %341, %348 : vector<4x32xi1>, vector<4x32xf32>
    %350 = vector.shape_cast %345 : vector<4x1xi1> to vector<4x1xi1>
    %351 = vector.broadcast %350 : vector<4x1xi1> to vector<4x32xi1>
    %352 = arith.select %351, %341, %303 : vector<4x32xi1>, vector<4x32xf32>
    %353 = vector.extract_strided_slice %349 {offsets = [0, 0], sizes = [2, 32], strides = [1, 1]} : vector<4x32xf32> to vector<2x32xf32>
    %c0_73 = arith.constant 0 : index
    %c6_74 = arith.constant 6 : index
    %c0_75 = arith.constant 0 : index
    %354 = vector.load %arg12[%c0_73, %c6_74, %c0_75] : memref<2x8x64xf32, #tpu.memory_space<vmem>>, vector<2x1x32xf32>
    %355 = vector.shape_cast %354 : vector<2x1x32xf32> to vector<2x32xf32>
    %356 = vector.shape_cast %353 : vector<2x32xf32> to vector<2x1x32xf32>
    tpu.vector_store %arg12[%c0_73, %c6_74, %c0_75], %356 {strides = array<i32>} : memref<2x8x64xf32, #tpu.memory_space<vmem>>, vector<2x1x32xf32>,
    %357 = vector.extract_strided_slice %349 {offsets = [2, 0], sizes = [2, 32], strides = [1, 1]} : vector<4x32xf32> to vector<2x32xf32>
    %c0_76 = arith.constant 0 : index
    %c1_77 = arith.constant 1 : index
    %c32_78 = arith.constant 32 : index
    %358 = vector.load %arg12[%c0_76, %c1_77, %c32_78] : memref<2x8x64xf32, #tpu.memory_space<vmem>>, vector<2x1x32xf32>
    %359 = vector.shape_cast %358 : vector<2x1x32xf32> to vector<2x32xf32>
    %360 = vector.shape_cast %357 : vector<2x32xf32> to vector<2x1x32xf32>
    tpu.vector_store %arg12[%c0_76, %c1_77, %c32_78], %360 {strides = array<i32>} : memref<2x8x64xf32, #tpu.memory_space<vmem>>, vector<2x1x32xf32>,
    %361 = vector.extract_strided_slice %14 {offsets = [0, 7, 0], sizes = [2, 1, 96], strides = [1, 1, 1]} : vector<2x8x192xf32> to vector<2x1x96xf32>
    %362 = vector.shape_cast %361 : vector<2x1x96xf32> to vector<2x96xf32>
    %363 = vector.extract_strided_slice %14 {offsets = [0, 0, 96], sizes = [2, 1, 96], strides = [1, 1, 1]} : vector<2x8x192xf32> to vector<2x1x96xf32>
    %364 = vector.shape_cast %363 : vector<2x1x96xf32> to vector<2x96xf32>
    %365 = tpu.concatenate %362, %364 in 0 : vector<2x96xf32>, vector<2x96xf32> -> vector<4x96xf32>
    %cst_79 = arith.constant dense<0.000000e+00> : vector<4x192xf32>
    %366 = tpu.matmul %352, %15, %cst_79 {dimension_numbers = #tpu.dot_dimension_numbers<[1], [0], [0], [1], [0, 0, 1, 1], [], []>} : vector<4x32xf32>, vector<32x192xf32>, vector<4x192xf32> -> vector<4x192xf32>
    %367 = vector.extract_strided_slice %366 {offsets = [0, 0], sizes = [4, 96], strides = [1, 1]} : vector<4x192xf32> to vector<4x96xf32>
    %368 = vector.extract_strided_slice %366 {offsets = [0, 96], sizes = [4, 96], strides = [1, 1]} : vector<4x192xf32> to vector<4x96xf32>
    %369 = vector.shape_cast %4 : vector<4x1xi1> to vector<4x1xi1>
    %370 = vector.broadcast %369 : vector<4x1xi1> to vector<4x96xi1>
    %371 = arith.select %370, %367, %368 : vector<4x96xi1>, vector<4x96xf32>
    %372 = vector.extract_strided_slice %365 {offsets = [0, 0], sizes = [4, 64], strides = [1, 1]} : vector<4x96xf32> to vector<4x64xf32>
    %373 = vector.extract_strided_slice %371 {offsets = [0, 0], sizes = [4, 64], strides = [1, 1]} : vector<4x96xf32> to vector<4x64xf32>
    %374 = arith.addf %372, %373 : vector<4x64xf32>
    %375 = arith.negf %374 : vector<4x64xf32>
    %376 = math.exp %375 : vector<4x64xf32>
    %cst_80 = arith.constant 1.000000e+00 : f32
    %377 = vector.broadcast %cst_80 : f32 to vector<4x64xf32>
    %378 = arith.addf %377, %376 : vector<4x64xf32>
    %379 = arith.divf %377, %378 : vector<4x64xf32>
    %380 = vector.extract_strided_slice %379 {offsets = [0, 0], sizes = [4, 32], strides = [1, 1]} : vector<4x64xf32> to vector<4x32xf32>
    %381 = vector.extract_strided_slice %379 {offsets = [0, 32], sizes = [4, 32], strides = [1, 1]} : vector<4x64xf32> to vector<4x32xf32>
    %382 = vector.extract_strided_slice %365 {offsets = [0, 64], sizes = [4, 32], strides = [1, 1]} : vector<4x96xf32> to vector<4x32xf32>
    %383 = vector.extract_strided_slice %371 {offsets = [0, 64], sizes = [4, 32], strides = [1, 1]} : vector<4x96xf32> to vector<4x32xf32>
    %384 = arith.addf %383, %16 : vector<4x32xf32>
    %385 = arith.mulf %380, %384 : vector<4x32xf32>
    %386 = arith.addf %382, %385 : vector<4x32xf32>
    %387 = math.tanh %386 : vector<4x32xf32>
    %388 = arith.subf %352, %387 : vector<4x32xf32>
    %389 = arith.mulf %381, %388 : vector<4x32xf32>
    %390 = arith.addf %387, %389 : vector<4x32xf32>
    %c7_i32_81 = arith.constant 7 : i32
    %c0_i32_82 = arith.constant 0 : i32
    %391 = vector.broadcast %c7_i32_81 : i32 to vector<4x1xi32>
    %392 = vector.broadcast %c0_i32_82 : i32 to vector<4x1xi32>
    %393 = arith.select %4, %391, %392 : vector<4x1xi1>, vector<4x1xi32>
    %394 = arith.cmpi slt, %393, %5 : vector<4x1xi32>
    %cst_83 = arith.constant 0.000000e+00 : f32
    %395 = vector.shape_cast %394 : vector<4x1xi1> to vector<4x1xi1>
    %396 = vector.broadcast %395 : vector<4x1xi1> to vector<4x32xi1>
    %397 = vector.broadcast %cst_83 : f32 to vector<4x32xf32>
    %398 = arith.select %396, %390, %397 : vector<4x32xi1>, vector<4x32xf32>
    %399 = vector.extract_strided_slice %398 {offsets = [0, 0], sizes = [2, 32], strides = [1, 1]} : vector<4x32xf32> to vector<2x32xf32>
    %c0_84 = arith.constant 0 : index
    %c7_85 = arith.constant 7 : index
    %c0_86 = arith.constant 0 : index
    %400 = vector.load %arg12[%c0_84, %c7_85, %c0_86] : memref<2x8x64xf32, #tpu.memory_space<vmem>>, vector<2x1x32xf32>
    %401 = vector.shape_cast %400 : vector<2x1x32xf32> to vector<2x32xf32>
    %402 = vector.shape_cast %399 : vector<2x32xf32> to vector<2x1x32xf32>
    tpu.vector_store %arg12[%c0_84, %c7_85, %c0_86], %402 {strides = array<i32>} : memref<2x8x64xf32, #tpu.memory_space<vmem>>, vector<2x1x32xf32>,
    %403 = vector.extract_strided_slice %398 {offsets = [2, 0], sizes = [2, 32], strides = [1, 1]} : vector<4x32xf32> to vector<2x32xf32>
    %c0_87 = arith.constant 0 : index
    %c0_88 = arith.constant 0 : index
    %c32_89 = arith.constant 32 : index
    %404 = vector.load %arg12[%c0_87, %c0_88, %c32_89] : memref<2x8x64xf32, #tpu.memory_space<vmem>>, vector<2x1x32xf32>
    %405 = vector.shape_cast %404 : vector<2x1x32xf32> to vector<2x32xf32>
    %406 = vector.shape_cast %403 : vector<2x32xf32> to vector<2x1x32xf32>
    tpu.vector_store %arg12[%c0_87, %c0_88, %c32_89], %406 {strides = array<i32>} : memref<2x8x64xf32, #tpu.memory_space<vmem>>, vector<2x1x32xf32>,
    %c0_90 = arith.constant 0 : index
    %c0_91 = arith.constant 0 : index
    %c0_92 = arith.constant 0 : index
    %407 = vector.load %arg12[%c0_90, %c0_91, %c0_92] : memref<2x8x64xf32, #tpu.memory_space<vmem>>, vector<2x8x64xf32>
    %408 = vector.shape_cast %407 : vector<2x8x64xf32> to vector<16x64xf32>
    %c0_93 = arith.constant 0 : index
    %c0_94 = arith.constant 0 : index
    %409 = vector.load %arg7[%c0_93, %c0_94] : memref<64x192xf32, #tpu.memory_space<vmem>>, vector<64x192xf32>
    %cst_95 = arith.constant dense<0.000000e+00> : vector<16x192xf32>
    %410 = tpu.matmul %408, %409, %cst_95 {dimension_numbers = #tpu.dot_dimension_numbers<[1], [0], [0], [1], [0, 0, 1, 1], [], []>} : vector<16x64xf32>, vector<64x192xf32>, vector<16x192xf32> -> vector<16x192xf32>
    %c0_96 = arith.constant 0 : index
    %c0_97 = arith.constant 0 : index
    %411 = vector.load %arg8[%c0_96, %c0_97] : memref<1x192xf32, #tpu.memory_space<vmem>>, vector<1x192xf32>
    %412 = vector.broadcast %411 : vector<1x192xf32> to vector<16x192xf32>
    %413 = arith.addf %410, %412 : vector<16x192xf32>
    %414 = vector.shape_cast %413 : vector<16x192xf32> to vector<2x8x192xf32>
    %c0_98 = arith.constant 0 : index
    %c0_99 = arith.constant 0 : index
    %415 = vector.load %arg9[%c0_98, %c0_99] : memref<32x192xf32, #tpu.memory_space<vmem>>, vector<32x192xf32>
    %c0_100 = arith.constant 0 : index
    %c0_101 = arith.constant 0 : index
    %416 = vector.load %arg10[%c0_100, %c0_101] : memref<4x32xf32, #tpu.memory_space<vmem>>, vector<4x32xf32>
    %cst_102 = arith.constant 0.000000e+00 : f32
    %417 = vector.broadcast %cst_102 : f32 to vector<4x32xf32>
    %418 = vector.extract_strided_slice %414 {offsets = [0, 0, 0], sizes = [2, 1, 96], strides = [1, 1, 1]} : vector<2x8x192xf32> to vector<2x1x96xf32>
    %419 = vector.shape_cast %418 : vector<2x1x96xf32> to vector<2x96xf32>
    %420 = vector.extract_strided_slice %414 {offsets = [0, 7, 96], sizes = [2, 1, 96], strides = [1, 1, 1]} : vector<2x8x192xf32> to vector<2x1x96xf32>
    %421 = vector.shape_cast %420 : vector<2x1x96xf32> to vector<2x96xf32>
    %422 = tpu.concatenate %419, %421 in 0 : vector<2x96xf32>, vector<2x96xf32> -> vector<4x96xf32>
    %cst_103 = arith.constant dense<0.000000e+00> : vector<4x192xf32>
    %423 = tpu.matmul %417, %415, %cst_103 {dimension_numbers = #tpu.dot_dimension_numbers<[1], [0], [0], [1], [0, 0, 1, 1], [], []>} : vector<4x32xf32>, vector<32x192xf32>, vector<4x192xf32> -> vector<4x192xf32>
    %424 = vector.extract_strided_slice %423 {offsets = [0, 0], sizes = [4, 96], strides = [1, 1]} : vector<4x192xf32> to vector<4x96xf32>
    %425 = vector.extract_strided_slice %423 {offsets = [0, 96], sizes = [4, 96], strides = [1, 1]} : vector<4x192xf32> to vector<4x96xf32>
    %426 = vector.shape_cast %4 : vector<4x1xi1> to vector<4x1xi1>
    %427 = vector.broadcast %426 : vector<4x1xi1> to vector<4x96xi1>
    %428 = arith.select %427, %424, %425 : vector<4x96xi1>, vector<4x96xf32>
    %429 = vector.extract_strided_slice %422 {offsets = [0, 0], sizes = [4, 64], strides = [1, 1]} : vector<4x96xf32> to vector<4x64xf32>
    %430 = vector.extract_strided_slice %428 {offsets = [0, 0], sizes = [4, 64], strides = [1, 1]} : vector<4x96xf32> to vector<4x64xf32>
    %431 = arith.addf %429, %430 : vector<4x64xf32>
    %432 = arith.negf %431 : vector<4x64xf32>
    %433 = math.exp %432 : vector<4x64xf32>
    %cst_104 = arith.constant 1.000000e+00 : f32
    %434 = vector.broadcast %cst_104 : f32 to vector<4x64xf32>
    %435 = arith.addf %434, %433 : vector<4x64xf32>
    %436 = arith.divf %434, %435 : vector<4x64xf32>
    %437 = vector.extract_strided_slice %436 {offsets = [0, 0], sizes = [4, 32], strides = [1, 1]} : vector<4x64xf32> to vector<4x32xf32>
    %438 = vector.extract_strided_slice %436 {offsets = [0, 32], sizes = [4, 32], strides = [1, 1]} : vector<4x64xf32> to vector<4x32xf32>
    %439 = vector.extract_strided_slice %422 {offsets = [0, 64], sizes = [4, 32], strides = [1, 1]} : vector<4x96xf32> to vector<4x32xf32>
    %440 = vector.extract_strided_slice %428 {offsets = [0, 64], sizes = [4, 32], strides = [1, 1]} : vector<4x96xf32> to vector<4x32xf32>
    %441 = arith.addf %440, %416 : vector<4x32xf32>
    %442 = arith.mulf %437, %441 : vector<4x32xf32>
    %443 = arith.addf %439, %442 : vector<4x32xf32>
    %444 = math.tanh %443 : vector<4x32xf32>
    %445 = arith.subf %417, %444 : vector<4x32xf32>
    %446 = arith.mulf %438, %445 : vector<4x32xf32>
    %447 = arith.addf %444, %446 : vector<4x32xf32>
    %c0_i32_105 = arith.constant 0 : i32
    %c7_i32_106 = arith.constant 7 : i32
    %448 = vector.broadcast %c0_i32_105 : i32 to vector<4x1xi32>
    %449 = vector.broadcast %c7_i32_106 : i32 to vector<4x1xi32>
    %450 = arith.select %4, %448, %449 : vector<4x1xi1>, vector<4x1xi32>
    %451 = arith.cmpi slt, %450, %5 : vector<4x1xi32>
    %cst_107 = arith.constant 0.000000e+00 : f32
    %452 = vector.shape_cast %451 : vector<4x1xi1> to vector<4x1xi1>
    %453 = vector.broadcast %452 : vector<4x1xi1> to vector<4x32xi1>
    %454 = vector.broadcast %cst_107 : f32 to vector<4x32xf32>
    %455 = arith.select %453, %447, %454 : vector<4x32xi1>, vector<4x32xf32>
    %456 = vector.shape_cast %451 : vector<4x1xi1> to vector<4x1xi1>
    %457 = vector.broadcast %456 : vector<4x1xi1> to vector<4x32xi1>
    %458 = arith.select %457, %447, %417 : vector<4x32xi1>, vector<4x32xf32>
    %459 = vector.extract_strided_slice %455 {offsets = [0, 0], sizes = [2, 32], strides = [1, 1]} : vector<4x32xf32> to vector<2x32xf32>
    %c0_108 = arith.constant 0 : index
    %c0_109 = arith.constant 0 : index
    %c0_110 = arith.constant 0 : index
    %460 = vector.load %arg11[%c0_108, %c0_109, %c0_110] : memref<2x8x128xf32, #tpu.memory_space<vmem>>, vector<2x1x32xf32>
    %461 = vector.shape_cast %460 : vector<2x1x32xf32> to vector<2x32xf32>
    %462 = vector.shape_cast %459 : vector<2x32xf32> to vector<2x1x32xf32>
    tpu.vector_store %arg11[%c0_108, %c0_109, %c0_110], %462 {strides = array<i32>} : memref<2x8x128xf32, #tpu.memory_space<vmem>>, vector<2x1x32xf32>,
    %463 = vector.extract_strided_slice %455 {offsets = [2, 0], sizes = [2, 32], strides = [1, 1]} : vector<4x32xf32> to vector<2x32xf32>
    %c0_111 = arith.constant 0 : index
    %c7_112 = arith.constant 7 : index
    %c32_113 = arith.constant 32 : index
    %464 = vector.load %arg11[%c0_111, %c7_112, %c32_113] : memref<2x8x128xf32, #tpu.memory_space<vmem>>, vector<2x1x32xf32>
    %465 = vector.shape_cast %464 : vector<2x1x32xf32> to vector<2x32xf32>
    %466 = vector.shape_cast %463 : vector<2x32xf32> to vector<2x1x32xf32>
    tpu.vector_store %arg11[%c0_111, %c7_112, %c32_113], %466 {strides = array<i32>} : memref<2x8x128xf32, #tpu.memory_space<vmem>>, vector<2x1x32xf32>,
    %467 = vector.extract_strided_slice %414 {offsets = [0, 1, 0], sizes = [2, 1, 96], strides = [1, 1, 1]} : vector<2x8x192xf32> to vector<2x1x96xf32>
    %468 = vector.shape_cast %467 : vector<2x1x96xf32> to vector<2x96xf32>
    %469 = vector.extract_strided_slice %414 {offsets = [0, 6, 96], sizes = [2, 1, 96], strides = [1, 1, 1]} : vector<2x8x192xf32> to vector<2x1x96xf32>
    %470 = vector.shape_cast %469 : vector<2x1x96xf32> to vector<2x96xf32>
    %471 = tpu.concatenate %468, %470 in 0 : vector<2x96xf32>, vector<2x96xf32> -> vector<4x96xf32>
    %cst_114 = arith.constant dense<0.000000e+00> : vector<4x192xf32>
    %472 = tpu.matmul %458, %415, %cst_114 {dimension_numbers = #tpu.dot_dimension_numbers<[1], [0], [0], [1], [0, 0, 1, 1], [], []>} : vector<4x32xf32>, vector<32x192xf32>, vector<4x192xf32> -> vector<4x192xf32>
    %473 = vector.extract_strided_slice %472 {offsets = [0, 0], sizes = [4, 96], strides = [1, 1]} : vector<4x192xf32> to vector<4x96xf32>
    %474 = vector.extract_strided_slice %472 {offsets = [0, 96], sizes = [4, 96], strides = [1, 1]} : vector<4x192xf32> to vector<4x96xf32>
    %475 = vector.shape_cast %4 : vector<4x1xi1> to vector<4x1xi1>
    %476 = vector.broadcast %475 : vector<4x1xi1> to vector<4x96xi1>
    %477 = arith.select %476, %473, %474 : vector<4x96xi1>, vector<4x96xf32>
    %478 = vector.extract_strided_slice %471 {offsets = [0, 0], sizes = [4, 64], strides = [1, 1]} : vector<4x96xf32> to vector<4x64xf32>
    %479 = vector.extract_strided_slice %477 {offsets = [0, 0], sizes = [4, 64], strides = [1, 1]} : vector<4x96xf32> to vector<4x64xf32>
    %480 = arith.addf %478, %479 : vector<4x64xf32>
    %481 = arith.negf %480 : vector<4x64xf32>
    %482 = math.exp %481 : vector<4x64xf32>
    %cst_115 = arith.constant 1.000000e+00 : f32
    %483 = vector.broadcast %cst_115 : f32 to vector<4x64xf32>
    %484 = arith.addf %483, %482 : vector<4x64xf32>
    %485 = arith.divf %483, %484 : vector<4x64xf32>
    %486 = vector.extract_strided_slice %485 {offsets = [0, 0], sizes = [4, 32], strides = [1, 1]} : vector<4x64xf32> to vector<4x32xf32>
    %487 = vector.extract_strided_slice %485 {offsets = [0, 32], sizes = [4, 32], strides = [1, 1]} : vector<4x64xf32> to vector<4x32xf32>
    %488 = vector.extract_strided_slice %471 {offsets = [0, 64], sizes = [4, 32], strides = [1, 1]} : vector<4x96xf32> to vector<4x32xf32>
    %489 = vector.extract_strided_slice %477 {offsets = [0, 64], sizes = [4, 32], strides = [1, 1]} : vector<4x96xf32> to vector<4x32xf32>
    %490 = arith.addf %489, %416 : vector<4x32xf32>
    %491 = arith.mulf %486, %490 : vector<4x32xf32>
    %492 = arith.addf %488, %491 : vector<4x32xf32>
    %493 = math.tanh %492 : vector<4x32xf32>
    %494 = arith.subf %458, %493 : vector<4x32xf32>
    %495 = arith.mulf %487, %494 : vector<4x32xf32>
    %496 = arith.addf %493, %495 : vector<4x32xf32>
    %c1_i32_116 = arith.constant 1 : i32
    %c6_i32_117 = arith.constant 6 : i32
    %497 = vector.broadcast %c1_i32_116 : i32 to vector<4x1xi32>
    %498 = vector.broadcast %c6_i32_117 : i32 to vector<4x1xi32>
    %499 = arith.select %4, %497, %498 : vector<4x1xi1>, vector<4x1xi32>
    %500 = arith.cmpi slt, %499, %5 : vector<4x1xi32>
    %cst_118 = arith.constant 0.000000e+00 : f32
    %501 = vector.shape_cast %500 : vector<4x1xi1> to vector<4x1xi1>
    %502 = vector.broadcast %501 : vector<4x1xi1> to vector<4x32xi1>
    %503 = vector.broadcast %cst_118 : f32 to vector<4x32xf32>
    %504 = arith.select %502, %496, %503 : vector<4x32xi1>, vector<4x32xf32>
    %505 = vector.shape_cast %500 : vector<4x1xi1> to vector<4x1xi1>
    %506 = vector.broadcast %505 : vector<4x1xi1> to vector<4x32xi1>
    %507 = arith.select %506, %496, %458 : vector<4x32xi1>, vector<4x32xf32>
    %508 = vector.extract_strided_slice %504 {offsets = [0, 0], sizes = [2, 32], strides = [1, 1]} : vector<4x32xf32> to vector<2x32xf32>
    %c0_119 = arith.constant 0 : index
    %c1_120 = arith.constant 1 : index
    %c0_121 = arith.constant 0 : index
    %509 = vector.load %arg11[%c0_119, %c1_120, %c0_121] : memref<2x8x128xf32, #tpu.memory_space<vmem>>, vector<2x1x32xf32>
    %510 = vector.shape_cast %509 : vector<2x1x32xf32> to vector<2x32xf32>
    %511 = vector.shape_cast %508 : vector<2x32xf32> to vector<2x1x32xf32>
    tpu.vector_store %arg11[%c0_119, %c1_120, %c0_121], %511 {strides = array<i32>} : memref<2x8x128xf32, #tpu.memory_space<vmem>>, vector<2x1x32xf32>,
    %512 = vector.extract_strided_slice %504 {offsets = [2, 0], sizes = [2, 32], strides = [1, 1]} : vector<4x32xf32> to vector<2x32xf32>
    %c0_122 = arith.constant 0 : index
    %c6_123 = arith.constant 6 : index
    %c32_124 = arith.constant 32 : index
    %513 = vector.load %arg11[%c0_122, %c6_123, %c32_124] : memref<2x8x128xf32, #tpu.memory_space<vmem>>, vector<2x1x32xf32>
    %514 = vector.shape_cast %513 : vector<2x1x32xf32> to vector<2x32xf32>
    %515 = vector.shape_cast %512 : vector<2x32xf32> to vector<2x1x32xf32>
    tpu.vector_store %arg11[%c0_122, %c6_123, %c32_124], %515 {strides = array<i32>} : memref<2x8x128xf32, #tpu.memory_space<vmem>>, vector<2x1x32xf32>,
    %516 = vector.extract_strided_slice %414 {offsets = [0, 2, 0], sizes = [2, 1, 96], strides = [1, 1, 1]} : vector<2x8x192xf32> to vector<2x1x96xf32>
    %517 = vector.shape_cast %516 : vector<2x1x96xf32> to vector<2x96xf32>
    %518 = vector.extract_strided_slice %414 {offsets = [0, 5, 96], sizes = [2, 1, 96], strides = [1, 1, 1]} : vector<2x8x192xf32> to vector<2x1x96xf32>
    %519 = vector.shape_cast %518 : vector<2x1x96xf32> to vector<2x96xf32>
    %520 = tpu.concatenate %517, %519 in 0 : vector<2x96xf32>, vector<2x96xf32> -> vector<4x96xf32>
    %cst_125 = arith.constant dense<0.000000e+00> : vector<4x192xf32>
    %521 = tpu.matmul %507, %415, %cst_125 {dimension_numbers = #tpu.dot_dimension_numbers<[1], [0], [0], [1], [0, 0, 1, 1], [], []>} : vector<4x32xf32>, vector<32x192xf32>, vector<4x192xf32> -> vector<4x192xf32>
    %522 = vector.extract_strided_slice %521 {offsets = [0, 0], sizes = [4, 96], strides = [1, 1]} : vector<4x192xf32> to vector<4x96xf32>
    %523 = vector.extract_strided_slice %521 {offsets = [0, 96], sizes = [4, 96], strides = [1, 1]} : vector<4x192xf32> to vector<4x96xf32>
    %524 = vector.shape_cast %4 : vector<4x1xi1> to vector<4x1xi1>
    %525 = vector.broadcast %524 : vector<4x1xi1> to vector<4x96xi1>
    %526 = arith.select %525, %522, %523 : vector<4x96xi1>, vector<4x96xf32>
    %527 = vector.extract_strided_slice %520 {offsets = [0, 0], sizes = [4, 64], strides = [1, 1]} : vector<4x96xf32> to vector<4x64xf32>
    %528 = vector.extract_strided_slice %526 {offsets = [0, 0], sizes = [4, 64], strides = [1, 1]} : vector<4x96xf32> to vector<4x64xf32>
    %529 = arith.addf %527, %528 : vector<4x64xf32>
    %530 = arith.negf %529 : vector<4x64xf32>
    %531 = math.exp %530 : vector<4x64xf32>
    %cst_126 = arith.constant 1.000000e+00 : f32
    %532 = vector.broadcast %cst_126 : f32 to vector<4x64xf32>
    %533 = arith.addf %532, %531 : vector<4x64xf32>
    %534 = arith.divf %532, %533 : vector<4x64xf32>
    %535 = vector.extract_strided_slice %534 {offsets = [0, 0], sizes = [4, 32], strides = [1, 1]} : vector<4x64xf32> to vector<4x32xf32>
    %536 = vector.extract_strided_slice %534 {offsets = [0, 32], sizes = [4, 32], strides = [1, 1]} : vector<4x64xf32> to vector<4x32xf32>
    %537 = vector.extract_strided_slice %520 {offsets = [0, 64], sizes = [4, 32], strides = [1, 1]} : vector<4x96xf32> to vector<4x32xf32>
    %538 = vector.extract_strided_slice %526 {offsets = [0, 64], sizes = [4, 32], strides = [1, 1]} : vector<4x96xf32> to vector<4x32xf32>
    %539 = arith.addf %538, %416 : vector<4x32xf32>
    %540 = arith.mulf %535, %539 : vector<4x32xf32>
    %541 = arith.addf %537, %540 : vector<4x32xf32>
    %542 = math.tanh %541 : vector<4x32xf32>
    %543 = arith.subf %507, %542 : vector<4x32xf32>
    %544 = arith.mulf %536, %543 : vector<4x32xf32>
    %545 = arith.addf %542, %544 : vector<4x32xf32>
    %c2_i32_127 = arith.constant 2 : i32
    %c5_i32_128 = arith.constant 5 : i32
    %546 = vector.broadcast %c2_i32_127 : i32 to vector<4x1xi32>
    %547 = vector.broadcast %c5_i32_128 : i32 to vector<4x1xi32>
    %548 = arith.select %4, %546, %547 : vector<4x1xi1>, vector<4x1xi32>
    %549 = arith.cmpi slt, %548, %5 : vector<4x1xi32>
    %cst_129 = arith.constant 0.000000e+00 : f32
    %550 = vector.shape_cast %549 : vector<4x1xi1> to vector<4x1xi1>
    %551 = vector.broadcast %550 : vector<4x1xi1> to vector<4x32xi1>
    %552 = vector.broadcast %cst_129 : f32 to vector<4x32xf32>
    %553 = arith.select %551, %545, %552 : vector<4x32xi1>, vector<4x32xf32>
    %554 = vector.shape_cast %549 : vector<4x1xi1> to vector<4x1xi1>
    %555 = vector.broadcast %554 : vector<4x1xi1> to vector<4x32xi1>
    %556 = arith.select %555, %545, %507 : vector<4x32xi1>, vector<4x32xf32>
    %557 = vector.extract_strided_slice %553 {offsets = [0, 0], sizes = [2, 32], strides = [1, 1]} : vector<4x32xf32> to vector<2x32xf32>
    %c0_130 = arith.constant 0 : index
    %c2_131 = arith.constant 2 : index
    %c0_132 = arith.constant 0 : index
    %558 = vector.load %arg11[%c0_130, %c2_131, %c0_132] : memref<2x8x128xf32, #tpu.memory_space<vmem>>, vector<2x1x32xf32>
    %559 = vector.shape_cast %558 : vector<2x1x32xf32> to vector<2x32xf32>
    %560 = vector.shape_cast %557 : vector<2x32xf32> to vector<2x1x32xf32>
    tpu.vector_store %arg11[%c0_130, %c2_131, %c0_132], %560 {strides = array<i32>} : memref<2x8x128xf32, #tpu.memory_space<vmem>>, vector<2x1x32xf32>,
    %561 = vector.extract_strided_slice %553 {offsets = [2, 0], sizes = [2, 32], strides = [1, 1]} : vector<4x32xf32> to vector<2x32xf32>
    %c0_133 = arith.constant 0 : index
    %c5_134 = arith.constant 5 : index
    %c32_135 = arith.constant 32 : index
    %562 = vector.load %arg11[%c0_133, %c5_134, %c32_135] : memref<2x8x128xf32, #tpu.memory_space<vmem>>, vector<2x1x32xf32>
    %563 = vector.shape_cast %562 : vector<2x1x32xf32> to vector<2x32xf32>
    %564 = vector.shape_cast %561 : vector<2x32xf32> to vector<2x1x32xf32>
    tpu.vector_store %arg11[%c0_133, %c5_134, %c32_135], %564 {strides = array<i32>} : memref<2x8x128xf32, #tpu.memory_space<vmem>>, vector<2x1x32xf32>,
    %565 = vector.extract_strided_slice %414 {offsets = [0, 3, 0], sizes = [2, 1, 96], strides = [1, 1, 1]} : vector<2x8x192xf32> to vector<2x1x96xf32>
    %566 = vector.shape_cast %565 : vector<2x1x96xf32> to vector<2x96xf32>
    %567 = vector.extract_strided_slice %414 {offsets = [0, 4, 96], sizes = [2, 1, 96], strides = [1, 1, 1]} : vector<2x8x192xf32> to vector<2x1x96xf32>
    %568 = vector.shape_cast %567 : vector<2x1x96xf32> to vector<2x96xf32>
    %569 = tpu.concatenate %566, %568 in 0 : vector<2x96xf32>, vector<2x96xf32> -> vector<4x96xf32>
    %cst_136 = arith.constant dense<0.000000e+00> : vector<4x192xf32>
    %570 = tpu.matmul %556, %415, %cst_136 {dimension_numbers = #tpu.dot_dimension_numbers<[1], [0], [0], [1], [0, 0, 1, 1], [], []>} : vector<4x32xf32>, vector<32x192xf32>, vector<4x192xf32> -> vector<4x192xf32>
    %571 = vector.extract_strided_slice %570 {offsets = [0, 0], sizes = [4, 96], strides = [1, 1]} : vector<4x192xf32> to vector<4x96xf32>
    %572 = vector.extract_strided_slice %570 {offsets = [0, 96], sizes = [4, 96], strides = [1, 1]} : vector<4x192xf32> to vector<4x96xf32>
    %573 = vector.shape_cast %4 : vector<4x1xi1> to vector<4x1xi1>
    %574 = vector.broadcast %573 : vector<4x1xi1> to vector<4x96xi1>
    %575 = arith.select %574, %571, %572 : vector<4x96xi1>, vector<4x96xf32>
    %576 = vector.extract_strided_slice %569 {offsets = [0, 0], sizes = [4, 64], strides = [1, 1]} : vector<4x96xf32> to vector<4x64xf32>
    %577 = vector.extract_strided_slice %575 {offsets = [0, 0], sizes = [4, 64], strides = [1, 1]} : vector<4x96xf32> to vector<4x64xf32>
    %578 = arith.addf %576, %577 : vector<4x64xf32>
    %579 = arith.negf %578 : vector<4x64xf32>
    %580 = math.exp %579 : vector<4x64xf32>
    %cst_137 = arith.constant 1.000000e+00 : f32
    %581 = vector.broadcast %cst_137 : f32 to vector<4x64xf32>
    %582 = arith.addf %581, %580 : vector<4x64xf32>
    %583 = arith.divf %581, %582 : vector<4x64xf32>
    %584 = vector.extract_strided_slice %583 {offsets = [0, 0], sizes = [4, 32], strides = [1, 1]} : vector<4x64xf32> to vector<4x32xf32>
    %585 = vector.extract_strided_slice %583 {offsets = [0, 32], sizes = [4, 32], strides = [1, 1]} : vector<4x64xf32> to vector<4x32xf32>
    %586 = vector.extract_strided_slice %569 {offsets = [0, 64], sizes = [4, 32], strides = [1, 1]} : vector<4x96xf32> to vector<4x32xf32>
    %587 = vector.extract_strided_slice %575 {offsets = [0, 64], sizes = [4, 32], strides = [1, 1]} : vector<4x96xf32> to vector<4x32xf32>
    %588 = arith.addf %587, %416 : vector<4x32xf32>
    %589 = arith.mulf %584, %588 : vector<4x32xf32>
    %590 = arith.addf %586, %589 : vector<4x32xf32>
    %591 = math.tanh %590 : vector<4x32xf32>
    %592 = arith.subf %556, %591 : vector<4x32xf32>
    %593 = arith.mulf %585, %592 : vector<4x32xf32>
    %594 = arith.addf %591, %593 : vector<4x32xf32>
    %c3_i32_138 = arith.constant 3 : i32
    %c4_i32_139 = arith.constant 4 : i32
    %595 = vector.broadcast %c3_i32_138 : i32 to vector<4x1xi32>
    %596 = vector.broadcast %c4_i32_139 : i32 to vector<4x1xi32>
    %597 = arith.select %4, %595, %596 : vector<4x1xi1>, vector<4x1xi32>
    %598 = arith.cmpi slt, %597, %5 : vector<4x1xi32>
    %cst_140 = arith.constant 0.000000e+00 : f32
    %599 = vector.shape_cast %598 : vector<4x1xi1> to vector<4x1xi1>
    %600 = vector.broadcast %599 : vector<4x1xi1> to vector<4x32xi1>
    %601 = vector.broadcast %cst_140 : f32 to vector<4x32xf32>
    %602 = arith.select %600, %594, %601 : vector<4x32xi1>, vector<4x32xf32>
    %603 = vector.shape_cast %598 : vector<4x1xi1> to vector<4x1xi1>
    %604 = vector.broadcast %603 : vector<4x1xi1> to vector<4x32xi1>
    %605 = arith.select %604, %594, %556 : vector<4x32xi1>, vector<4x32xf32>
    %606 = vector.extract_strided_slice %602 {offsets = [0, 0], sizes = [2, 32], strides = [1, 1]} : vector<4x32xf32> to vector<2x32xf32>
    %c0_141 = arith.constant 0 : index
    %c3_142 = arith.constant 3 : index
    %c0_143 = arith.constant 0 : index
    %607 = vector.load %arg11[%c0_141, %c3_142, %c0_143] : memref<2x8x128xf32, #tpu.memory_space<vmem>>, vector<2x1x32xf32>
    %608 = vector.shape_cast %607 : vector<2x1x32xf32> to vector<2x32xf32>
    %609 = vector.shape_cast %606 : vector<2x32xf32> to vector<2x1x32xf32>
    tpu.vector_store %arg11[%c0_141, %c3_142, %c0_143], %609 {strides = array<i32>} : memref<2x8x128xf32, #tpu.memory_space<vmem>>, vector<2x1x32xf32>,
    %610 = vector.extract_strided_slice %602 {offsets = [2, 0], sizes = [2, 32], strides = [1, 1]} : vector<4x32xf32> to vector<2x32xf32>
    %c0_144 = arith.constant 0 : index
    %c4_145 = arith.constant 4 : index
    %c32_146 = arith.constant 32 : index
    %611 = vector.load %arg11[%c0_144, %c4_145, %c32_146] : memref<2x8x128xf32, #tpu.memory_space<vmem>>, vector<2x1x32xf32>
    %612 = vector.shape_cast %611 : vector<2x1x32xf32> to vector<2x32xf32>
    %613 = vector.shape_cast %610 : vector<2x32xf32> to vector<2x1x32xf32>
    tpu.vector_store %arg11[%c0_144, %c4_145, %c32_146], %613 {strides = array<i32>} : memref<2x8x128xf32, #tpu.memory_space<vmem>>, vector<2x1x32xf32>,
    %614 = vector.extract_strided_slice %414 {offsets = [0, 4, 0], sizes = [2, 1, 96], strides = [1, 1, 1]} : vector<2x8x192xf32> to vector<2x1x96xf32>
    %615 = vector.shape_cast %614 : vector<2x1x96xf32> to vector<2x96xf32>
    %616 = vector.extract_strided_slice %414 {offsets = [0, 3, 96], sizes = [2, 1, 96], strides = [1, 1, 1]} : vector<2x8x192xf32> to vector<2x1x96xf32>
    %617 = vector.shape_cast %616 : vector<2x1x96xf32> to vector<2x96xf32>
    %618 = tpu.concatenate %615, %617 in 0 : vector<2x96xf32>, vector<2x96xf32> -> vector<4x96xf32>
    %cst_147 = arith.constant dense<0.000000e+00> : vector<4x192xf32>
    %619 = tpu.matmul %605, %415, %cst_147 {dimension_numbers = #tpu.dot_dimension_numbers<[1], [0], [0], [1], [0, 0, 1, 1], [], []>} : vector<4x32xf32>, vector<32x192xf32>, vector<4x192xf32> -> vector<4x192xf32>
    %620 = vector.extract_strided_slice %619 {offsets = [0, 0], sizes = [4, 96], strides = [1, 1]} : vector<4x192xf32> to vector<4x96xf32>
    %621 = vector.extract_strided_slice %619 {offsets = [0, 96], sizes = [4, 96], strides = [1, 1]} : vector<4x192xf32> to vector<4x96xf32>
    %622 = vector.shape_cast %4 : vector<4x1xi1> to vector<4x1xi1>
    %623 = vector.broadcast %622 : vector<4x1xi1> to vector<4x96xi1>
    %624 = arith.select %623, %620, %621 : vector<4x96xi1>, vector<4x96xf32>
    %625 = vector.extract_strided_slice %618 {offsets = [0, 0], sizes = [4, 64], strides = [1, 1]} : vector<4x96xf32> to vector<4x64xf32>
    %626 = vector.extract_strided_slice %624 {offsets = [0, 0], sizes = [4, 64], strides = [1, 1]} : vector<4x96xf32> to vector<4x64xf32>
    %627 = arith.addf %625, %626 : vector<4x64xf32>
    %628 = arith.negf %627 : vector<4x64xf32>
    %629 = math.exp %628 : vector<4x64xf32>
    %cst_148 = arith.constant 1.000000e+00 : f32
    %630 = vector.broadcast %cst_148 : f32 to vector<4x64xf32>
    %631 = arith.addf %630, %629 : vector<4x64xf32>
    %632 = arith.divf %630, %631 : vector<4x64xf32>
    %633 = vector.extract_strided_slice %632 {offsets = [0, 0], sizes = [4, 32], strides = [1, 1]} : vector<4x64xf32> to vector<4x32xf32>
    %634 = vector.extract_strided_slice %632 {offsets = [0, 32], sizes = [4, 32], strides = [1, 1]} : vector<4x64xf32> to vector<4x32xf32>
    %635 = vector.extract_strided_slice %618 {offsets = [0, 64], sizes = [4, 32], strides = [1, 1]} : vector<4x96xf32> to vector<4x32xf32>
    %636 = vector.extract_strided_slice %624 {offsets = [0, 64], sizes = [4, 32], strides = [1, 1]} : vector<4x96xf32> to vector<4x32xf32>
    %637 = arith.addf %636, %416 : vector<4x32xf32>
    %638 = arith.mulf %633, %637 : vector<4x32xf32>
    %639 = arith.addf %635, %638 : vector<4x32xf32>
    %640 = math.tanh %639 : vector<4x32xf32>
    %641 = arith.subf %605, %640 : vector<4x32xf32>
    %642 = arith.mulf %634, %641 : vector<4x32xf32>
    %643 = arith.addf %640, %642 : vector<4x32xf32>
    %c4_i32_149 = arith.constant 4 : i32
    %c3_i32_150 = arith.constant 3 : i32
    %644 = vector.broadcast %c4_i32_149 : i32 to vector<4x1xi32>
    %645 = vector.broadcast %c3_i32_150 : i32 to vector<4x1xi32>
    %646 = arith.select %4, %644, %645 : vector<4x1xi1>, vector<4x1xi32>
    %647 = arith.cmpi slt, %646, %5 : vector<4x1xi32>
    %cst_151 = arith.constant 0.000000e+00 : f32
    %648 = vector.shape_cast %647 : vector<4x1xi1> to vector<4x1xi1>
    %649 = vector.broadcast %648 : vector<4x1xi1> to vector<4x32xi1>
    %650 = vector.broadcast %cst_151 : f32 to vector<4x32xf32>
    %651 = arith.select %649, %643, %650 : vector<4x32xi1>, vector<4x32xf32>
    %652 = vector.shape_cast %647 : vector<4x1xi1> to vector<4x1xi1>
    %653 = vector.broadcast %652 : vector<4x1xi1> to vector<4x32xi1>
    %654 = arith.select %653, %643, %605 : vector<4x32xi1>, vector<4x32xf32>
    %655 = vector.extract_strided_slice %651 {offsets = [0, 0], sizes = [2, 32], strides = [1, 1]} : vector<4x32xf32> to vector<2x32xf32>
    %c0_152 = arith.constant 0 : index
    %c4_153 = arith.constant 4 : index
    %c0_154 = arith.constant 0 : index
    %656 = vector.load %arg11[%c0_152, %c4_153, %c0_154] : memref<2x8x128xf32, #tpu.memory_space<vmem>>, vector<2x1x32xf32>
    %657 = vector.shape_cast %656 : vector<2x1x32xf32> to vector<2x32xf32>
    %658 = vector.shape_cast %655 : vector<2x32xf32> to vector<2x1x32xf32>
    tpu.vector_store %arg11[%c0_152, %c4_153, %c0_154], %658 {strides = array<i32>} : memref<2x8x128xf32, #tpu.memory_space<vmem>>, vector<2x1x32xf32>,
    %659 = vector.extract_strided_slice %651 {offsets = [2, 0], sizes = [2, 32], strides = [1, 1]} : vector<4x32xf32> to vector<2x32xf32>
    %c0_155 = arith.constant 0 : index
    %c3_156 = arith.constant 3 : index
    %c32_157 = arith.constant 32 : index
    %660 = vector.load %arg11[%c0_155, %c3_156, %c32_157] : memref<2x8x128xf32, #tpu.memory_space<vmem>>, vector<2x1x32xf32>
    %661 = vector.shape_cast %660 : vector<2x1x32xf32> to vector<2x32xf32>
    %662 = vector.shape_cast %659 : vector<2x32xf32> to vector<2x1x32xf32>
    tpu.vector_store %arg11[%c0_155, %c3_156, %c32_157], %662 {strides = array<i32>} : memref<2x8x128xf32, #tpu.memory_space<vmem>>, vector<2x1x32xf32>,
    %663 = vector.extract_strided_slice %414 {offsets = [0, 5, 0], sizes = [2, 1, 96], strides = [1, 1, 1]} : vector<2x8x192xf32> to vector<2x1x96xf32>
    %664 = vector.shape_cast %663 : vector<2x1x96xf32> to vector<2x96xf32>
    %665 = vector.extract_strided_slice %414 {offsets = [0, 2, 96], sizes = [2, 1, 96], strides = [1, 1, 1]} : vector<2x8x192xf32> to vector<2x1x96xf32>
    %666 = vector.shape_cast %665 : vector<2x1x96xf32> to vector<2x96xf32>
    %667 = tpu.concatenate %664, %666 in 0 : vector<2x96xf32>, vector<2x96xf32> -> vector<4x96xf32>
    %cst_158 = arith.constant dense<0.000000e+00> : vector<4x192xf32>
    %668 = tpu.matmul %654, %415, %cst_158 {dimension_numbers = #tpu.dot_dimension_numbers<[1], [0], [0], [1], [0, 0, 1, 1], [], []>} : vector<4x32xf32>, vector<32x192xf32>, vector<4x192xf32> -> vector<4x192xf32>
    %669 = vector.extract_strided_slice %668 {offsets = [0, 0], sizes = [4, 96], strides = [1, 1]} : vector<4x192xf32> to vector<4x96xf32>
    %670 = vector.extract_strided_slice %668 {offsets = [0, 96], sizes = [4, 96], strides = [1, 1]} : vector<4x192xf32> to vector<4x96xf32>
    %671 = vector.shape_cast %4 : vector<4x1xi1> to vector<4x1xi1>
    %672 = vector.broadcast %671 : vector<4x1xi1> to vector<4x96xi1>
    %673 = arith.select %672, %669, %670 : vector<4x96xi1>, vector<4x96xf32>
    %674 = vector.extract_strided_slice %667 {offsets = [0, 0], sizes = [4, 64], strides = [1, 1]} : vector<4x96xf32> to vector<4x64xf32>
    %675 = vector.extract_strided_slice %673 {offsets = [0, 0], sizes = [4, 64], strides = [1, 1]} : vector<4x96xf32> to vector<4x64xf32>
    %676 = arith.addf %674, %675 : vector<4x64xf32>
    %677 = arith.negf %676 : vector<4x64xf32>
    %678 = math.exp %677 : vector<4x64xf32>
    %cst_159 = arith.constant 1.000000e+00 : f32
    %679 = vector.broadcast %cst_159 : f32 to vector<4x64xf32>
    %680 = arith.addf %679, %678 : vector<4x64xf32>
    %681 = arith.divf %679, %680 : vector<4x64xf32>
    %682 = vector.extract_strided_slice %681 {offsets = [0, 0], sizes = [4, 32], strides = [1, 1]} : vector<4x64xf32> to vector<4x32xf32>
    %683 = vector.extract_strided_slice %681 {offsets = [0, 32], sizes = [4, 32], strides = [1, 1]} : vector<4x64xf32> to vector<4x32xf32>
    %684 = vector.extract_strided_slice %667 {offsets = [0, 64], sizes = [4, 32], strides = [1, 1]} : vector<4x96xf32> to vector<4x32xf32>
    %685 = vector.extract_strided_slice %673 {offsets = [0, 64], sizes = [4, 32], strides = [1, 1]} : vector<4x96xf32> to vector<4x32xf32>
    %686 = arith.addf %685, %416 : vector<4x32xf32>
    %687 = arith.mulf %682, %686 : vector<4x32xf32>
    %688 = arith.addf %684, %687 : vector<4x32xf32>
    %689 = math.tanh %688 : vector<4x32xf32>
    %690 = arith.subf %654, %689 : vector<4x32xf32>
    %691 = arith.mulf %683, %690 : vector<4x32xf32>
    %692 = arith.addf %689, %691 : vector<4x32xf32>
    %c5_i32_160 = arith.constant 5 : i32
    %c2_i32_161 = arith.constant 2 : i32
    %693 = vector.broadcast %c5_i32_160 : i32 to vector<4x1xi32>
    %694 = vector.broadcast %c2_i32_161 : i32 to vector<4x1xi32>
    %695 = arith.select %4, %693, %694 : vector<4x1xi1>, vector<4x1xi32>
    %696 = arith.cmpi slt, %695, %5 : vector<4x1xi32>
    %cst_162 = arith.constant 0.000000e+00 : f32
    %697 = vector.shape_cast %696 : vector<4x1xi1> to vector<4x1xi1>
    %698 = vector.broadcast %697 : vector<4x1xi1> to vector<4x32xi1>
    %699 = vector.broadcast %cst_162 : f32 to vector<4x32xf32>
    %700 = arith.select %698, %692, %699 : vector<4x32xi1>, vector<4x32xf32>
    %701 = vector.shape_cast %696 : vector<4x1xi1> to vector<4x1xi1>
    %702 = vector.broadcast %701 : vector<4x1xi1> to vector<4x32xi1>
    %703 = arith.select %702, %692, %654 : vector<4x32xi1>, vector<4x32xf32>
    %704 = vector.extract_strided_slice %700 {offsets = [0, 0], sizes = [2, 32], strides = [1, 1]} : vector<4x32xf32> to vector<2x32xf32>
    %c0_163 = arith.constant 0 : index
    %c5_164 = arith.constant 5 : index
    %c0_165 = arith.constant 0 : index
    %705 = vector.load %arg11[%c0_163, %c5_164, %c0_165] : memref<2x8x128xf32, #tpu.memory_space<vmem>>, vector<2x1x32xf32>
    %706 = vector.shape_cast %705 : vector<2x1x32xf32> to vector<2x32xf32>
    %707 = vector.shape_cast %704 : vector<2x32xf32> to vector<2x1x32xf32>
    tpu.vector_store %arg11[%c0_163, %c5_164, %c0_165], %707 {strides = array<i32>} : memref<2x8x128xf32, #tpu.memory_space<vmem>>, vector<2x1x32xf32>,
    %708 = vector.extract_strided_slice %700 {offsets = [2, 0], sizes = [2, 32], strides = [1, 1]} : vector<4x32xf32> to vector<2x32xf32>
    %c0_166 = arith.constant 0 : index
    %c2_167 = arith.constant 2 : index
    %c32_168 = arith.constant 32 : index
    %709 = vector.load %arg11[%c0_166, %c2_167, %c32_168] : memref<2x8x128xf32, #tpu.memory_space<vmem>>, vector<2x1x32xf32>
    %710 = vector.shape_cast %709 : vector<2x1x32xf32> to vector<2x32xf32>
    %711 = vector.shape_cast %708 : vector<2x32xf32> to vector<2x1x32xf32>
    tpu.vector_store %arg11[%c0_166, %c2_167, %c32_168], %711 {strides = array<i32>} : memref<2x8x128xf32, #tpu.memory_space<vmem>>, vector<2x1x32xf32>,
    %712 = vector.extract_strided_slice %414 {offsets = [0, 6, 0], sizes = [2, 1, 96], strides = [1, 1, 1]} : vector<2x8x192xf32> to vector<2x1x96xf32>
    %713 = vector.shape_cast %712 : vector<2x1x96xf32> to vector<2x96xf32>
    %714 = vector.extract_strided_slice %414 {offsets = [0, 1, 96], sizes = [2, 1, 96], strides = [1, 1, 1]} : vector<2x8x192xf32> to vector<2x1x96xf32>
    %715 = vector.shape_cast %714 : vector<2x1x96xf32> to vector<2x96xf32>
    %716 = tpu.concatenate %713, %715 in 0 : vector<2x96xf32>, vector<2x96xf32> -> vector<4x96xf32>
    %cst_169 = arith.constant dense<0.000000e+00> : vector<4x192xf32>
    %717 = tpu.matmul %703, %415, %cst_169 {dimension_numbers = #tpu.dot_dimension_numbers<[1], [0], [0], [1], [0, 0, 1, 1], [], []>} : vector<4x32xf32>, vector<32x192xf32>, vector<4x192xf32> -> vector<4x192xf32>
    %718 = vector.extract_strided_slice %717 {offsets = [0, 0], sizes = [4, 96], strides = [1, 1]} : vector<4x192xf32> to vector<4x96xf32>
    %719 = vector.extract_strided_slice %717 {offsets = [0, 96], sizes = [4, 96], strides = [1, 1]} : vector<4x192xf32> to vector<4x96xf32>
    %720 = vector.shape_cast %4 : vector<4x1xi1> to vector<4x1xi1>
    %721 = vector.broadcast %720 : vector<4x1xi1> to vector<4x96xi1>
    %722 = arith.select %721, %718, %719 : vector<4x96xi1>, vector<4x96xf32>
    %723 = vector.extract_strided_slice %716 {offsets = [0, 0], sizes = [4, 64], strides = [1, 1]} : vector<4x96xf32> to vector<4x64xf32>
    %724 = vector.extract_strided_slice %722 {offsets = [0, 0], sizes = [4, 64], strides = [1, 1]} : vector<4x96xf32> to vector<4x64xf32>
    %725 = arith.addf %723, %724 : vector<4x64xf32>
    %726 = arith.negf %725 : vector<4x64xf32>
    %727 = math.exp %726 : vector<4x64xf32>
    %cst_170 = arith.constant 1.000000e+00 : f32
    %728 = vector.broadcast %cst_170 : f32 to vector<4x64xf32>
    %729 = arith.addf %728, %727 : vector<4x64xf32>
    %730 = arith.divf %728, %729 : vector<4x64xf32>
    %731 = vector.extract_strided_slice %730 {offsets = [0, 0], sizes = [4, 32], strides = [1, 1]} : vector<4x64xf32> to vector<4x32xf32>
    %732 = vector.extract_strided_slice %730 {offsets = [0, 32], sizes = [4, 32], strides = [1, 1]} : vector<4x64xf32> to vector<4x32xf32>
    %733 = vector.extract_strided_slice %716 {offsets = [0, 64], sizes = [4, 32], strides = [1, 1]} : vector<4x96xf32> to vector<4x32xf32>
    %734 = vector.extract_strided_slice %722 {offsets = [0, 64], sizes = [4, 32], strides = [1, 1]} : vector<4x96xf32> to vector<4x32xf32>
    %735 = arith.addf %734, %416 : vector<4x32xf32>
    %736 = arith.mulf %731, %735 : vector<4x32xf32>
    %737 = arith.addf %733, %736 : vector<4x32xf32>
    %738 = math.tanh %737 : vector<4x32xf32>
    %739 = arith.subf %703, %738 : vector<4x32xf32>
    %740 = arith.mulf %732, %739 : vector<4x32xf32>
    %741 = arith.addf %738, %740 : vector<4x32xf32>
    %c6_i32_171 = arith.constant 6 : i32
    %c1_i32_172 = arith.constant 1 : i32
    %742 = vector.broadcast %c6_i32_171 : i32 to vector<4x1xi32>
    %743 = vector.broadcast %c1_i32_172 : i32 to vector<4x1xi32>
    %744 = arith.select %4, %742, %743 : vector<4x1xi1>, vector<4x1xi32>
    %745 = arith.cmpi slt, %744, %5 : vector<4x1xi32>
    %cst_173 = arith.constant 0.000000e+00 : f32
    %746 = vector.shape_cast %745 : vector<4x1xi1> to vector<4x1xi1>
    %747 = vector.broadcast %746 : vector<4x1xi1> to vector<4x32xi1>
    %748 = vector.broadcast %cst_173 : f32 to vector<4x32xf32>
    %749 = arith.select %747, %741, %748 : vector<4x32xi1>, vector<4x32xf32>
    %750 = vector.shape_cast %745 : vector<4x1xi1> to vector<4x1xi1>
    %751 = vector.broadcast %750 : vector<4x1xi1> to vector<4x32xi1>
    %752 = arith.select %751, %741, %703 : vector<4x32xi1>, vector<4x32xf32>
    %753 = vector.extract_strided_slice %749 {offsets = [0, 0], sizes = [2, 32], strides = [1, 1]} : vector<4x32xf32> to vector<2x32xf32>
    %c0_174 = arith.constant 0 : index
    %c6_175 = arith.constant 6 : index
    %c0_176 = arith.constant 0 : index
    %754 = vector.load %arg11[%c0_174, %c6_175, %c0_176] : memref<2x8x128xf32, #tpu.memory_space<vmem>>, vector<2x1x32xf32>
    %755 = vector.shape_cast %754 : vector<2x1x32xf32> to vector<2x32xf32>
    %756 = vector.shape_cast %753 : vector<2x32xf32> to vector<2x1x32xf32>
    tpu.vector_store %arg11[%c0_174, %c6_175, %c0_176], %756 {strides = array<i32>} : memref<2x8x128xf32, #tpu.memory_space<vmem>>, vector<2x1x32xf32>,
    %757 = vector.extract_strided_slice %749 {offsets = [2, 0], sizes = [2, 32], strides = [1, 1]} : vector<4x32xf32> to vector<2x32xf32>
    %c0_177 = arith.constant 0 : index
    %c1_178 = arith.constant 1 : index
    %c32_179 = arith.constant 32 : index
    %758 = vector.load %arg11[%c0_177, %c1_178, %c32_179] : memref<2x8x128xf32, #tpu.memory_space<vmem>>, vector<2x1x32xf32>
    %759 = vector.shape_cast %758 : vector<2x1x32xf32> to vector<2x32xf32>
    %760 = vector.shape_cast %757 : vector<2x32xf32> to vector<2x1x32xf32>
    tpu.vector_store %arg11[%c0_177, %c1_178, %c32_179], %760 {strides = array<i32>} : memref<2x8x128xf32, #tpu.memory_space<vmem>>, vector<2x1x32xf32>,
    %761 = vector.extract_strided_slice %414 {offsets = [0, 7, 0], sizes = [2, 1, 96], strides = [1, 1, 1]} : vector<2x8x192xf32> to vector<2x1x96xf32>
    %762 = vector.shape_cast %761 : vector<2x1x96xf32> to vector<2x96xf32>
    %763 = vector.extract_strided_slice %414 {offsets = [0, 0, 96], sizes = [2, 1, 96], strides = [1, 1, 1]} : vector<2x8x192xf32> to vector<2x1x96xf32>
    %764 = vector.shape_cast %763 : vector<2x1x96xf32> to vector<2x96xf32>
    %765 = tpu.concatenate %762, %764 in 0 : vector<2x96xf32>, vector<2x96xf32> -> vector<4x96xf32>
    %cst_180 = arith.constant dense<0.000000e+00> : vector<4x192xf32>
    %766 = tpu.matmul %752, %415, %cst_180 {dimension_numbers = #tpu.dot_dimension_numbers<[1], [0], [0], [1], [0, 0, 1, 1], [], []>} : vector<4x32xf32>, vector<32x192xf32>, vector<4x192xf32> -> vector<4x192xf32>
    %767 = vector.extract_strided_slice %766 {offsets = [0, 0], sizes = [4, 96], strides = [1, 1]} : vector<4x192xf32> to vector<4x96xf32>
    %768 = vector.extract_strided_slice %766 {offsets = [0, 96], sizes = [4, 96], strides = [1, 1]} : vector<4x192xf32> to vector<4x96xf32>
    %769 = vector.shape_cast %4 : vector<4x1xi1> to vector<4x1xi1>
    %770 = vector.broadcast %769 : vector<4x1xi1> to vector<4x96xi1>
    %771 = arith.select %770, %767, %768 : vector<4x96xi1>, vector<4x96xf32>
    %772 = vector.extract_strided_slice %765 {offsets = [0, 0], sizes = [4, 64], strides = [1, 1]} : vector<4x96xf32> to vector<4x64xf32>
    %773 = vector.extract_strided_slice %771 {offsets = [0, 0], sizes = [4, 64], strides = [1, 1]} : vector<4x96xf32> to vector<4x64xf32>
    %774 = arith.addf %772, %773 : vector<4x64xf32>
    %775 = arith.negf %774 : vector<4x64xf32>
    %776 = math.exp %775 : vector<4x64xf32>
    %cst_181 = arith.constant 1.000000e+00 : f32
    %777 = vector.broadcast %cst_181 : f32 to vector<4x64xf32>
    %778 = arith.addf %777, %776 : vector<4x64xf32>
    %779 = arith.divf %777, %778 : vector<4x64xf32>
    %780 = vector.extract_strided_slice %779 {offsets = [0, 0], sizes = [4, 32], strides = [1, 1]} : vector<4x64xf32> to vector<4x32xf32>
    %781 = vector.extract_strided_slice %779 {offsets = [0, 32], sizes = [4, 32], strides = [1, 1]} : vector<4x64xf32> to vector<4x32xf32>
    %782 = vector.extract_strided_slice %765 {offsets = [0, 64], sizes = [4, 32], strides = [1, 1]} : vector<4x96xf32> to vector<4x32xf32>
    %783 = vector.extract_strided_slice %771 {offsets = [0, 64], sizes = [4, 32], strides = [1, 1]} : vector<4x96xf32> to vector<4x32xf32>
    %784 = arith.addf %783, %416 : vector<4x32xf32>
    %785 = arith.mulf %780, %784 : vector<4x32xf32>
    %786 = arith.addf %782, %785 : vector<4x32xf32>
    %787 = math.tanh %786 : vector<4x32xf32>
    %788 = arith.subf %752, %787 : vector<4x32xf32>
    %789 = arith.mulf %781, %788 : vector<4x32xf32>
    %790 = arith.addf %787, %789 : vector<4x32xf32>
    %c7_i32_182 = arith.constant 7 : i32
    %c0_i32_183 = arith.constant 0 : i32
    %791 = vector.broadcast %c7_i32_182 : i32 to vector<4x1xi32>
    %792 = vector.broadcast %c0_i32_183 : i32 to vector<4x1xi32>
    %793 = arith.select %4, %791, %792 : vector<4x1xi1>, vector<4x1xi32>
    %794 = arith.cmpi slt, %793, %5 : vector<4x1xi32>
    %cst_184 = arith.constant 0.000000e+00 : f32
    %795 = vector.shape_cast %794 : vector<4x1xi1> to vector<4x1xi1>
    %796 = vector.broadcast %795 : vector<4x1xi1> to vector<4x32xi1>
    %797 = vector.broadcast %cst_184 : f32 to vector<4x32xf32>
    %798 = arith.select %796, %790, %797 : vector<4x32xi1>, vector<4x32xf32>
    %799 = vector.extract_strided_slice %798 {offsets = [0, 0], sizes = [2, 32], strides = [1, 1]} : vector<4x32xf32> to vector<2x32xf32>
    %c0_185 = arith.constant 0 : index
    %c7_186 = arith.constant 7 : index
    %c0_187 = arith.constant 0 : index
    %800 = vector.load %arg11[%c0_185, %c7_186, %c0_187] : memref<2x8x128xf32, #tpu.memory_space<vmem>>, vector<2x1x32xf32>
    %801 = vector.shape_cast %800 : vector<2x1x32xf32> to vector<2x32xf32>
    %802 = vector.shape_cast %799 : vector<2x32xf32> to vector<2x1x32xf32>
    tpu.vector_store %arg11[%c0_185, %c7_186, %c0_187], %802 {strides = array<i32>} : memref<2x8x128xf32, #tpu.memory_space<vmem>>, vector<2x1x32xf32>,
    %803 = vector.extract_strided_slice %798 {offsets = [2, 0], sizes = [2, 32], strides = [1, 1]} : vector<4x32xf32> to vector<2x32xf32>
    %c0_188 = arith.constant 0 : index
    %c0_189 = arith.constant 0 : index
    %c32_190 = arith.constant 32 : index
    %804 = vector.load %arg11[%c0_188, %c0_189, %c32_190] : memref<2x8x128xf32, #tpu.memory_space<vmem>>, vector<2x1x32xf32>
    %805 = vector.shape_cast %804 : vector<2x1x32xf32> to vector<2x32xf32>
    %806 = vector.shape_cast %803 : vector<2x32xf32> to vector<2x1x32xf32>
    tpu.vector_store %arg11[%c0_188, %c0_189, %c32_190], %806 {strides = array<i32>} : memref<2x8x128xf32, #tpu.memory_space<vmem>>, vector<2x1x32xf32>,
    return
  }
  func.func @transform_0(%arg0: i32) -> (i32, i32, i32) {
    %c0_i32 = arith.constant 0 : i32
    %c0_i32_0 = arith.constant 0 : i32
    %c0_i32_1 = arith.constant 0 : i32
    return %arg0, %c0_i32, %c0_i32_0 : i32, i32, i32
  }
  func.func @transform_1(%arg0: i32) -> (i32, i32) {
    %c0_i32 = arith.constant 0 : i32
    %c0_i32_0 = arith.constant 0 : i32
    return %arg0, %c0_i32 : i32, i32
  }
  func.func @transform_2(%arg0: i32) -> (i32, i32) {
    %c0_i32 = arith.constant 0 : i32
    %c0_i32_0 = arith.constant 0 : i32
    %c0_i32_1 = arith.constant 0 : i32
    return %c0_i32, %c0_i32_0 : i32, i32
  }
  func.func @transform_3(%arg0: i32) -> (i32, i32) {
    %c0_i32 = arith.constant 0 : i32
    %c0_i32_0 = arith.constant 0 : i32
    %c0_i32_1 = arith.constant 0 : i32
    return %c0_i32, %c0_i32_0 : i32, i32
  }
  func.func @transform_4(%arg0: i32) -> (i32, i32) {
    %c0_i32 = arith.constant 0 : i32
    %c0_i32_0 = arith.constant 0 : i32
    %c0_i32_1 = arith.constant 0 : i32
    return %c0_i32, %c0_i32_0 : i32, i32
  }
  func.func @transform_5(%arg0: i32) -> (i32, i32) {
    %c0_i32 = arith.constant 0 : i32
    %c0_i32_0 = arith.constant 0 : i32
    %c0_i32_1 = arith.constant 0 : i32
    return %c0_i32, %c0_i32_0 : i32, i32
  }
  func.func @transform_6(%arg0: i32) -> (i32, i32) {
    %c0_i32 = arith.constant 0 : i32
    %c0_i32_0 = arith.constant 0 : i32
    %c0_i32_1 = arith.constant 0 : i32
    return %c0_i32, %c0_i32_0 : i32, i32
  }
  func.func @transform_7(%arg0: i32) -> (i32, i32) {
    %c0_i32 = arith.constant 0 : i32
    %c0_i32_0 = arith.constant 0 : i32
    %c0_i32_1 = arith.constant 0 : i32
    return %c0_i32, %c0_i32_0 : i32, i32
  }
  func.func @transform_8(%arg0: i32) -> (i32, i32) {
    %c0_i32 = arith.constant 0 : i32
    %c0_i32_0 = arith.constant 0 : i32
    %c0_i32_1 = arith.constant 0 : i32
    return %c0_i32, %c0_i32_0 : i32, i32
  }
  func.func @transform_9(%arg0: i32) -> (i32, i32) {
    %c0_i32 = arith.constant 0 : i32
    %c0_i32_0 = arith.constant 0 : i32
    %c0_i32_1 = arith.constant 0 : i32
    return %c0_i32, %c0_i32_0 : i32, i32
  }
  func.func @transform_10(%arg0: i32) -> (i32, i32, i32) {
    %c0_i32 = arith.constant 0 : i32
    %c0_i32_0 = arith.constant 0 : i32
    %c0_i32_1 = arith.constant 0 : i32
    return %arg0, %c0_i32, %c0_i32_0 : i32, i32, i32
  }
}

</mosaic_0001>

<llo_original>
// kernel: tpu_custom_call.1
$region0: #{tpu_custom_call.1}
  #allocation0 [shape = 'u32[]', space=smem, size = 0x4, offset = 0x4, fixed_abs, tag = 'smem constant byte address 0x4 - core index']
  #allocation1 [shape = 'u32[144,128]{1,0:T(1,128)}', space=vmem, size = 0x12000, scoped, tag = 'internal scratch']
  #allocation2 [shape = 'f32[2,8,64]{2,1,0:T(8,128)}', space=vmem, size = 0x2000, scoped, tag = 'scratch operand']
  %s0 = inlined_call_operand.hbm [shape: f32[2,8,16], index: 0, kind: input, shape index: {}]
  %s1 = inlined_call_operand.vmem [shape: s32[2,1], index: 1, kind: input, shape index: {}]
  %s2 = inlined_call_operand.hbm [shape: f32[16,192], index: 2, kind: input, shape index: {}]
  %s3 = inlined_call_operand.vmem [shape: f32[1,192], index: 3, kind: input, shape index: {}]
  %s4 = inlined_call_operand.hbm [shape: f32[32,192], index: 4, kind: input, shape index: {}]
  %s5 = inlined_call_operand.vmem [shape: f32[4,32], index: 5, kind: input, shape index: {}]
  %s6 = inlined_call_operand.hbm [shape: f32[64,192], index: 6, kind: input, shape index: {}]
  %s7 = inlined_call_operand.vmem [shape: f32[1,192], index: 7, kind: input, shape index: {}]
  %s8 = inlined_call_operand.hbm [shape: f32[32,192], index: 8, kind: input, shape index: {}]
  %s9 = inlined_call_operand.vmem [shape: f32[4,32], index: 9, kind: input, shape index: {}]
  %s10 = inlined_call_operand.hbm [shape: f32[2,8,128], index: 10, kind: output, shape index: {}]
  %s11 = sld [smem:[#allocation0]]
  $region70: #{tpu_custom_call.1} parent=0
    _
  %s13 = ssub.s32 1, %s11
  %s14 = scalar_select 0, %s13, %s11
  $region1: #{tpu_custom_call.1} parent=0
    #allocation3 [shape = 'u8[8192]{0}', space=vmem, size = 0x2000, scoped, tag = 'input window, operand 0, single buffered']
    #allocation4 [shape = 's32[1]{0}', space=sflag, size = 0x4, scoped, tag = 'scoped memory for tpu_custom_call.1']
    #allocation5 [shape = 's32[1]{0}', space=sflag, size = 0x4, scoped, tag = 'scoped memory for tpu_custom_call.1']
    #allocation6 [shape = 'u8[16384]{0}', space=vmem, size = 0x4000, scoped, tag = 'input window, operand 2, single buffered']
    #allocation7 [shape = 's32[1]{0}', space=sflag, size = 0x4, scoped, tag = 'scoped memory for tpu_custom_call.1']
    #allocation8 [shape = 'u8[32768]{0}', space=vmem, size = 0x8000, scoped, tag = 'input window, operand 4, single buffered']
    #allocation9 [shape = 'u8[65536]{0}', space=vmem, size = 0x10000, scoped, tag = 'input window, operand 6, single buffered']
    #allocation10 [shape = 's32[1]{0}', space=sflag, size = 0x4, scoped, tag = 'scoped memory for tpu_custom_call.1']
    #allocation11 [shape = 'u8[32768]{0}', space=vmem, size = 0x8000, scoped, tag = 'input window, operand 8, single buffered']
    #allocation12 [shape = 'u8[8192]{0}', space=vmem, size = 0x2000, scoped, tag = 'output window, operand 0, single buffered']
    %15 = vsyncpa [#allocation4], 0
    %16 = vsyncpa [#allocation7], 0
    %17 = vsyncpa [#allocation10], 0
    %18 = vsyncpa [#allocation5], 0
    // Predicated region
    $region2: #{tpu_custom_call.1} parent=1 // pred_check
      _
    $region3: #{tpu_custom_call.1} parent=1 // pred_check_branch
      %20 = sbr.rel (0) target = $region5
    $region4: #{tpu_custom_call.1} parent=1 // pred_region
      %s22 = ssub.s32 256, 256
      %23 = vsyncadd [#allocation4], %s22
      %s24 = sshll.u32 [#allocation3], 4
      %s25 = int_to_ptr.vmem [resolvable:$true] %s24
      %30 = dma.hbm_to_vmem [thread:$0]  %s0, 256, %s25, [#allocation4], 128, 128, 8
    $region5: #{tpu_custom_call.1} parent=1 // pred_fallthru
      _
    // Predicated region
    $region6: #{tpu_custom_call.1} parent=1 // pred_check
      _
    $region7: #{tpu_custom_call.1} parent=1 // pred_check_branch
      %32 = sbr.rel (0) target = $region9
    $region8: #{tpu_custom_call.1} parent=1 // pred_region
      _
    $region9: #{tpu_custom_call.1} parent=1 // pred_fallthru
      _
    // Predicated region
    $region10: #{tpu_custom_call.1} parent=1 // pred_check
      _
    $region11: #{tpu_custom_call.1} parent=1 // pred_check_branch
      %34 = sbr.rel (0) target = $region13
    $region12: #{tpu_custom_call.1} parent=1 // pred_region
      %s36 = ssub.s32 512, 512
      %37 = vsyncadd [#allocation7], %s36
      %s38 = sshll.u32 [#allocation6], 4
      %s39 = int_to_ptr.vmem [resolvable:$true] %s38
      %44 = dma.hbm_to_vmem [thread:$0]  %s2, 512, %s39, [#allocation7], 256, 256, 16
    $region13: #{tpu_custom_call.1} parent=1 // pred_fallthru
      _
    // Predicated region
    $region14: #{tpu_custom_call.1} parent=1 // pred_check
      _
    $region15: #{tpu_custom_call.1} parent=1 // pred_check_branch
      %46 = sbr.rel (0) target = $region17
    $region16: #{tpu_custom_call.1} parent=1 // pred_region
      _
    $region17: #{tpu_custom_call.1} parent=1 // pred_fallthru
      _
    // Predicated region
    $region18: #{tpu_custom_call.1} parent=1 // pred_check
      _
    $region19: #{tpu_custom_call.1} parent=1 // pred_check_branch
      %48 = sbr.rel (0) target = $region21
    $region20: #{tpu_custom_call.1} parent=1 // pred_region
      %s50 = ssub.s32 1024, 1024
      %51 = vsyncadd [#allocation7], %s50
      %s52 = sshll.u32 [#allocation8], 4
      %s53 = int_to_ptr.vmem [resolvable:$true] %s52
      %58 = dma.hbm_to_vmem [thread:$0]  %s4, 1024, %s53, [#allocation7], 256, 256, 16
    $region21: #{tpu_custom_call.1} parent=1 // pred_fallthru
      _
    // Predicated region
    $region22: #{tpu_custom_call.1} parent=1 // pred_check
      _
    $region23: #{tpu_custom_call.1} parent=1 // pred_check_branch
      %60 = sbr.rel (0) target = $region25
    $region24: #{tpu_custom_call.1} parent=1 // pred_region
      _
    $region25: #{tpu_custom_call.1} parent=1 // pred_fallthru
      _
    // Predicated region
    $region26: #{tpu_custom_call.1} parent=1 // pred_check
      _
    $region27: #{tpu_custom_call.1} parent=1 // pred_check_branch
      %62 = sbr.rel (0) target = $region29
    $region28: #{tpu_custom_call.1} parent=1 // pred_region
      %s64 = ssub.s32 2048, 2048
      %65 = vsyncadd [#allocation10], %s64
      %s66 = sshll.u32 [#allocation9], 4
      %s67 = int_to_ptr.vmem [resolvable:$true] %s66
      %72 = dma.hbm_to_vmem [thread:$0]  %s6, 2048, %s67, [#allocation10], 256, 256, 16
    $region29: #{tpu_custom_call.1} parent=1 // pred_fallthru
      _
    // Predicated region
    $region30: #{tpu_custom_call.1} parent=1 // pred_check
      _
    $region31: #{tpu_custom_call.1} parent=1 // pred_check_branch
      %74 = sbr.rel (0) target = $region33
    $region32: #{tpu_custom_call.1} parent=1 // pred_region
      _
    $region33: #{tpu_custom_call.1} parent=1 // pred_fallthru
      _
    // Predicated region
    $region34: #{tpu_custom_call.1} parent=1 // pred_check
      _
    $region35: #{tpu_custom_call.1} parent=1 // pred_check_branch
      %76 = sbr.rel (0) target = $region37
    $region36: #{tpu_custom_call.1} parent=1 // pred_region
      %s78 = ssub.s32 1024, 1024
      %79 = vsyncadd [#allocation10], %s78
      %s80 = sshll.u32 [#allocation11], 4
      %s81 = int_to_ptr.vmem [resolvable:$true] %s80
      %86 = dma.hbm_to_vmem [thread:$0]  %s8, 1024, %s81, [#allocation10], 256, 256, 16
    $region37: #{tpu_custom_call.1} parent=1 // pred_fallthru
      _
    // Predicated region
    $region38: #{tpu_custom_call.1} parent=1 // pred_check
      _
    $region39: #{tpu_custom_call.1} parent=1 // pred_check_branch
      %88 = sbr.rel (0) target = $region41
    $region40: #{tpu_custom_call.1} parent=1 // pred_region
      _
    $region41: #{tpu_custom_call.1} parent=1 // pred_fallthru
      _
    // Predicated region
    $region42: #{tpu_custom_call.1} parent=1 // pred_check
      _
    $region43: #{tpu_custom_call.1} parent=1 // pred_check_branch
      %90 = sbr.rel (0) target = $region45
    $region44: #{tpu_custom_call.1} parent=1 // pred_region
      %91 = dma.done [#allocation4], 256
    $region45: #{tpu_custom_call.1} parent=1 // pred_fallthru
      _
    // Predicated region
    $region46: #{tpu_custom_call.1} parent=1 // pred_check
      _
    $region47: #{tpu_custom_call.1} parent=1 // pred_check_branch
      %93 = sbr.rel (0) target = $region49
    $region48: #{tpu_custom_call.1} parent=1 // pred_region
      %94 = dma.done [#allocation7], 512
    $region49: #{tpu_custom_call.1} parent=1 // pred_fallthru
      _
    // Predicated region
    $region50: #{tpu_custom_call.1} parent=1 // pred_check
      _
    $region51: #{tpu_custom_call.1} parent=1 // pred_check_branch
      %96 = sbr.rel (0) target = $region53
    $region52: #{tpu_custom_call.1} parent=1 // pred_region
      %97 = dma.done [#allocation7], 1024
    $region53: #{tpu_custom_call.1} parent=1 // pred_fallthru
      _
    // Predicated region
    $region54: #{tpu_custom_call.1} parent=1 // pred_check
      _
    $region55: #{tpu_custom_call.1} parent=1 // pred_check_branch
      %99 = sbr.rel (0) target = $region57
    $region56: #{tpu_custom_call.1} parent=1 // pred_region
      %100 = dma.done [#allocation10], 2048
    $region57: #{tpu_custom_call.1} parent=1 // pred_fallthru
      _
    // Predicated region
    $region58: #{tpu_custom_call.1} parent=1 // pred_check
      _
    $region59: #{tpu_custom_call.1} parent=1 // pred_check_branch
      %102 = sbr.rel (0) target = $region61
    $region60: #{tpu_custom_call.1} parent=1 // pred_region
      %103 = dma.done [#allocation10], 1024
    $region61: #{tpu_custom_call.1} parent=1 // pred_fallthru
      _
    %v104 = vld [vmem:[#allocation3] sm:$0xff]
    %v105 = vld [vmem:[#allocation3 + $0x8] sm:$0xff]
    %v106 = vld [vmem:[%s1] sm:$0x3]
    %v107 = vlaneseq
    %v108 = vshrl.u32 %v107, 7
    %vm109 = vcmp.lt.s32.totalorder %v108, 2
    %v110 = vrot.slane %v106, 6
    %vm111 = vcmask 1041408
    %v112 = vsel %vm111, %v106, %v110
    %113 = vst [vmem:[#allocation12] sm:$0xff] 0.0
    %114 = vst [vmem:[#allocation12 + $0x8] sm:$0xff] 0.0
    %v115 = vld [vmem:[#allocation6] sm:$0xff]
    %v116 = vld [vmem:[#allocation6 + $0x8] sm:$0xff]
    %v117 = vld [vmem:[#allocation6 + $0x10] sm:$0xff]
    %v118 = vld [vmem:[#allocation6 + $0x18] sm:$0xff]
    %v119 = vld [vmem:[%s3] sm:$0x3]
    %v121 = vlaneseq
    %v122 = vshrl.u32 %v121, 7
    %v123 = vsub.s32 0, %v122
    %v124 = vrot.slane %v119, %v123
    %v125 = vlaneseq
    %v126 = vshrl.u32 %v125, 7
    %v127 = vsub.s32 1, %v126
    %v128 = vrot.slane %v119, %v127
    %vm131 = vcmask 130048
    %v133 = vsel %vm131, %v104, 0
    %v136 = vsel %vm131, %v105, 0
    %138 = vmatprep.subr.mxu0 %v116
    %139 = vmatpush1.msra.mxu0 %v115
    %140 = vmatprep.subr.mxu0 %v118
    %141 = vmatpush1.msra.mxu0 %v117
    %142 = vmatprep.subr.mxu0 0.0
    %143 = vmatpush1.msra.mxu0 0.0
    %144 = vmatprep.subr.mxu0 0.0
    %145 = vmatpush1.msra.mxu0 0.0
    %146 = vmatprep.subr.mxu0 0.0
    %147 = vmatpush1.msra.mxu0 0.0
    %148 = vmatprep.subr.mxu0 0.0
    %149 = vmatpush1.msra.mxu0 0.0
    %150 = vmatprep.subr.mxu0 0.0
    %151 = vmatpush1.msra.mxu0 0.0
    %152 = vmatprep.subr.mxu0 0.0
    %153 = vmatpush1.msra.mxu0 0.0
    %154 = vmatprep.subr.mxu0 0.0
    %155 = vmatpush1.msra.mxu0 0.0
    %156 = vmatprep.subr.mxu0 0.0
    %157 = vmatpush1.msra.mxu0 0.0
    %158 = vmatprep.subr.mxu0 0.0
    %159 = vmatpush1.msra.mxu0 0.0
    %160 = vmatprep.subr.mxu0 0.0
    %161 = vmatpush1.msra.mxu0 0.0
    %162 = vmatprep.subr.mxu0 0.0
    %163 = vmatpush1.msra.mxu0 0.0
    %164 = vmatprep.subr.mxu0 0.0
    %165 = vmatpush1.msra.mxu0 0.0
    %166 = vmatprep.subr.mxu0 0.0
    %167 = vmatpush1.msra.mxu0 0.0
    %168 = vmatprep.subr.mxu0 0.0
    %169 = vmatpush1.msra.mxu0 0.0
    %170 = vmatprep.subr.mxu0 0.0
    %171 = vmatpush1.msra.mxu0 0.0
    %172 = vmatprep.subr.mxu0 0.0
    %173 = vmatpush1.msra.mxu0 0.0
    %174 = vmatprep.subr.mxu0 0.0
    %175 = vmatpush1.msra.mxu0 0.0
    %176 = vmatprep.subr.mxu0 0.0
    %177 = vmatpush1.msra.mxu0 0.0
    %178 = vmatprep.subr.mxu0 0.0
    %179 = vmatpush1.msra.mxu0 0.0
    %180 = vmatprep.subr.mxu0 0.0
    %181 = vmatpush1.msra.mxu0 0.0
    %182 = vmatprep.subr.mxu0 0.0
    %183 = vmatpush1.msra.mxu0 0.0
    %184 = vmatprep.subr.mxu0 0.0
    %185 = vmatpush1.msra.mxu0 0.0
    %186 = vmatprep.subr.mxu0 0.0
    %187 = vmatpush1.msra.mxu0 0.0
    %188 = vmatprep.subr.mxu0 0.0
    %189 = vmatpush1.msra.mxu0 0.0
    %190 = vmatprep.subr.mxu0 0.0
    %191 = vmatpush1.msra.mxu0 0.0
    %192 = vmatprep.subr.mxu0 0.0
    %193 = vmatpush1.msra.mxu0 0.0
    %194 = vmatprep.subr.mxu0 0.0
    %195 = vmatpush1.msra.mxu0 0.0
    %196 = vmatprep.subr.mxu0 0.0
    %197 = vmatpush1.msra.mxu0 0.0
    %198 = vmatprep.subr.mxu0 0.0
    %199 = vmatpush1.msra.mxu0 0.0
    %200 = vmatprep.subr.mxu0 0.0
    %201 = vmatpush1.msra.mxu0 0.0
    %202 = vmatprep.mubr.f32.mxu0 0.0
    %203 = vmatmul.mubr.f32.gmra.mrb[0].mxu0 %v133
    %v204 = vpop.f32.mrb[0].mxu0
    %v205 = vadd.f32 %v124, %v204
    %v206 = vpop.f32.mrb[0].mxu0
    %v207 = vadd.f32 %v128, %v206
    %208 = vmatprep.mubr.f32.mxu0 0.0
    %209 = vmatmul.mubr.f32.gmra.mrb[0].mxu0 %v136
    %v210 = vpop.f32.mrb[0].mxu0
    %v211 = vadd.f32 %v124, %v210
    %v212 = vpop.f32.mrb[0].mxu0
    %v213 = vadd.f32 %v128, %v212
    %214 = vdwg.mxu0
    %v215 = vld [vmem:[#allocation8] sm:$0xff]
    %v216 = vld [vmem:[#allocation8 + $0x8] sm:$0xff]
    %v217 = vld [vmem:[#allocation8 + $0x10] sm:$0xff]
    %v218 = vld [vmem:[#allocation8 + $0x18] sm:$0xff]
    %v219 = vld [vmem:[#allocation8 + $0x20] sm:$0xff]
    %v220 = vld [vmem:[#allocation8 + $0x28] sm:$0xff]
    %v221 = vld [vmem:[#allocation8 + $0x30] sm:$0xff]
    %v222 = vld [vmem:[#allocation8 + $0x38] sm:$0xff]
    %v223 = vld [vmem:[%s5] sm:$0xf]
    %v226 = vrot.slane %v211, 7
    %vm227 = vcmask 1041409
    %v228 = vsel %vm227, %v226, %v205
    %v232 = vrot.slane %v205, 5
    %v233 = vrot.slane %v211, 4
    %vm234 = vcmask 1043459
    %v235 = vsel %vm234, %v233, %v232
    %v236 = vrot.slane %v207, 5
    %v237 = vrot.slane %v213, 4
    %v238 = vsel %vm234, %v237, %v236
    %239 = vrot.lane.b32.xlu0 %v235, 32
    %v240 = vpop.permute.xlu0 %239
    %241 = vrot.lane.b32.xlu0 %v238, 32
    %v242 = vpop.permute.xlu0 %241
    %vm243 = vcmask 261120
    %v244 = vsel %vm243, %v240, %v242
    %v246 = vsel %vm111, %v228, %v244
    %v248 = vsel %vm243, 0.0, 0
    %250 = vmatprep.subr.mxu0 %v216
    %251 = vmatpush1.msra.mxu0 %v215
    %252 = vmatprep.subr.mxu0 %v218
    %253 = vmatpush1.msra.mxu0 %v217
    %254 = vmatprep.subr.mxu0 %v220
    %255 = vmatpush1.msra.mxu0 %v219
    %256 = vmatprep.subr.mxu0 %v222
    %257 = vmatpush1.msra.mxu0 %v221
    %258 = vmatprep.subr.mxu0 0.0
    %259 = vmatpush1.msra.mxu0 0.0
    %260 = vmatprep.subr.mxu0 0.0
    %261 = vmatpush1.msra.mxu0 0.0
    %262 = vmatprep.subr.mxu0 0.0
    %263 = vmatpush1.msra.mxu0 0.0
    %264 = vmatprep.subr.mxu0 0.0
    %265 = vmatpush1.msra.mxu0 0.0
    %266 = vmatprep.subr.mxu0 0.0
    %267 = vmatpush1.msra.mxu0 0.0
    %268 = vmatprep.subr.mxu0 0.0
    %269 = vmatpush1.msra.mxu0 0.0
    %270 = vmatprep.subr.mxu0 0.0
    %271 = vmatpush1.msra.mxu0 0.0
    %272 = vmatprep.subr.mxu0 0.0
    %273 = vmatpush1.msra.mxu0 0.0
    %274 = vmatprep.subr.mxu0 0.0
    %275 = vmatpush1.msra.mxu0 0.0
    %276 = vmatprep.subr.mxu0 0.0
    %277 = vmatpush1.msra.mxu0 0.0
    %278 = vmatprep.subr.mxu0 0.0
    %279 = vmatpush1.msra.mxu0 0.0
    %280 = vmatprep.subr.mxu0 0.0
    %281 = vmatpush1.msra.mxu0 0.0
    %282 = vmatprep.subr.mxu0 0.0
    %283 = vmatpush1.msra.mxu0 0.0
    %284 = vmatprep.subr.mxu0 0.0
    %285 = vmatpush1.msra.mxu0 0.0
    %286 = vmatprep.subr.mxu0 0.0
    %287 = vmatpush1.msra.mxu0 0.0
    %288 = vmatprep.subr.mxu0 0.0
    %289 = vmatpush1.msra.mxu0 0.0
    %290 = vmatprep.subr.mxu0 0.0
    %291 = vmatpush1.msra.mxu0 0.0
    %292 = vmatprep.subr.mxu0 0.0
    %293 = vmatpush1.msra.mxu0 0.0
    %294 = vmatprep.subr.mxu0 0.0
    %295 = vmatpush1.msra.mxu0 0.0
    %296 = vmatprep.subr.mxu0 0.0
    %297 = vmatpush1.msra.mxu0 0.0
    %298 = vmatprep.subr.mxu0 0.0
    %299 = vmatpush1.msra.mxu0 0.0
    %300 = vmatprep.subr.mxu0 0.0
    %301 = vmatpush1.msra.mxu0 0.0
    %302 = vmatprep.subr.mxu0 0.0
    %303 = vmatpush1.msra.mxu0 0.0
    %304 = vmatprep.subr.mxu0 0.0
    %305 = vmatpush1.msra.mxu0 0.0
    %306 = vmatprep.subr.mxu0 0.0
    %307 = vmatpush1.msra.mxu0 0.0
    %308 = vmatprep.subr.mxu0 0.0
    %309 = vmatpush1.msra.mxu0 0.0
    %310 = vmatprep.subr.mxu0 0.0
    %311 = vmatpush1.msra.mxu0 0.0
    %312 = vmatprep.subr.mxu0 0.0
    %313 = vmatpush1.msra.mxu0 0.0
    %314 = vmatprep.mubr.f32.mxu0 0.0
    %315 = vmatmul.mubr.f32.gmra.mrb[0].mxu0 %v248
    %v316 = vpop.f32.mrb[0].mxu0
    %v317 = vadd.f32 0.0, %v316
    %v318 = vpop.f32.mrb[0].mxu0
    %v319 = vadd.f32 0.0, %v318
    %320 = vdwg.mxu0
    %v321 = vsel %vm109, 1, 0
    %vm322 = vcmp.eq.s32.totalorder %v321, 1
    %325 = vrot.lane.b32.xlu0 %v317, 32
    %v326 = vpop.permute.xlu0 %325
    %327 = vrot.lane.b32.xlu0 %v319, 32
    %v328 = vpop.permute.xlu0 %327
    %v329 = vsel %vm243, %v326, %v328
    %v331 = vsel %vm322, %v317, %v329
    %v332 = vadd.f32 %v246, %v331
    %v333 = vxor.u32 %v332, 2147483648
    %v334 = vmul.f32 %v333, 1.442695
    %v335 = vpow.pop %v334
    %v336 = vadd.f32 %v335, 1.0
    %v337 = vrcp.pop %v336
    %v338 = vmul.f32 1.0, %v337
    %340 = vrot.lane.b32.xlu0 %v223, 64
    %v341 = vpop.permute.xlu0 %340
    %v343 = vadd.f32 %v331, %v341
    %345 = vrot.lane.b32.xlu0 %v343, 64
    %v346 = vpop.permute.xlu0 %345
    %v348 = vmul.f32 %v338, %v346
    %350 = vrot.lane.b32.xlu0 %v348, 64
    %v351 = vpop.permute.xlu0 %350
    %v353 = vadd.f32 %v246, %v351
    %v354 = vtanh.pop %v353
    %v355 = vsub.f32 0.0, %v354
    %357 = vrot.lane.b32.xlu0 %v355, 96
    %v358 = vpop.permute.xlu0 %357
    %v360 = vmul.f32 %v338, %v358
    %362 = vrot.lane.b32.xlu0 %v360, 32
    %v363 = vpop.permute.xlu0 %362
    %v365 = vadd.f32 %v354, %v363
    %v366 = vsel %vm109, 0, 7
    %vm367 = vcmp.lt.s32.totalorder %v366, %v112
    %v368 = vsel %vm367, 1, 0
    %369 = vset.pattern.permute.xlu0 0
    %370 = vperm.xlu0 %369, %v368
    %v371 = vpop.permute.xlu0 %370
    %vm372 = vcmp.eq.s32.totalorder %v371, 1
    %v373 = vsel %vm372, %v365, 0.0
    %v376 = vunpack.c.l.s4 1966171168
    %v377 = vunpack.c.0.s8 %v376
    %v378 = vlaneseq
    %v379 = vshrl.u32 %v378, 7
    %v380 = vsub.s32 %v377, %v379
    %v381 = vrot.slane %v373, %v380
    %v382 = vcombine.high %v381, %v381
    %v384 = vunpack.c.l.s4 1966171168
    %v385 = vunpack.c.0.s8 %v384
    %v386 = vlaneseq
    %v387 = vshrl.u32 %v386, 7
    %v388 = vsub.s32 %v385, %v387
    %v389 = vrot.slane %v381, %v388
    %v391 = vunpack.c.l.s4 1966171168
    %v392 = vunpack.c.0.s8 %v391
    %v393 = vlaneseq
    %v394 = vshrl.u32 %v393, 7
    %v395 = vsub.s32 %v392, %v394
    %v396 = vrot.slane %v382, %v395
    %v397 = vlaneseq
    %v398 = vshrl.u32 %v397, 7
    %v399 = vsub.s32 0, %v398
    %v400 = vrot.slane %v389, %v399
    %v401 = vlaneseq
    %v402 = vshrl.u32 %v401, 7
    %v403 = vsub.s32 0, %v402
    %v404 = vrot.slane %v396, %v403
    %405 = vrot.lane.b32.xlu0 %v400, 64
    %v406 = vpop.permute.xlu0 %405
    %407 = vrot.lane.b32.xlu0 %v404, 64
    %v408 = vpop.permute.xlu0 %407
    %vm411 = vcmask 253952
    %412 = vst.msk [vmem:[#allocation2] sm:$0x1] %vm411, %v406
    %413 = vst.msk [vmem:[#allocation2 + $0x8] sm:$0x1] %vm411, %v408
    %v414 = vcombine.high %v389, %v389
    %v415 = vcombine.high %v396, %v396
    %v416 = vlaneseq
    %v417 = vshrl.u32 %v416, 7
    %v418 = vsub.s32 0, %v417
    %v419 = vrot.slane %v414, %v418
    %v420 = vlaneseq
    %v421 = vshrl.u32 %v420, 7
    %v422 = vsub.s32 0, %v421
    %v423 = vrot.slane %v415, %v422
    %424 = vrot.lane.b32.xlu0 %v419, 96
    %v425 = vpop.permute.xlu0 %424
    %426 = vrot.lane.b32.xlu0 %v423, 96
    %v427 = vpop.permute.xlu0 %426
    %vm430 = vcmask 516352
    %431 = vst.msk [vmem:[#allocation2 + $0x7] sm:$0x1] %vm430, %v425
    %432 = vst.msk [vmem:[#allocation2 + $0xf] sm:$0x1] %vm430, %v427
    %v433 = vrot.slane %v205, 1
    %v434 = vsel %vm227, %v211, %v433
    %v436 = vrot.slane %v205, 4
    %v437 = vrot.slane %v211, 3
    %v438 = vsel %vm234, %v437, %v436
    %v439 = vrot.slane %v207, 4
    %v440 = vrot.slane %v213, 3
    %v441 = vsel %vm234, %v440, %v439
    %442 = vrot.lane.b32.xlu0 %v438, 32
    %v443 = vpop.permute.xlu0 %442
    %444 = vrot.lane.b32.xlu0 %v441, 32
    %v445 = vpop.permute.xlu0 %444
    %v446 = vsel %vm243, %v443, %v445
    %v448 = vsel %vm111, %v434, %v446
    %449 = vrot.lane.b32.xlu0 %v373, 64
    %v450 = vpop.permute.xlu0 %449
    %v451 = vsel %vm243, %v450, 0
    %453 = vmatprep.subr.mxu0 %v216
    %454 = vmatpush1.msra.mxu0 %v215
    %455 = vmatprep.subr.mxu0 %v218
    %456 = vmatpush1.msra.mxu0 %v217
    %457 = vmatprep.subr.mxu0 %v220
    %458 = vmatpush1.msra.mxu0 %v219
    %459 = vmatprep.subr.mxu0 %v222
    %460 = vmatpush1.msra.mxu0 %v221
    %461 = vmatprep.subr.mxu0 0.0
    %462 = vmatpush1.msra.mxu0 0.0
    %463 = vmatprep.subr.mxu0 0.0
    %464 = vmatpush1.msra.mxu0 0.0
    %465 = vmatprep.subr.mxu0 0.0
    %466 = vmatpush1.msra.mxu0 0.0
    %467 = vmatprep.subr.mxu0 0.0
    %468 = vmatpush1.msra.mxu0 0.0
    %469 = vmatprep.subr.mxu0 0.0
    %470 = vmatpush1.msra.mxu0 0.0
    %471 = vmatprep.subr.mxu0 0.0
    %472 = vmatpush1.msra.mxu0 0.0
    %473 = vmatprep.subr.mxu0 0.0
    %474 = vmatpush1.msra.mxu0 0.0
    %475 = vmatprep.subr.mxu0 0.0
    %476 = vmatpush1.msra.mxu0 0.0
    %477 = vmatprep.subr.mxu0 0.0
    %478 = vmatpush1.msra.mxu0 0.0
    %479 = vmatprep.subr.mxu0 0.0
    %480 = vmatpush1.msra.mxu0 0.0
    %481 = vmatprep.subr.mxu0 0.0
    %482 = vmatpush1.msra.mxu0 0.0
    %483 = vmatprep.subr.mxu0 0.0
    %484 = vmatpush1.msra.mxu0 0.0
    %485 = vmatprep.subr.mxu0 0.0
    %486 = vmatpush1.msra.mxu0 0.0
    %487 = vmatprep.subr.mxu0 0.0
    %488 = vmatpush1.msra.mxu0 0.0
    %489 = vmatprep.subr.mxu0 0.0
    %490 = vmatpush1.msra.mxu0 0.0
    %491 = vmatprep.subr.mxu0 0.0
    %492 = vmatpush1.msra.mxu0 0.0
    %493 = vmatprep.subr.mxu0 0.0
    %494 = vmatpush1.msra.mxu0 0.0
    %495 = vmatprep.subr.mxu0 0.0
    %496 = vmatpush1.msra.mxu0 0.0
    %497 = vmatprep.subr.mxu0 0.0
    %498 = vmatpush1.msra.mxu0 0.0
    %499 = vmatprep.subr.mxu0 0.0
    %500 = vmatpush1.msra.mxu0 0.0
    %501 = vmatprep.subr.mxu0 0.0
    %502 = vmatpush1.msra.mxu0 0.0
    %503 = vmatprep.subr.mxu0 0.0
    %504 = vmatpush1.msra.mxu0 0.0
    %505 = vmatprep.subr.mxu0 0.0
    %506 = vmatpush1.msra.mxu0 0.0
    %507 = vmatprep.subr.mxu0 0.0
    %508 = vmatpush1.msra.mxu0 0.0
    %509 = vmatprep.subr.mxu0 0.0
    %510 = vmatpush1.msra.mxu0 0.0
    %511 = vmatprep.subr.mxu0 0.0
    %512 = vmatpush1.msra.mxu0 0.0
    %513 = vmatprep.subr.mxu0 0.0
    %514 = vmatpush1.msra.mxu0 0.0
    %515 = vmatprep.subr.mxu0 0.0
    %516 = vmatpush1.msra.mxu0 0.0
    %517 = vmatprep.mubr.f32.mxu0 0.0
    %518 = vmatmul.mubr.f32.gmra.mrb[0].mxu0 %v451
    %v519 = vpop.f32.mrb[0].mxu0
    %v520 = vadd.f32 0.0, %v519
    %v521 = vpop.f32.mrb[0].mxu0
    %v522 = vadd.f32 0.0, %v521
    %523 = vdwg.mxu0
    %526 = vrot.lane.b32.xlu0 %v520, 32
    %v527 = vpop.permute.xlu0 %526
    %528 = vrot.lane.b32.xlu0 %v522, 32
    %v529 = vpop.permute.xlu0 %528
    %v530 = vsel %vm243, %v527, %v529
    %v532 = vsel %vm322, %v520, %v530
    %v533 = vadd.f32 %v448, %v532
    %v534 = vxor.u32 %v533, 2147483648
    %v535 = vmul.f32 %v534, 1.442695
    %v536 = vpow.pop %v535
    %v537 = vadd.f32 %v536, 1.0
    %v538 = vrcp.pop %v537
    %v539 = vmul.f32 1.0, %v538
    %v540 = vadd.f32 %v532, %v341
    %542 = vrot.lane.b32.xlu0 %v540, 64
    %v543 = vpop.permute.xlu0 %542
    %v545 = vmul.f32 %v539, %v543
    %547 = vrot.lane.b32.xlu0 %v545, 64
    %v548 = vpop.permute.xlu0 %547
    %v550 = vadd.f32 %v448, %v548
    %v551 = vtanh.pop %v550
    %v552 = vsub.f32 %v373, %v551
    %554 = vrot.lane.b32.xlu0 %v552, 96
    %v555 = vpop.permute.xlu0 %554
    %v557 = vmul.f32 %v539, %v555
    %559 = vrot.lane.b32.xlu0 %v557, 32
    %v560 = vpop.permute.xlu0 %559
    %v562 = vadd.f32 %v551, %v560
    %v563 = vsel %vm109, 1, 6
    %vm564 = vcmp.lt.s32.totalorder %v563, %v112
    %v565 = vsel %vm564, 1, 0
    %566 = vset.pattern.permute.xlu0 0
    %567 = vperm.xlu0 %566, %v565
    %v568 = vpop.permute.xlu0 %567
    %vm569 = vcmp.eq.s32.totalorder %v568, 1
    %v570 = vsel %vm569, %v562, 0.0
    %v571 = vsel %vm569, %v562, %v373
    %v574 = vunpack.c.l.s4 1966171168
    %v575 = vunpack.c.0.s8 %v574
    %v576 = vlaneseq
    %v577 = vshrl.u32 %v576, 7
    %v578 = vsub.s32 %v575, %v577
    %v579 = vrot.slane %v570, %v578
    %v580 = vcombine.high %v579, %v579
    %v582 = vunpack.c.l.s4 1966171168
    %v583 = vunpack.c.0.s8 %v582
    %v584 = vlaneseq
    %v585 = vshrl.u32 %v584, 7
    %v586 = vsub.s32 %v583, %v585
    %v587 = vrot.slane %v579, %v586
    %v589 = vunpack.c.l.s4 1966171168
    %v590 = vunpack.c.0.s8 %v589
    %v591 = vlaneseq
    %v592 = vshrl.u32 %v591, 7
    %v593 = vsub.s32 %v590, %v592
    %v594 = vrot.slane %v580, %v593
    %v595 = vlaneseq
    %v596 = vshrl.u32 %v595, 7
    %v597 = vsub.s32 0, %v596
    %v598 = vrot.slane %v587, %v597
    %v599 = vlaneseq
    %v600 = vshrl.u32 %v599, 7
    %v601 = vsub.s32 0, %v600
    %v602 = vrot.slane %v594, %v601
    %603 = vrot.lane.b32.xlu0 %v598, 64
    %v604 = vpop.permute.xlu0 %603
    %605 = vrot.lane.b32.xlu0 %v602, 64
    %v606 = vpop.permute.xlu0 %605
    %609 = vst.msk [vmem:[#allocation2 + $0x1] sm:$0x1] %vm411, %v604
    %610 = vst.msk [vmem:[#allocation2 + $0x9] sm:$0x1] %vm411, %v606
    %v611 = vcombine.high %v587, %v587
    %v612 = vcombine.high %v594, %v594
    %v613 = vlaneseq
    %v614 = vshrl.u32 %v613, 7
    %v615 = vsub.s32 0, %v614
    %v616 = vrot.slane %v611, %v615
    %v617 = vlaneseq
    %v618 = vshrl.u32 %v617, 7
    %v619 = vsub.s32 0, %v618
    %v620 = vrot.slane %v612, %v619
    %621 = vrot.lane.b32.xlu0 %v616, 96
    %v622 = vpop.permute.xlu0 %621
    %623 = vrot.lane.b32.xlu0 %v620, 96
    %v624 = vpop.permute.xlu0 %623
    %627 = vst.msk [vmem:[#allocation2 + $0x6] sm:$0x1] %vm430, %v622
    %628 = vst.msk [vmem:[#allocation2 + $0xe] sm:$0x1] %vm430, %v624
    %v629 = vrot.slane %v205, 2
    %v630 = vrot.slane %v211, 1
    %v631 = vsel %vm227, %v630, %v629
    %v633 = vrot.slane %v205, 3
    %v634 = vrot.slane %v211, 2
    %v635 = vsel %vm234, %v634, %v633
    %v636 = vrot.slane %v207, 3
    %v637 = vrot.slane %v213, 2
    %v638 = vsel %vm234, %v637, %v636
    %639 = vrot.lane.b32.xlu0 %v635, 32
    %v640 = vpop.permute.xlu0 %639
    %641 = vrot.lane.b32.xlu0 %v638, 32
    %v642 = vpop.permute.xlu0 %641
    %v643 = vsel %vm243, %v640, %v642
    %v645 = vsel %vm111, %v631, %v643
    %647 = vrot.lane.b32.xlu0 %v571, 64
    %v648 = vpop.permute.xlu0 %647
    %v649 = vsel %vm243, %v648, 0
    %651 = vmatprep.subr.mxu0 %v216
    %652 = vmatpush1.msra.mxu0 %v215
    %653 = vmatprep.subr.mxu0 %v218
    %654 = vmatpush1.msra.mxu0 %v217
    %655 = vmatprep.subr.mxu0 %v220
    %656 = vmatpush1.msra.mxu0 %v219
    %657 = vmatprep.subr.mxu0 %v222
    %658 = vmatpush1.msra.mxu0 %v221
    %659 = vmatprep.subr.mxu0 0.0
    %660 = vmatpush1.msra.mxu0 0.0
    %661 = vmatprep.subr.mxu0 0.0
    %662 = vmatpush1.msra.mxu0 0.0
    %663 = vmatprep.subr.mxu0 0.0
    %664 = vmatpush1.msra.mxu0 0.0
    %665 = vmatprep.subr.mxu0 0.0
    %666 = vmatpush1.msra.mxu0 0.0
    %667 = vmatprep.subr.mxu0 0.0
    %668 = vmatpush1.msra.mxu0 0.0
    %669 = vmatprep.subr.mxu0 0.0
    %670 = vmatpush1.msra.mxu0 0.0
    %671 = vmatprep.subr.mxu0 0.0
    %672 = vmatpush1.msra.mxu0 0.0
    %673 = vmatprep.subr.mxu0 0.0
    %674 = vmatpush1.msra.mxu0 0.0
    %675 = vmatprep.subr.mxu0 0.0
    %676 = vmatpush1.msra.mxu0 0.0
    %677 = vmatprep.subr.mxu0 0.0
    %678 = vmatpush1.msra.mxu0 0.0
    %679 = vmatprep.subr.mxu0 0.0
    %680 = vmatpush1.msra.mxu0 0.0
    %681 = vmatprep.subr.mxu0 0.0
    %682 = vmatpush1.msra.mxu0 0.0
    %683 = vmatprep.subr.mxu0 0.0
    %684 = vmatpush1.msra.mxu0 0.0
    %685 = vmatprep.subr.mxu0 0.0
    %686 = vmatpush1.msra.mxu0 0.0
    %687 = vmatprep.subr.mxu0 0.0
    %688 = vmatpush1.msra.mxu0 0.0
    %689 = vmatprep.subr.mxu0 0.0
    %690 = vmatpush1.msra.mxu0 0.0
    %691 = vmatprep.subr.mxu0 0.0
    %692 = vmatpush1.msra.mxu0 0.0
    %693 = vmatprep.subr.mxu0 0.0
    %694 = vmatpush1.msra.mxu0 0.0
    %695 = vmatprep.subr.mxu0 0.0
    %696 = vmatpush1.msra.mxu0 0.0
    %697 = vmatprep.subr.mxu0 0.0
    %698 = vmatpush1.msra.mxu0 0.0
    %699 = vmatprep.subr.mxu0 0.0
    %700 = vmatpush1.msra.mxu0 0.0
    %701 = vmatprep.subr.mxu0 0.0
    %702 = vmatpush1.msra.mxu0 0.0
    %703 = vmatprep.subr.mxu0 0.0
    %704 = vmatpush1.msra.mxu0 0.0
    %705 = vmatprep.subr.mxu0 0.0
    %706 = vmatpush1.msra.mxu0 0.0
    %707 = vmatprep.subr.mxu0 0.0
    %708 = vmatpush1.msra.mxu0 0.0
    %709 = vmatprep.subr.mxu0 0.0
    %710 = vmatpush1.msra.mxu0 0.0
    %711 = vmatprep.subr.mxu0 0.0
    %712 = vmatpush1.msra.mxu0 0.0
    %713 = vmatprep.subr.mxu0 0.0
    %714 = vmatpush1.msra.mxu0 0.0
    %715 = vmatprep.mubr.f32.mxu0 0.0
    %716 = vmatmul.mubr.f32.gmra.mrb[0].mxu0 %v649
    %v717 = vpop.f32.mrb[0].mxu0
    %v718 = vadd.f32 0.0, %v717
    %v719 = vpop.f32.mrb[0].mxu0
    %v720 = vadd.f32 0.0, %v719
    %721 = vdwg.mxu0
    %724 = vrot.lane.b32.xlu0 %v718, 32
    %v725 = vpop.permute.xlu0 %724
    %726 = vrot.lane.b32.xlu0 %v720, 32
    %v727 = vpop.permute.xlu0 %726
    %v728 = vsel %vm243, %v725, %v727
    %v730 = vsel %vm322, %v718, %v728
    %v731 = vadd.f32 %v645, %v730
    %v732 = vxor.u32 %v731, 2147483648
    %v733 = vmul.f32 %v732, 1.442695
    %v734 = vpow.pop %v733
    %v735 = vadd.f32 %v734, 1.0
    %v736 = vrcp.pop %v735
    %v737 = vmul.f32 1.0, %v736
    %v738 = vadd.f32 %v730, %v341
    %740 = vrot.lane.b32.xlu0 %v738, 64
    %v741 = vpop.permute.xlu0 %740
    %v743 = vmul.f32 %v737, %v741
    %745 = vrot.lane.b32.xlu0 %v743, 64
    %v746 = vpop.permute.xlu0 %745
    %v748 = vadd.f32 %v645, %v746
    %v749 = vtanh.pop %v748
    %v750 = vsub.f32 %v571, %v749
    %752 = vrot.lane.b32.xlu0 %v750, 96
    %v753 = vpop.permute.xlu0 %752
    %v755 = vmul.f32 %v737, %v753
    %757 = vrot.lane.b32.xlu0 %v755, 32
    %v758 = vpop.permute.xlu0 %757
    %v760 = vadd.f32 %v749, %v758
    %v761 = vsel %vm109, 2, 5
    %vm762 = vcmp.lt.s32.totalorder %v761, %v112
    %v763 = vsel %vm762, 1, 0
    %764 = vset.pattern.permute.xlu0 0
    %765 = vperm.xlu0 %764, %v763
    %v766 = vpop.permute.xlu0 %765
    %vm767 = vcmp.eq.s32.totalorder %v766, 1
    %v768 = vsel %vm767, %v760, 0.0
    %v769 = vsel %vm767, %v760, %v571
    %v772 = vunpack.c.l.s4 1966171168
    %v773 = vunpack.c.0.s8 %v772
    %v774 = vlaneseq
    %v775 = vshrl.u32 %v774, 7
    %v776 = vsub.s32 %v773, %v775
    %v777 = vrot.slane %v768, %v776
    %v778 = vcombine.high %v777, %v777
    %v780 = vunpack.c.l.s4 1966171168
    %v781 = vunpack.c.0.s8 %v780
    %v782 = vlaneseq
    %v783 = vshrl.u32 %v782, 7
    %v784 = vsub.s32 %v781, %v783
    %v785 = vrot.slane %v777, %v784
    %v787 = vunpack.c.l.s4 1966171168
    %v788 = vunpack.c.0.s8 %v787
    %v789 = vlaneseq
    %v790 = vshrl.u32 %v789, 7
    %v791 = vsub.s32 %v788, %v790
    %v792 = vrot.slane %v778, %v791
    %v793 = vlaneseq
    %v794 = vshrl.u32 %v793, 7
    %v795 = vsub.s32 0, %v794
    %v796 = vrot.slane %v785, %v795
    %v797 = vlaneseq
    %v798 = vshrl.u32 %v797, 7
    %v799 = vsub.s32 0, %v798
    %v800 = vrot.slane %v792, %v799
    %801 = vrot.lane.b32.xlu0 %v796, 64
    %v802 = vpop.permute.xlu0 %801
    %803 = vrot.lane.b32.xlu0 %v800, 64
    %v804 = vpop.permute.xlu0 %803
    %807 = vst.msk [vmem:[#allocation2 + $0x2] sm:$0x1] %vm411, %v802
    %808 = vst.msk [vmem:[#allocation2 + $0xa] sm:$0x1] %vm411, %v804
    %v809 = vcombine.high %v785, %v785
    %v810 = vcombine.high %v792, %v792
    %v811 = vlaneseq
    %v812 = vshrl.u32 %v811, 7
    %v813 = vsub.s32 0, %v812
    %v814 = vrot.slane %v809, %v813
    %v815 = vlaneseq
    %v816 = vshrl.u32 %v815, 7
    %v817 = vsub.s32 0, %v816
    %v818 = vrot.slane %v810, %v817
    %819 = vrot.lane.b32.xlu0 %v814, 96
    %v820 = vpop.permute.xlu0 %819
    %821 = vrot.lane.b32.xlu0 %v818, 96
    %v822 = vpop.permute.xlu0 %821
    %825 = vst.msk [vmem:[#allocation2 + $0x5] sm:$0x1] %vm430, %v820
    %826 = vst.msk [vmem:[#allocation2 + $0xd] sm:$0x1] %vm430, %v822
    %v827 = vsel %vm227, %v634, %v633
    %v829 = vsel %vm234, %v630, %v629
    %v830 = vrot.slane %v207, 2
    %v831 = vrot.slane %v213, 1
    %v832 = vsel %vm234, %v831, %v830
    %833 = vrot.lane.b32.xlu0 %v829, 32
    %v834 = vpop.permute.xlu0 %833
    %835 = vrot.lane.b32.xlu0 %v832, 32
    %v836 = vpop.permute.xlu0 %835
    %v837 = vsel %vm243, %v834, %v836
    %v839 = vsel %vm111, %v827, %v837
    %841 = vrot.lane.b32.xlu0 %v769, 64
    %v842 = vpop.permute.xlu0 %841
    %v843 = vsel %vm243, %v842, 0
    %845 = vmatprep.subr.mxu0 %v216
    %846 = vmatpush1.msra.mxu0 %v215
    %847 = vmatprep.subr.mxu0 %v218
    %848 = vmatpush1.msra.mxu0 %v217
    %849 = vmatprep.subr.mxu0 %v220
    %850 = vmatpush1.msra.mxu0 %v219
    %851 = vmatprep.subr.mxu0 %v222
    %852 = vmatpush1.msra.mxu0 %v221
    %853 = vmatprep.subr.mxu0 0.0
    %854 = vmatpush1.msra.mxu0 0.0
    %855 = vmatprep.subr.mxu0 0.0
    %856 = vmatpush1.msra.mxu0 0.0
    %857 = vmatprep.subr.mxu0 0.0
    %858 = vmatpush1.msra.mxu0 0.0
    %859 = vmatprep.subr.mxu0 0.0
    %860 = vmatpush1.msra.mxu0 0.0
    %861 = vmatprep.subr.mxu0 0.0
    %862 = vmatpush1.msra.mxu0 0.0
    %863 = vmatprep.subr.mxu0 0.0
    %864 = vmatpush1.msra.mxu0 0.0
    %865 = vmatprep.subr.mxu0 0.0
    %866 = vmatpush1.msra.mxu0 0.0
    %867 = vmatprep.subr.mxu0 0.0
    %868 = vmatpush1.msra.mxu0 0.0
    %869 = vmatprep.subr.mxu0 0.0
    %870 = vmatpush1.msra.mxu0 0.0
    %871 = vmatprep.subr.mxu0 0.0
    %872 = vmatpush1.msra.mxu0 0.0
    %873 = vmatprep.subr.mxu0 0.0
    %874 = vmatpush1.msra.mxu0 0.0
    %875 = vmatprep.subr.mxu0 0.0
    %876 = vmatpush1.msra.mxu0 0.0
    %877 = vmatprep.subr.mxu0 0.0
    %878 = vmatpush1.msra.mxu0 0.0
    %879 = vmatprep.subr.mxu0 0.0
    %880 = vmatpush1.msra.mxu0 0.0
    %881 = vmatprep.subr.mxu0 0.0
    %882 = vmatpush1.msra.mxu0 0.0
    %883 = vmatprep.subr.mxu0 0.0
    %884 = vmatpush1.msra.mxu0 0.0
    %885 = vmatprep.subr.mxu0 0.0
    %886 = vmatpush1.msra.mxu0 0.0
    %887 = vmatprep.subr.mxu0 0.0
    %888 = vmatpush1.msra.mxu0 0.0
    %889 = vmatprep.subr.mxu0 0.0
    %890 = vmatpush1.msra.mxu0 0.0
    %891 = vmatprep.subr.mxu0 0.0
    %892 = vmatpush1.msra.mxu0 0.0
    %893 = vmatprep.subr.mxu0 0.0
    %894 = vmatpush1.msra.mxu0 0.0
    %895 = vmatprep.subr.mxu0 0.0
    %896 = vmatpush1.msra.mxu0 0.0
    %897 = vmatprep.subr.mxu0 0.0
    %898 = vmatpush1.msra.mxu0 0.0
    %899 = vmatprep.subr.mxu0 0.0
    %900 = vmatpush1.msra.mxu0 0.0
    %901 = vmatprep.subr.mxu0 0.0
    %902 = vmatpush1.msra.mxu0 0.0
    %903 = vmatprep.subr.mxu0 0.0
    %904 = vmatpush1.msra.mxu0 0.0
    %905 = vmatprep.subr.mxu0 0.0
    %906 = vmatpush1.msra.mxu0 0.0
    %907 = vmatprep.subr.mxu0 0.0
    %908 = vmatpush1.msra.mxu0 0.0
    %909 = vmatprep.mubr.f32.mxu0 0.0
    %910 = vmatmul.mubr.f32.gmra.mrb[0].mxu0 %v843
    %v911 = vpop.f32.mrb[0].mxu0
    %v912 = vadd.f32 0.0, %v911
    %v913 = vpop.f32.mrb[0].mxu0
    %v914 = vadd.f32 0.0, %v913
    %915 = vdwg.mxu0
    %918 = vrot.lane.b32.xlu0 %v912, 32
    %v919 = vpop.permute.xlu0 %918
    %920 = vrot.lane.b32.xlu0 %v914, 32
    %v921 = vpop.permute.xlu0 %920
    %v922 = vsel %vm243, %v919, %v921
    %v924 = vsel %vm322, %v912, %v922
    %v925 = vadd.f32 %v839, %v924
    %v926 = vxor.u32 %v925, 2147483648
    %v927 = vmul.f32 %v926, 1.442695
    %v928 = vpow.pop %v927
    %v929 = vadd.f32 %v928, 1.0
    %v930 = vrcp.pop %v929
    %v931 = vmul.f32 1.0, %v930
    %v932 = vadd.f32 %v924, %v341
    %934 = vrot.lane.b32.xlu0 %v932, 64
    %v935 = vpop.permute.xlu0 %934
    %v937 = vmul.f32 %v931, %v935
    %939 = vrot.lane.b32.xlu0 %v937, 64
    %v940 = vpop.permute.xlu0 %939
    %v942 = vadd.f32 %v839, %v940
    %v943 = vtanh.pop %v942
    %v944 = vsub.f32 %v769, %v943
    %946 = vrot.lane.b32.xlu0 %v944, 96
    %v947 = vpop.permute.xlu0 %946
    %v949 = vmul.f32 %v931, %v947
    %951 = vrot.lane.b32.xlu0 %v949, 32
    %v952 = vpop.permute.xlu0 %951
    %v954 = vadd.f32 %v943, %v952
    %v955 = vsel %vm109, 3, 4
    %vm956 = vcmp.lt.s32.totalorder %v955, %v112
    %v957 = vsel %vm956, 1, 0
    %958 = vset.pattern.permute.xlu0 0
    %959 = vperm.xlu0 %958, %v957
    %v960 = vpop.permute.xlu0 %959
    %vm961 = vcmp.eq.s32.totalorder %v960, 1
    %v962 = vsel %vm961, %v954, 0.0
    %v963 = vsel %vm961, %v954, %v769
    %v966 = vunpack.c.l.s4 1966171168
    %v967 = vunpack.c.0.s8 %v966
    %v968 = vlaneseq
    %v969 = vshrl.u32 %v968, 7
    %v970 = vsub.s32 %v967, %v969
    %v971 = vrot.slane %v962, %v970
    %v972 = vcombine.high %v971, %v971
    %v974 = vunpack.c.l.s4 1966171168
    %v975 = vunpack.c.0.s8 %v974
    %v976 = vlaneseq
    %v977 = vshrl.u32 %v976, 7
    %v978 = vsub.s32 %v975, %v977
    %v979 = vrot.slane %v971, %v978
    %v981 = vunpack.c.l.s4 1966171168
    %v982 = vunpack.c.0.s8 %v981
    %v983 = vlaneseq
    %v984 = vshrl.u32 %v983, 7
    %v985 = vsub.s32 %v982, %v984
    %v986 = vrot.slane %v972, %v985
    %v987 = vlaneseq
    %v988 = vshrl.u32 %v987, 7
    %v989 = vsub.s32 0, %v988
    %v990 = vrot.slane %v979, %v989
    %v991 = vlaneseq
    %v992 = vshrl.u32 %v991, 7
    %v993 = vsub.s32 0, %v992
    %v994 = vrot.slane %v986, %v993
    %995 = vrot.lane.b32.xlu0 %v990, 64
    %v996 = vpop.permute.xlu0 %995
    %997 = vrot.lane.b32.xlu0 %v994, 64
    %v998 = vpop.permute.xlu0 %997
    %1001 = vst.msk [vmem:[#allocation2 + $0x3] sm:$0x1] %vm411, %v996
    %1002 = vst.msk [vmem:[#allocation2 + $0xb] sm:$0x1] %vm411, %v998
    %v1003 = vcombine.high %v979, %v979
    %v1004 = vcombine.high %v986, %v986
    %v1005 = vlaneseq
    %v1006 = vshrl.u32 %v1005, 7
    %v1007 = vsub.s32 0, %v1006
    %v1008 = vrot.slane %v1003, %v1007
    %v1009 = vlaneseq
    %v1010 = vshrl.u32 %v1009, 7
    %v1011 = vsub.s32 0, %v1010
    %v1012 = vrot.slane %v1004, %v1011
    %1013 = vrot.lane.b32.xlu0 %v1008, 96
    %v1014 = vpop.permute.xlu0 %1013
    %1015 = vrot.lane.b32.xlu0 %v1012, 96
    %v1016 = vpop.permute.xlu0 %1015
    %1019 = vst.msk [vmem:[#allocation2 + $0x4] sm:$0x1] %vm430, %v1014
    %1020 = vst.msk [vmem:[#allocation2 + $0xc] sm:$0x1] %vm430, %v1016
    %v1021 = vsel %vm227, %v437, %v436
    %v1023 = vsel %vm234, %v211, %v433
    %v1024 = vrot.slane %v207, 1
    %v1025 = vsel %vm234, %v213, %v1024
    %1026 = vrot.lane.b32.xlu0 %v1023, 32
    %v1027 = vpop.permute.xlu0 %1026
    %1028 = vrot.lane.b32.xlu0 %v1025, 32
    %v1029 = vpop.permute.xlu0 %1028
    %v1030 = vsel %vm243, %v1027, %v1029
    %v1032 = vsel %vm111, %v1021, %v1030
    %1034 = vrot.lane.b32.xlu0 %v963, 64
    %v1035 = vpop.permute.xlu0 %1034
    %v1036 = vsel %vm243, %v1035, 0
    %1038 = vmatprep.subr.mxu0 %v216
    %1039 = vmatpush1.msra.mxu0 %v215
    %1040 = vmatprep.subr.mxu0 %v218
    %1041 = vmatpush1.msra.mxu0 %v217
    %1042 = vmatprep.subr.mxu0 %v220
    %1043 = vmatpush1.msra.mxu0 %v219
    %1044 = vmatprep.subr.mxu0 %v222
    %1045 = vmatpush1.msra.mxu0 %v221
    %1046 = vmatprep.subr.mxu0 0.0
    %1047 = vmatpush1.msra.mxu0 0.0
    %1048 = vmatprep.subr.mxu0 0.0
    %1049 = vmatpush1.msra.mxu0 0.0
    %1050 = vmatprep.subr.mxu0 0.0
    %1051 = vmatpush1.msra.mxu0 0.0
    %1052 = vmatprep.subr.mxu0 0.0
    %1053 = vmatpush1.msra.mxu0 0.0
    %1054 = vmatprep.subr.mxu0 0.0
    %1055 = vmatpush1.msra.mxu0 0.0
    %1056 = vmatprep.subr.mxu0 0.0
    %1057 = vmatpush1.msra.mxu0 0.0
    %1058 = vmatprep.subr.mxu0 0.0
    %1059 = vmatpush1.msra.mxu0 0.0
    %1060 = vmatprep.subr.mxu0 0.0
    %1061 = vmatpush1.msra.mxu0 0.0
    %1062 = vmatprep.subr.mxu0 0.0
    %1063 = vmatpush1.msra.mxu0 0.0
    %1064 = vmatprep.subr.mxu0 0.0
    %1065 = vmatpush1.msra.mxu0 0.0
    %1066 = vmatprep.subr.mxu0 0.0
    %1067 = vmatpush1.msra.mxu0 0.0
    %1068 = vmatprep.subr.mxu0 0.0
    %1069 = vmatpush1.msra.mxu0 0.0
    %1070 = vmatprep.subr.mxu0 0.0
    %1071 = vmatpush1.msra.mxu0 0.0
    %1072 = vmatprep.subr.mxu0 0.0
    %1073 = vmatpush1.msra.mxu0 0.0
    %1074 = vmatprep.subr.mxu0 0.0
    %1075 = vmatpush1.msra.mxu0 0.0
    %1076 = vmatprep.subr.mxu0 0.0
    %1077 = vmatpush1.msra.mxu0 0.0
    %1078 = vmatprep.subr.mxu0 0.0
    %1079 = vmatpush1.msra.mxu0 0.0
    %1080 = vmatprep.subr.mxu0 0.0
    %1081 = vmatpush1.msra.mxu0 0.0
    %1082 = vmatprep.subr.mxu0 0.0
    %1083 = vmatpush1.msra.mxu0 0.0
    %1084 = vmatprep.subr.mxu0 0.0
    %1085 = vmatpush1.msra.mxu0 0.0
    %1086 = vmatprep.subr.mxu0 0.0
    %1087 = vmatpush1.msra.mxu0 0.0
    %1088 = vmatprep.subr.mxu0 0.0
    %1089 = vmatpush1.msra.mxu0 0.0
    %1090 = vmatprep.subr.mxu0 0.0
    %1091 = vmatpush1.msra.mxu0 0.0
    %1092 = vmatprep.subr.mxu0 0.0
    %1093 = vmatpush1.msra.mxu0 0.0
    %1094 = vmatprep.subr.mxu0 0.0
    %1095 = vmatpush1.msra.mxu0 0.0
    %1096 = vmatprep.subr.mxu0 0.0
    %1097 = vmatpush1.msra.mxu0 0.0
    %1098 = vmatprep.subr.mxu0 0.0
    %1099 = vmatpush1.msra.mxu0 0.0
    %1100 = vmatprep.subr.mxu0 0.0
    %1101 = vmatpush1.msra.mxu0 0.0
    %1102 = vmatprep.mubr.f32.mxu0 0.0
    %1103 = vmatmul.mubr.f32.gmra.mrb[0].mxu0 %v1036
    %v1104 = vpop.f32.mrb[0].mxu0
    %v1105 = vadd.f32 0.0, %v1104
    %v1106 = vpop.f32.mrb[0].mxu0
    %v1107 = vadd.f32 0.0, %v1106
    %1108 = vdwg.mxu0
    %1111 = vrot.lane.b32.xlu0 %v1105, 32
    %v1112 = vpop.permute.xlu0 %1111
    %1113 = vrot.lane.b32.xlu0 %v1107, 32
    %v1114 = vpop.permute.xlu0 %1113
    %v1115 = vsel %vm243, %v1112, %v1114
    %v1117 = vsel %vm322, %v1105, %v1115
    %v1118 = vadd.f32 %v1032, %v1117
    %v1119 = vxor.u32 %v1118, 2147483648
    %v1120 = vmul.f32 %v1119, 1.442695
    %v1121 = vpow.pop %v1120
    %v1122 = vadd.f32 %v1121, 1.0
    %v1123 = vrcp.pop %v1122
    %v1124 = vmul.f32 1.0, %v1123
    %v1125 = vadd.f32 %v1117, %v341
    %1127 = vrot.lane.b32.xlu0 %v1125, 64
    %v1128 = vpop.permute.xlu0 %1127
    %v1130 = vmul.f32 %v1124, %v1128
    %1132 = vrot.lane.b32.xlu0 %v1130, 64
    %v1133 = vpop.permute.xlu0 %1132
    %v1135 = vadd.f32 %v1032, %v1133
    %v1136 = vtanh.pop %v1135
    %v1137 = vsub.f32 %v963, %v1136
    %1139 = vrot.lane.b32.xlu0 %v1137, 96
    %v1140 = vpop.permute.xlu0 %1139
    %v1142 = vmul.f32 %v1124, %v1140
    %1144 = vrot.lane.b32.xlu0 %v1142, 32
    %v1145 = vpop.permute.xlu0 %1144
    %v1147 = vadd.f32 %v1136, %v1145
    %v1148 = vsel %vm109, 4, 3
    %vm1149 = vcmp.lt.s32.totalorder %v1148, %v112
    %v1150 = vsel %vm1149, 1, 0
    %1151 = vset.pattern.permute.xlu0 0
    %1152 = vperm.xlu0 %1151, %v1150
    %v1153 = vpop.permute.xlu0 %1152
    %vm1154 = vcmp.eq.s32.totalorder %v1153, 1
    %v1155 = vsel %vm1154, %v1147, 0.0
    %v1156 = vsel %vm1154, %v1147, %v963
    %v1159 = vunpack.c.l.s4 1966171168
    %v1160 = vunpack.c.0.s8 %v1159
    %v1161 = vlaneseq
    %v1162 = vshrl.u32 %v1161, 7
    %v1163 = vsub.s32 %v1160, %v1162
    %v1164 = vrot.slane %v1155, %v1163
    %v1165 = vcombine.high %v1164, %v1164
    %v1167 = vunpack.c.l.s4 1966171168
    %v1168 = vunpack.c.0.s8 %v1167
    %v1169 = vlaneseq
    %v1170 = vshrl.u32 %v1169, 7
    %v1171 = vsub.s32 %v1168, %v1170
    %v1172 = vrot.slane %v1164, %v1171
    %v1174 = vunpack.c.l.s4 1966171168
    %v1175 = vunpack.c.0.s8 %v1174
    %v1176 = vlaneseq
    %v1177 = vshrl.u32 %v1176, 7
    %v1178 = vsub.s32 %v1175, %v1177
    %v1179 = vrot.slane %v1165, %v1178
    %v1180 = vlaneseq
    %v1181 = vshrl.u32 %v1180, 7
    %v1182 = vsub.s32 0, %v1181
    %v1183 = vrot.slane %v1172, %v1182
    %v1184 = vlaneseq
    %v1185 = vshrl.u32 %v1184, 7
    %v1186 = vsub.s32 0, %v1185
    %v1187 = vrot.slane %v1179, %v1186
    %1188 = vrot.lane.b32.xlu0 %v1183, 64
    %v1189 = vpop.permute.xlu0 %1188
    %1190 = vrot.lane.b32.xlu0 %v1187, 64
    %v1191 = vpop.permute.xlu0 %1190
    %1194 = vst.msk [vmem:[#allocation2 + $0x4] sm:$0x1] %vm411, %v1189
    %1195 = vst.msk [vmem:[#allocation2 + $0xc] sm:$0x1] %vm411, %v1191
    %v1196 = vcombine.high %v1172, %v1172
    %v1197 = vcombine.high %v1179, %v1179
    %v1198 = vlaneseq
    %v1199 = vshrl.u32 %v1198, 7
    %v1200 = vsub.s32 0, %v1199
    %v1201 = vrot.slane %v1196, %v1200
    %v1202 = vlaneseq
    %v1203 = vshrl.u32 %v1202, 7
    %v1204 = vsub.s32 0, %v1203
    %v1205 = vrot.slane %v1197, %v1204
    %1206 = vrot.lane.b32.xlu0 %v1201, 96
    %v1207 = vpop.permute.xlu0 %1206
    %1208 = vrot.lane.b32.xlu0 %v1205, 96
    %v1209 = vpop.permute.xlu0 %1208
    %1212 = vst.msk [vmem:[#allocation2 + $0x3] sm:$0x1] %vm430, %v1207
    %1213 = vst.msk [vmem:[#allocation2 + $0xb] sm:$0x1] %vm430, %v1209
    %v1214 = vsel %vm227, %v233, %v232
    %v1216 = vsel %vm234, %v226, %v205
    %v1217 = vrot.slane %v213, 7
    %v1218 = vsel %vm234, %v1217, %v207
    %1219 = vrot.lane.b32.xlu0 %v1216, 32
    %v1220 = vpop.permute.xlu0 %1219
    %1221 = vrot.lane.b32.xlu0 %v1218, 32
    %v1222 = vpop.permute.xlu0 %1221
    %v1223 = vsel %vm243, %v1220, %v1222
    %v1225 = vsel %vm111, %v1214, %v1223
    %1227 = vrot.lane.b32.xlu0 %v1156, 64
    %v1228 = vpop.permute.xlu0 %1227
    %v1229 = vsel %vm243, %v1228, 0
    %1231 = vmatprep.subr.mxu0 %v216
    %1232 = vmatpush1.msra.mxu0 %v215
    %1233 = vmatprep.subr.mxu0 %v218
    %1234 = vmatpush1.msra.mxu0 %v217
    %1235 = vmatprep.subr.mxu0 %v220
    %1236 = vmatpush1.msra.mxu0 %v219
    %1237 = vmatprep.subr.mxu0 %v222
    %1238 = vmatpush1.msra.mxu0 %v221
    %1239 = vmatprep.subr.mxu0 0.0
    %1240 = vmatpush1.msra.mxu0 0.0
    %1241 = vmatprep.subr.mxu0 0.0
    %1242 = vmatpush1.msra.mxu0 0.0
    %1243 = vmatprep.subr.mxu0 0.0
    %1244 = vmatpush1.msra.mxu0 0.0
    %1245 = vmatprep.subr.mxu0 0.0
    %1246 = vmatpush1.msra.mxu0 0.0
    %1247 = vmatprep.subr.mxu0 0.0
    %1248 = vmatpush1.msra.mxu0 0.0
    %1249 = vmatprep.subr.mxu0 0.0
    %1250 = vmatpush1.msra.mxu0 0.0
    %1251 = vmatprep.subr.mxu0 0.0
    %1252 = vmatpush1.msra.mxu0 0.0
    %1253 = vmatprep.subr.mxu0 0.0
    %1254 = vmatpush1.msra.mxu0 0.0
    %1255 = vmatprep.subr.mxu0 0.0
    %1256 = vmatpush1.msra.mxu0 0.0
    %1257 = vmatprep.subr.mxu0 0.0
    %1258 = vmatpush1.msra.mxu0 0.0
    %1259 = vmatprep.subr.mxu0 0.0
    %1260 = vmatpush1.msra.mxu0 0.0
    %1261 = vmatprep.subr.mxu0 0.0
    %1262 = vmatpush1.msra.mxu0 0.0
    %1263 = vmatprep.subr.mxu0 0.0
    %1264 = vmatpush1.msra.mxu0 0.0
    %1265 = vmatprep.subr.mxu0 0.0
    %1266 = vmatpush1.msra.mxu0 0.0
    %1267 = vmatprep.subr.mxu0 0.0
    %1268 = vmatpush1.msra.mxu0 0.0
    %1269 = vmatprep.subr.mxu0 0.0
    %1270 = vmatpush1.msra.mxu0 0.0
    %1271 = vmatprep.subr.mxu0 0.0
    %1272 = vmatpush1.msra.mxu0 0.0
    %1273 = vmatprep.subr.mxu0 0.0
    %1274 = vmatpush1.msra.mxu0 0.0
    %1275 = vmatprep.subr.mxu0 0.0
    %1276 = vmatpush1.msra.mxu0 0.0
    %1277 = vmatprep.subr.mxu0 0.0
    %1278 = vmatpush1.msra.mxu0 0.0
    %1279 = vmatprep.subr.mxu0 0.0
    %1280 = vmatpush1.msra.mxu0 0.0
    %1281 = vmatprep.subr.mxu0 0.0
    %1282 = vmatpush1.msra.mxu0 0.0
    %1283 = vmatprep.subr.mxu0 0.0
    %1284 = vmatpush1.msra.mxu0 0.0
    %1285 = vmatprep.subr.mxu0 0.0
    %1286 = vmatpush1.msra.mxu0 0.0
    %1287 = vmatprep.subr.mxu0 0.0
    %1288 = vmatpush1.msra.mxu0 0.0
    %1289 = vmatprep.subr.mxu0 0.0
    %1290 = vmatpush1.msra.mxu0 0.0
    %1291 = vmatprep.subr.mxu0 0.0
    %1292 = vmatpush1.msra.mxu0 0.0
    %1293 = vmatprep.subr.mxu0 0.0
    %1294 = vmatpush1.msra.mxu0 0.0
    %1295 = vmatprep.mubr.f32.mxu0 0.0
    %1296 = vmatmul.mubr.f32.gmra.mrb[0].mxu0 %v1229
    %v1297 = vpop.f32.mrb[0].mxu0
    %v1298 = vadd.f32 0.0, %v1297
    %v1299 = vpop.f32.mrb[0].mxu0
    %v1300 = vadd.f32 0.0, %v1299
    %1301 = vdwg.mxu0
    %1304 = vrot.lane.b32.xlu0 %v1298, 32
    %v1305 = vpop.permute.xlu0 %1304
    %1306 = vrot.lane.b32.xlu0 %v1300, 32
    %v1307 = vpop.permute.xlu0 %1306
    %v1308 = vsel %vm243, %v1305, %v1307
    %v1310 = vsel %vm322, %v1298, %v1308
    %v1311 = vadd.f32 %v1225, %v1310
    %v1312 = vxor.u32 %v1311, 2147483648
    %v1313 = vmul.f32 %v1312, 1.442695
    %v1314 = vpow.pop %v1313
    %v1315 = vadd.f32 %v1314, 1.0
    %v1316 = vrcp.pop %v1315
    %v1317 = vmul.f32 1.0, %v1316
    %v1318 = vadd.f32 %v1310, %v341
    %1320 = vrot.lane.b32.xlu0 %v1318, 64
    %v1321 = vpop.permute.xlu0 %1320
    %v1323 = vmul.f32 %v1317, %v1321
    %1325 = vrot.lane.b32.xlu0 %v1323, 64
    %v1326 = vpop.permute.xlu0 %1325
    %v1328 = vadd.f32 %v1225, %v1326
    %v1329 = vtanh.pop %v1328
    %v1330 = vsub.f32 %v1156, %v1329
    %1332 = vrot.lane.b32.xlu0 %v1330, 96
    %v1333 = vpop.permute.xlu0 %1332
    %v1335 = vmul.f32 %v1317, %v1333
    %1337 = vrot.lane.b32.xlu0 %v1335, 32
    %v1338 = vpop.permute.xlu0 %1337
    %v1340 = vadd.f32 %v1329, %v1338
    %v1341 = vsel %vm109, 5, 2
    %vm1342 = vcmp.lt.s32.totalorder %v1341, %v112
    %v1343 = vsel %vm1342, 1, 0
    %1344 = vset.pattern.permute.xlu0 0
    %1345 = vperm.xlu0 %1344, %v1343
    %v1346 = vpop.permute.xlu0 %1345
    %vm1347 = vcmp.eq.s32.totalorder %v1346, 1
    %v1348 = vsel %vm1347, %v1340, 0.0
    %v1349 = vsel %vm1347, %v1340, %v1156
    %v1352 = vunpack.c.l.s4 1966171168
    %v1353 = vunpack.c.0.s8 %v1352
    %v1354 = vlaneseq
    %v1355 = vshrl.u32 %v1354, 7
    %v1356 = vsub.s32 %v1353, %v1355
    %v1357 = vrot.slane %v1348, %v1356
    %v1358 = vcombine.high %v1357, %v1357
    %v1360 = vunpack.c.l.s4 1966171168
    %v1361 = vunpack.c.0.s8 %v1360
    %v1362 = vlaneseq
    %v1363 = vshrl.u32 %v1362, 7
    %v1364 = vsub.s32 %v1361, %v1363
    %v1365 = vrot.slane %v1357, %v1364
    %v1367 = vunpack.c.l.s4 1966171168
    %v1368 = vunpack.c.0.s8 %v1367
    %v1369 = vlaneseq
    %v1370 = vshrl.u32 %v1369, 7
    %v1371 = vsub.s32 %v1368, %v1370
    %v1372 = vrot.slane %v1358, %v1371
    %v1373 = vlaneseq
    %v1374 = vshrl.u32 %v1373, 7
    %v1375 = vsub.s32 0, %v1374
    %v1376 = vrot.slane %v1365, %v1375
    %v1377 = vlaneseq
    %v1378 = vshrl.u32 %v1377, 7
    %v1379 = vsub.s32 0, %v1378
    %v1380 = vrot.slane %v1372, %v1379
    %1381 = vrot.lane.b32.xlu0 %v1376, 64
    %v1382 = vpop.permute.xlu0 %1381
    %1383 = vrot.lane.b32.xlu0 %v1380, 64
    %v1384 = vpop.permute.xlu0 %1383
    %1387 = vst.msk [vmem:[#allocation2 + $0x5] sm:$0x1] %vm411, %v1382
    %1388 = vst.msk [vmem:[#allocation2 + $0xd] sm:$0x1] %vm411, %v1384
    %v1389 = vcombine.high %v1365, %v1365
    %v1390 = vcombine.high %v1372, %v1372
    %v1391 = vlaneseq
    %v1392 = vshrl.u32 %v1391, 7
    %v1393 = vsub.s32 0, %v1392
    %v1394 = vrot.slane %v1389, %v1393
    %v1395 = vlaneseq
    %v1396 = vshrl.u32 %v1395, 7
    %v1397 = vsub.s32 0, %v1396
    %v1398 = vrot.slane %v1390, %v1397
    %1399 = vrot.lane.b32.xlu0 %v1394, 96
    %v1400 = vpop.permute.xlu0 %1399
    %1401 = vrot.lane.b32.xlu0 %v1398, 96
    %v1402 = vpop.permute.xlu0 %1401
    %1405 = vst.msk [vmem:[#allocation2 + $0x2] sm:$0x1] %vm430, %v1400
    %1406 = vst.msk [vmem:[#allocation2 + $0xa] sm:$0x1] %vm430, %v1402
    %v1407 = vrot.slane %v205, 6
    %v1408 = vrot.slane %v211, 5
    %v1409 = vsel %vm227, %v1408, %v1407
    %v1411 = vrot.slane %v205, 7
    %v1412 = vrot.slane %v211, 6
    %v1413 = vsel %vm234, %v1412, %v1411
    %v1414 = vrot.slane %v207, 7
    %v1415 = vrot.slane %v213, 6
    %v1416 = vsel %vm234, %v1415, %v1414
    %1417 = vrot.lane.b32.xlu0 %v1413, 32
    %v1418 = vpop.permute.xlu0 %1417
    %1419 = vrot.lane.b32.xlu0 %v1416, 32
    %v1420 = vpop.permute.xlu0 %1419
    %v1421 = vsel %vm243, %v1418, %v1420
    %v1423 = vsel %vm111, %v1409, %v1421
    %1425 = vrot.lane.b32.xlu0 %v1349, 64
    %v1426 = vpop.permute.xlu0 %1425
    %v1427 = vsel %vm243, %v1426, 0
    %1429 = vmatprep.subr.mxu0 %v216
    %1430 = vmatpush1.msra.mxu0 %v215
    %1431 = vmatprep.subr.mxu0 %v218
    %1432 = vmatpush1.msra.mxu0 %v217
    %1433 = vmatprep.subr.mxu0 %v220
    %1434 = vmatpush1.msra.mxu0 %v219
    %1435 = vmatprep.subr.mxu0 %v222
    %1436 = vmatpush1.msra.mxu0 %v221
    %1437 = vmatprep.subr.mxu0 0.0
    %1438 = vmatpush1.msra.mxu0 0.0
    %1439 = vmatprep.subr.mxu0 0.0
    %1440 = vmatpush1.msra.mxu0 0.0
    %1441 = vmatprep.subr.mxu0 0.0
    %1442 = vmatpush1.msra.mxu0 0.0
    %1443 = vmatprep.subr.mxu0 0.0
    %1444 = vmatpush1.msra.mxu0 0.0
    %1445 = vmatprep.subr.mxu0 0.0
    %1446 = vmatpush1.msra.mxu0 0.0
    %1447 = vmatprep.subr.mxu0 0.0
    %1448 = vmatpush1.msra.mxu0 0.0
    %1449 = vmatprep.subr.mxu0 0.0
    %1450 = vmatpush1.msra.mxu0 0.0
    %1451 = vmatprep.subr.mxu0 0.0
    %1452 = vmatpush1.msra.mxu0 0.0
    %1453 = vmatprep.subr.mxu0 0.0
    %1454 = vmatpush1.msra.mxu0 0.0
    %1455 = vmatprep.subr.mxu0 0.0
    %1456 = vmatpush1.msra.mxu0 0.0
    %1457 = vmatprep.subr.mxu0 0.0
    %1458 = vmatpush1.msra.mxu0 0.0
    %1459 = vmatprep.subr.mxu0 0.0
    %1460 = vmatpush1.msra.mxu0 0.0
    %1461 = vmatprep.subr.mxu0 0.0
    %1462 = vmatpush1.msra.mxu0 0.0
    %1463 = vmatprep.subr.mxu0 0.0
    %1464 = vmatpush1.msra.mxu0 0.0
    %1465 = vmatprep.subr.mxu0 0.0
    %1466 = vmatpush1.msra.mxu0 0.0
    %1467 = vmatprep.subr.mxu0 0.0
    %1468 = vmatpush1.msra.mxu0 0.0
    %1469 = vmatprep.subr.mxu0 0.0
    %1470 = vmatpush1.msra.mxu0 0.0
    %1471 = vmatprep.subr.mxu0 0.0
    %1472 = vmatpush1.msra.mxu0 0.0
    %1473 = vmatprep.subr.mxu0 0.0
    %1474 = vmatpush1.msra.mxu0 0.0
    %1475 = vmatprep.subr.mxu0 0.0
    %1476 = vmatpush1.msra.mxu0 0.0
    %1477 = vmatprep.subr.mxu0 0.0
    %1478 = vmatpush1.msra.mxu0 0.0
    %1479 = vmatprep.subr.mxu0 0.0
    %1480 = vmatpush1.msra.mxu0 0.0
    %1481 = vmatprep.subr.mxu0 0.0
    %1482 = vmatpush1.msra.mxu0 0.0
    %1483 = vmatprep.subr.mxu0 0.0
    %1484 = vmatpush1.msra.mxu0 0.0
    %1485 = vmatprep.subr.mxu0 0.0
    %1486 = vmatpush1.msra.mxu0 0.0
    %1487 = vmatprep.subr.mxu0 0.0
    %1488 = vmatpush1.msra.mxu0 0.0
    %1489 = vmatprep.subr.mxu0 0.0
    %1490 = vmatpush1.msra.mxu0 0.0
    %1491 = vmatprep.subr.mxu0 0.0
    %1492 = vmatpush1.msra.mxu0 0.0
    %1493 = vmatprep.mubr.f32.mxu0 0.0
    %1494 = vmatmul.mubr.f32.gmra.mrb[0].mxu0 %v1427
    %v1495 = vpop.f32.mrb[0].mxu0
    %v1496 = vadd.f32 0.0, %v1495
    %v1497 = vpop.f32.mrb[0].mxu0
    %v1498 = vadd.f32 0.0, %v1497
    %1499 = vdwg.mxu0
    %1502 = vrot.lane.b32.xlu0 %v1496, 32
    %v1503 = vpop.permute.xlu0 %1502
    %1504 = vrot.lane.b32.xlu0 %v1498, 32
    %v1505 = vpop.permute.xlu0 %1504
    %v1506 = vsel %vm243, %v1503, %v1505
    %v1508 = vsel %vm322, %v1496, %v1506
    %v1509 = vadd.f32 %v1423, %v1508
    %v1510 = vxor.u32 %v1509, 2147483648
    %v1511 = vmul.f32 %v1510, 1.442695
    %v1512 = vpow.pop %v1511
    %v1513 = vadd.f32 %v1512, 1.0
    %v1514 = vrcp.pop %v1513
    %v1515 = vmul.f32 1.0, %v1514
    %v1516 = vadd.f32 %v1508, %v341
    %1518 = vrot.lane.b32.xlu0 %v1516, 64
    %v1519 = vpop.permute.xlu0 %1518
    %v1521 = vmul.f32 %v1515, %v1519
    %1523 = vrot.lane.b32.xlu0 %v1521, 64
    %v1524 = vpop.permute.xlu0 %1523
    %v1526 = vadd.f32 %v1423, %v1524
    %v1527 = vtanh.pop %v1526
    %v1528 = vsub.f32 %v1349, %v1527
    %1530 = vrot.lane.b32.xlu0 %v1528, 96
    %v1531 = vpop.permute.xlu0 %1530
    %v1533 = vmul.f32 %v1515, %v1531
    %1535 = vrot.lane.b32.xlu0 %v1533, 32
    %v1536 = vpop.permute.xlu0 %1535
    %v1538 = vadd.f32 %v1527, %v1536
    %v1539 = vsel %vm109, 6, 1
    %vm1540 = vcmp.lt.s32.totalorder %v1539, %v112
    %v1541 = vsel %vm1540, 1, 0
    %1542 = vset.pattern.permute.xlu0 0
    %1543 = vperm.xlu0 %1542, %v1541
    %v1544 = vpop.permute.xlu0 %1543
    %vm1545 = vcmp.eq.s32.totalorder %v1544, 1
    %v1546 = vsel %vm1545, %v1538, 0.0
    %v1547 = vsel %vm1545, %v1538, %v1349
    %v1550 = vunpack.c.l.s4 1966171168
    %v1551 = vunpack.c.0.s8 %v1550
    %v1552 = vlaneseq
    %v1553 = vshrl.u32 %v1552, 7
    %v1554 = vsub.s32 %v1551, %v1553
    %v1555 = vrot.slane %v1546, %v1554
    %v1556 = vcombine.high %v1555, %v1555
    %v1558 = vunpack.c.l.s4 1966171168
    %v1559 = vunpack.c.0.s8 %v1558
    %v1560 = vlaneseq
    %v1561 = vshrl.u32 %v1560, 7
    %v1562 = vsub.s32 %v1559, %v1561
    %v1563 = vrot.slane %v1555, %v1562
    %v1565 = vunpack.c.l.s4 1966171168
    %v1566 = vunpack.c.0.s8 %v1565
    %v1567 = vlaneseq
    %v1568 = vshrl.u32 %v1567, 7
    %v1569 = vsub.s32 %v1566, %v1568
    %v1570 = vrot.slane %v1556, %v1569
    %v1571 = vlaneseq
    %v1572 = vshrl.u32 %v1571, 7
    %v1573 = vsub.s32 0, %v1572
    %v1574 = vrot.slane %v1563, %v1573
    %v1575 = vlaneseq
    %v1576 = vshrl.u32 %v1575, 7
    %v1577 = vsub.s32 0, %v1576
    %v1578 = vrot.slane %v1570, %v1577
    %1579 = vrot.lane.b32.xlu0 %v1574, 64
    %v1580 = vpop.permute.xlu0 %1579
    %1581 = vrot.lane.b32.xlu0 %v1578, 64
    %v1582 = vpop.permute.xlu0 %1581
    %1585 = vst.msk [vmem:[#allocation2 + $0x6] sm:$0x1] %vm411, %v1580
    %1586 = vst.msk [vmem:[#allocation2 + $0xe] sm:$0x1] %vm411, %v1582
    %v1587 = vcombine.high %v1563, %v1563
    %v1588 = vcombine.high %v1570, %v1570
    %v1589 = vlaneseq
    %v1590 = vshrl.u32 %v1589, 7
    %v1591 = vsub.s32 0, %v1590
    %v1592 = vrot.slane %v1587, %v1591
    %v1593 = vlaneseq
    %v1594 = vshrl.u32 %v1593, 7
    %v1595 = vsub.s32 0, %v1594
    %v1596 = vrot.slane %v1588, %v1595
    %1597 = vrot.lane.b32.xlu0 %v1592, 96
    %v1598 = vpop.permute.xlu0 %1597
    %1599 = vrot.lane.b32.xlu0 %v1596, 96
    %v1600 = vpop.permute.xlu0 %1599
    %1603 = vst.msk [vmem:[#allocation2 + $0x1] sm:$0x1] %vm430, %v1598
    %1604 = vst.msk [vmem:[#allocation2 + $0x9] sm:$0x1] %vm430, %v1600
    %v1605 = vsel %vm227, %v1412, %v1411
    %v1607 = vsel %vm234, %v1408, %v1407
    %v1608 = vrot.slane %v207, 6
    %v1609 = vrot.slane %v213, 5
    %v1610 = vsel %vm234, %v1609, %v1608
    %1611 = vrot.lane.b32.xlu0 %v1607, 32
    %v1612 = vpop.permute.xlu0 %1611
    %1613 = vrot.lane.b32.xlu0 %v1610, 32
    %v1614 = vpop.permute.xlu0 %1613
    %v1615 = vsel %vm243, %v1612, %v1614
    %v1617 = vsel %vm111, %v1605, %v1615
    %1619 = vrot.lane.b32.xlu0 %v1547, 64
    %v1620 = vpop.permute.xlu0 %1619
    %v1621 = vsel %vm243, %v1620, 0
    %1623 = vmatprep.subr.mxu0 %v216
    %1624 = vmatpush1.msra.mxu0 %v215
    %1625 = vmatprep.subr.mxu0 %v218
    %1626 = vmatpush1.msra.mxu0 %v217
    %1627 = vmatprep.subr.mxu0 %v220
    %1628 = vmatpush1.msra.mxu0 %v219
    %1629 = vmatprep.subr.mxu0 %v222
    %1630 = vmatpush1.msra.mxu0 %v221
    %1631 = vmatprep.subr.mxu0 0.0
    %1632 = vmatpush1.msra.mxu0 0.0
    %1633 = vmatprep.subr.mxu0 0.0
    %1634 = vmatpush1.msra.mxu0 0.0
    %1635 = vmatprep.subr.mxu0 0.0
    %1636 = vmatpush1.msra.mxu0 0.0
    %1637 = vmatprep.subr.mxu0 0.0
    %1638 = vmatpush1.msra.mxu0 0.0
    %1639 = vmatprep.subr.mxu0 0.0
    %1640 = vmatpush1.msra.mxu0 0.0
    %1641 = vmatprep.subr.mxu0 0.0
    %1642 = vmatpush1.msra.mxu0 0.0
    %1643 = vmatprep.subr.mxu0 0.0
    %1644 = vmatpush1.msra.mxu0 0.0
    %1645 = vmatprep.subr.mxu0 0.0
    %1646 = vmatpush1.msra.mxu0 0.0
    %1647 = vmatprep.subr.mxu0 0.0
    %1648 = vmatpush1.msra.mxu0 0.0
    %1649 = vmatprep.subr.mxu0 0.0
    %1650 = vmatpush1.msra.mxu0 0.0
    %1651 = vmatprep.subr.mxu0 0.0
    %1652 = vmatpush1.msra.mxu0 0.0
    %1653 = vmatprep.subr.mxu0 0.0
    %1654 = vmatpush1.msra.mxu0 0.0
    %1655 = vmatprep.subr.mxu0 0.0
    %1656 = vmatpush1.msra.mxu0 0.0
    %1657 = vmatprep.subr.mxu0 0.0
    %1658 = vmatpush1.msra.mxu0 0.0
    %1659 = vmatprep.subr.mxu0 0.0
    %1660 = vmatpush1.msra.mxu0 0.0
    %1661 = vmatprep.subr.mxu0 0.0
    %1662 = vmatpush1.msra.mxu0 0.0
    %1663 = vmatprep.subr.mxu0 0.0
    %1664 = vmatpush1.msra.mxu0 0.0
    %1665 = vmatprep.subr.mxu0 0.0
    %1666 = vmatpush1.msra.mxu0 0.0
    %1667 = vmatprep.subr.mxu0 0.0
    %1668 = vmatpush1.msra.mxu0 0.0
    %1669 = vmatprep.subr.mxu0 0.0
    %1670 = vmatpush1.msra.mxu0 0.0
    %1671 = vmatprep.subr.mxu0 0.0
    %1672 = vmatpush1.msra.mxu0 0.0
    %1673 = vmatprep.subr.mxu0 0.0
    %1674 = vmatpush1.msra.mxu0 0.0
    %1675 = vmatprep.subr.mxu0 0.0
    %1676 = vmatpush1.msra.mxu0 0.0
    %1677 = vmatprep.subr.mxu0 0.0
    %1678 = vmatpush1.msra.mxu0 0.0
    %1679 = vmatprep.subr.mxu0 0.0
    %1680 = vmatpush1.msra.mxu0 0.0
    %1681 = vmatprep.subr.mxu0 0.0
    %1682 = vmatpush1.msra.mxu0 0.0
    %1683 = vmatprep.subr.mxu0 0.0
    %1684 = vmatpush1.msra.mxu0 0.0
    %1685 = vmatprep.subr.mxu0 0.0
    %1686 = vmatpush1.msra.mxu0 0.0
    %1687 = vmatprep.mubr.f32.mxu0 0.0
    %1688 = vmatmul.mubr.f32.gmra.mrb[0].mxu0 %v1621
    %v1689 = vpop.f32.mrb[0].mxu0
    %v1690 = vadd.f32 0.0, %v1689
    %v1691 = vpop.f32.mrb[0].mxu0
    %v1692 = vadd.f32 0.0, %v1691
    %1693 = vdwg.mxu0
    %1696 = vrot.lane.b32.xlu0 %v1690, 32
    %v1697 = vpop.permute.xlu0 %1696
    %1698 = vrot.lane.b32.xlu0 %v1692, 32
    %v1699 = vpop.permute.xlu0 %1698
    %v1700 = vsel %vm243, %v1697, %v1699
    %v1702 = vsel %vm322, %v1690, %v1700
    %v1703 = vadd.f32 %v1617, %v1702
    %v1704 = vxor.u32 %v1703, 2147483648
    %v1705 = vmul.f32 %v1704, 1.442695
    %v1706 = vpow.pop %v1705
    %v1707 = vadd.f32 %v1706, 1.0
    %v1708 = vrcp.pop %v1707
    %v1709 = vmul.f32 1.0, %v1708
    %v1710 = vadd.f32 %v1702, %v341
    %1712 = vrot.lane.b32.xlu0 %v1710, 64
    %v1713 = vpop.permute.xlu0 %1712
    %v1715 = vmul.f32 %v1709, %v1713
    %1717 = vrot.lane.b32.xlu0 %v1715, 64
    %v1718 = vpop.permute.xlu0 %1717
    %v1720 = vadd.f32 %v1617, %v1718
    %v1721 = vtanh.pop %v1720
    %v1722 = vsub.f32 %v1547, %v1721
    %1724 = vrot.lane.b32.xlu0 %v1722, 96
    %v1725 = vpop.permute.xlu0 %1724
    %v1727 = vmul.f32 %v1709, %v1725
    %1729 = vrot.lane.b32.xlu0 %v1727, 32
    %v1730 = vpop.permute.xlu0 %1729
    %v1732 = vadd.f32 %v1721, %v1730
    %v1733 = vsel %vm109, 7, 0
    %vm1734 = vcmp.lt.s32.totalorder %v1733, %v112
    %v1735 = vsel %vm1734, 1, 0
    %1736 = vset.pattern.permute.xlu0 0
    %1737 = vperm.xlu0 %1736, %v1735
    %v1738 = vpop.permute.xlu0 %1737
    %vm1739 = vcmp.eq.s32.totalorder %v1738, 1
    %v1740 = vsel %vm1739, %v1732, 0.0
    %v1743 = vunpack.c.l.s4 1966171168
    %v1744 = vunpack.c.0.s8 %v1743
    %v1745 = vlaneseq
    %v1746 = vshrl.u32 %v1745, 7
    %v1747 = vsub.s32 %v1744, %v1746
    %v1748 = vrot.slane %v1740, %v1747
    %v1749 = vcombine.high %v1748, %v1748
    %v1751 = vunpack.c.l.s4 1966171168
    %v1752 = vunpack.c.0.s8 %v1751
    %v1753 = vlaneseq
    %v1754 = vshrl.u32 %v1753, 7
    %v1755 = vsub.s32 %v1752, %v1754
    %v1756 = vrot.slane %v1748, %v1755
    %v1758 = vunpack.c.l.s4 1966171168
    %v1759 = vunpack.c.0.s8 %v1758
    %v1760 = vlaneseq
    %v1761 = vshrl.u32 %v1760, 7
    %v1762 = vsub.s32 %v1759, %v1761
    %v1763 = vrot.slane %v1749, %v1762
    %v1764 = vlaneseq
    %v1765 = vshrl.u32 %v1764, 7
    %v1766 = vsub.s32 0, %v1765
    %v1767 = vrot.slane %v1756, %v1766
    %v1768 = vlaneseq
    %v1769 = vshrl.u32 %v1768, 7
    %v1770 = vsub.s32 0, %v1769
    %v1771 = vrot.slane %v1763, %v1770
    %1772 = vrot.lane.b32.xlu0 %v1767, 64
    %v1773 = vpop.permute.xlu0 %1772
    %1774 = vrot.lane.b32.xlu0 %v1771, 64
    %v1775 = vpop.permute.xlu0 %1774
    %1778 = vst.msk [vmem:[#allocation2 + $0x7] sm:$0x1] %vm411, %v1773
    %1779 = vst.msk [vmem:[#allocation2 + $0xf] sm:$0x1] %vm411, %v1775
    %v1780 = vcombine.high %v1756, %v1756
    %v1781 = vcombine.high %v1763, %v1763
    %v1782 = vlaneseq
    %v1783 = vshrl.u32 %v1782, 7
    %v1784 = vsub.s32 0, %v1783
    %v1785 = vrot.slane %v1780, %v1784
    %v1786 = vlaneseq
    %v1787 = vshrl.u32 %v1786, 7
    %v1788 = vsub.s32 0, %v1787
    %v1789 = vrot.slane %v1781, %v1788
    %1790 = vrot.lane.b32.xlu0 %v1785, 96
    %v1791 = vpop.permute.xlu0 %1790
    %1792 = vrot.lane.b32.xlu0 %v1789, 96
    %v1793 = vpop.permute.xlu0 %1792
    %1796 = vst.msk [vmem:[#allocation2] sm:$0x1] %vm430, %v1791
    %1797 = vst.msk [vmem:[#allocation2 + $0x8] sm:$0x1] %vm430, %v1793
    %v1798 = vld [vmem:[#allocation2] sm:$0xff]
    %v1799 = vld [vmem:[#allocation2 + $0x8] sm:$0xff]
    %v1800 = vld [vmem:[#allocation9] sm:$0xff]
    %v1801 = vld [vmem:[#allocation9 + $0x8] sm:$0xff]
    %v1802 = vld [vmem:[#allocation9 + $0x10] sm:$0xff]
    %v1803 = vld [vmem:[#allocation9 + $0x18] sm:$0xff]
    %v1804 = vld [vmem:[#allocation9 + $0x20] sm:$0xff]
    %v1805 = vld [vmem:[#allocation9 + $0x28] sm:$0xff]
    %v1806 = vld [vmem:[#allocation9 + $0x30] sm:$0xff]
    %v1807 = vld [vmem:[#allocation9 + $0x38] sm:$0xff]
    %v1808 = vld [vmem:[#allocation9 + $0x40] sm:$0xff]
    %v1809 = vld [vmem:[#allocation9 + $0x48] sm:$0xff]
    %v1810 = vld [vmem:[#allocation9 + $0x50] sm:$0xff]
    %v1811 = vld [vmem:[#allocation9 + $0x58] sm:$0xff]
    %v1812 = vld [vmem:[#allocation9 + $0x60] sm:$0xff]
    %v1813 = vld [vmem:[#allocation9 + $0x68] sm:$0xff]
    %v1814 = vld [vmem:[#allocation9 + $0x70] sm:$0xff]
    %v1815 = vld [vmem:[#allocation9 + $0x78] sm:$0xff]
    %v1816 = vld [vmem:[%s7] sm:$0x3]
    %v1818 = vlaneseq
    %v1819 = vshrl.u32 %v1818, 7
    %v1820 = vsub.s32 0, %v1819
    %v1821 = vrot.slane %v1816, %v1820
    %v1822 = vlaneseq
    %v1823 = vshrl.u32 %v1822, 7
    %v1824 = vsub.s32 1, %v1823
    %v1825 = vrot.slane %v1816, %v1824
    %vm1828 = vcmask 523264
    %v1830 = vsel %vm1828, %v1798, 0
    %v1833 = vsel %vm1828, %v1799, 0
    %1835 = vmatprep.subr.mxu0 %v1801
    %1836 = vmatpush1.msra.mxu0 %v1800
    %1837 = vmatprep.subr.mxu0 %v1803
    %1838 = vmatpush1.msra.mxu0 %v1802
    %1839 = vmatprep.subr.mxu0 %v1805
    %1840 = vmatpush1.msra.mxu0 %v1804
    %1841 = vmatprep.subr.mxu0 %v1807
    %1842 = vmatpush1.msra.mxu0 %v1806
    %1843 = vmatprep.subr.mxu0 %v1809
    %1844 = vmatpush1.msra.mxu0 %v1808
    %1845 = vmatprep.subr.mxu0 %v1811
    %1846 = vmatpush1.msra.mxu0 %v1810
    %1847 = vmatprep.subr.mxu0 %v1813
    %1848 = vmatpush1.msra.mxu0 %v1812
    %1849 = vmatprep.subr.mxu0 %v1815
    %1850 = vmatpush1.msra.mxu0 %v1814
    %1851 = vmatprep.subr.mxu0 0.0
    %1852 = vmatpush1.msra.mxu0 0.0
    %1853 = vmatprep.subr.mxu0 0.0
    %1854 = vmatpush1.msra.mxu0 0.0
    %1855 = vmatprep.subr.mxu0 0.0
    %1856 = vmatpush1.msra.mxu0 0.0
    %1857 = vmatprep.subr.mxu0 0.0
    %1858 = vmatpush1.msra.mxu0 0.0
    %1859 = vmatprep.subr.mxu0 0.0
    %1860 = vmatpush1.msra.mxu0 0.0
    %1861 = vmatprep.subr.mxu0 0.0
    %1862 = vmatpush1.msra.mxu0 0.0
    %1863 = vmatprep.subr.mxu0 0.0
    %1864 = vmatpush1.msra.mxu0 0.0
    %1865 = vmatprep.subr.mxu0 0.0
    %1866 = vmatpush1.msra.mxu0 0.0
    %1867 = vmatprep.subr.mxu0 0.0
    %1868 = vmatpush1.msra.mxu0 0.0
    %1869 = vmatprep.subr.mxu0 0.0
    %1870 = vmatpush1.msra.mxu0 0.0
    %1871 = vmatprep.subr.mxu0 0.0
    %1872 = vmatpush1.msra.mxu0 0.0
    %1873 = vmatprep.subr.mxu0 0.0
    %1874 = vmatpush1.msra.mxu0 0.0
    %1875 = vmatprep.subr.mxu0 0.0
    %1876 = vmatpush1.msra.mxu0 0.0
    %1877 = vmatprep.subr.mxu0 0.0
    %1878 = vmatpush1.msra.mxu0 0.0
    %1879 = vmatprep.subr.mxu0 0.0
    %1880 = vmatpush1.msra.mxu0 0.0
    %1881 = vmatprep.subr.mxu0 0.0
    %1882 = vmatpush1.msra.mxu0 0.0
    %1883 = vmatprep.subr.mxu0 0.0
    %1884 = vmatpush1.msra.mxu0 0.0
    %1885 = vmatprep.subr.mxu0 0.0
    %1886 = vmatpush1.msra.mxu0 0.0
    %1887 = vmatprep.subr.mxu0 0.0
    %1888 = vmatpush1.msra.mxu0 0.0
    %1889 = vmatprep.subr.mxu0 0.0
    %1890 = vmatpush1.msra.mxu0 0.0
    %1891 = vmatprep.subr.mxu0 0.0
    %1892 = vmatpush1.msra.mxu0 0.0
    %1893 = vmatprep.subr.mxu0 0.0
    %1894 = vmatpush1.msra.mxu0 0.0
    %1895 = vmatprep.subr.mxu0 0.0
    %1896 = vmatpush1.msra.mxu0 0.0
    %1897 = vmatprep.subr.mxu0 0.0
    %1898 = vmatpush1.msra.mxu0 0.0
    %1899 = vmatprep.mubr.f32.mxu0 0.0
    %1900 = vmatmul.mubr.f32.gmra.mrb[0].mxu0 %v1830
    %v1901 = vpop.f32.mrb[0].mxu0
    %v1902 = vadd.f32 %v1821, %v1901
    %v1903 = vpop.f32.mrb[0].mxu0
    %v1904 = vadd.f32 %v1825, %v1903
    %1905 = vmatprep.mubr.f32.mxu0 0.0
    %1906 = vmatmul.mubr.f32.gmra.mrb[0].mxu0 %v1833
    %v1907 = vpop.f32.mrb[0].mxu0
    %v1908 = vadd.f32 %v1821, %v1907
    %v1909 = vpop.f32.mrb[0].mxu0
    %v1910 = vadd.f32 %v1825, %v1909
    %1911 = vdwg.mxu0
    %v1912 = vld [vmem:[#allocation11] sm:$0xff]
    %v1913 = vld [vmem:[#allocation11 + $0x8] sm:$0xff]
    %v1914 = vld [vmem:[#allocation11 + $0x10] sm:$0xff]
    %v1915 = vld [vmem:[#allocation11 + $0x18] sm:$0xff]
    %v1916 = vld [vmem:[#allocation11 + $0x20] sm:$0xff]
    %v1917 = vld [vmem:[#allocation11 + $0x28] sm:$0xff]
    %v1918 = vld [vmem:[#allocation11 + $0x30] sm:$0xff]
    %v1919 = vld [vmem:[#allocation11 + $0x38] sm:$0xff]
    %v1920 = vld [vmem:[%s9] sm:$0xf]
    %v1923 = vrot.slane %v1908, 7
    %v1924 = vsel %vm227, %v1923, %v1902
    %v1928 = vrot.slane %v1902, 5
    %v1929 = vrot.slane %v1908, 4
    %v1930 = vsel %vm234, %v1929, %v1928
    %v1931 = vrot.slane %v1904, 5
    %v1932 = vrot.slane %v1910, 4
    %v1933 = vsel %vm234, %v1932, %v1931
    %1934 = vrot.lane.b32.xlu0 %v1930, 32
    %v1935 = vpop.permute.xlu0 %1934
    %1936 = vrot.lane.b32.xlu0 %v1933, 32
    %v1937 = vpop.permute.xlu0 %1936
    %v1938 = vsel %vm243, %v1935, %v1937
    %v1940 = vsel %vm111, %v1924, %v1938
    %1941 = vmatprep.subr.mxu0 %v1913
    %1942 = vmatpush1.msra.mxu0 %v1912
    %1943 = vmatprep.subr.mxu0 %v1915
    %1944 = vmatpush1.msra.mxu0 %v1914
    %1945 = vmatprep.subr.mxu0 %v1917
    %1946 = vmatpush1.msra.mxu0 %v1916
    %1947 = vmatprep.subr.mxu0 %v1919
    %1948 = vmatpush1.msra.mxu0 %v1918
    %1949 = vmatprep.subr.mxu0 0.0
    %1950 = vmatpush1.msra.mxu0 0.0
    %1951 = vmatprep.subr.mxu0 0.0
    %1952 = vmatpush1.msra.mxu0 0.0
    %1953 = vmatprep.subr.mxu0 0.0
    %1954 = vmatpush1.msra.mxu0 0.0
    %1955 = vmatprep.subr.mxu0 0.0
    %1956 = vmatpush1.msra.mxu0 0.0
    %1957 = vmatprep.subr.mxu0 0.0
    %1958 = vmatpush1.msra.mxu0 0.0
    %1959 = vmatprep.subr.mxu0 0.0
    %1960 = vmatpush1.msra.mxu0 0.0
    %1961 = vmatprep.subr.mxu0 0.0
    %1962 = vmatpush1.msra.mxu0 0.0
    %1963 = vmatprep.subr.mxu0 0.0
    %1964 = vmatpush1.msra.mxu0 0.0
    %1965 = vmatprep.subr.mxu0 0.0
    %1966 = vmatpush1.msra.mxu0 0.0
    %1967 = vmatprep.subr.mxu0 0.0
    %1968 = vmatpush1.msra.mxu0 0.0
    %1969 = vmatprep.subr.mxu0 0.0
    %1970 = vmatpush1.msra.mxu0 0.0
    %1971 = vmatprep.subr.mxu0 0.0
    %1972 = vmatpush1.msra.mxu0 0.0
    %1973 = vmatprep.subr.mxu0 0.0
    %1974 = vmatpush1.msra.mxu0 0.0
    %1975 = vmatprep.subr.mxu0 0.0
    %1976 = vmatpush1.msra.mxu0 0.0
    %1977 = vmatprep.subr.mxu0 0.0
    %1978 = vmatpush1.msra.mxu0 0.0
    %1979 = vmatprep.subr.mxu0 0.0
    %1980 = vmatpush1.msra.mxu0 0.0
    %1981 = vmatprep.subr.mxu0 0.0
    %1982 = vmatpush1.msra.mxu0 0.0
    %1983 = vmatprep.subr.mxu0 0.0
    %1984 = vmatpush1.msra.mxu0 0.0
    %1985 = vmatprep.subr.mxu0 0.0
    %1986 = vmatpush1.msra.mxu0 0.0
    %1987 = vmatprep.subr.mxu0 0.0
    %1988 = vmatpush1.msra.mxu0 0.0
    %1989 = vmatprep.subr.mxu0 0.0
    %1990 = vmatpush1.msra.mxu0 0.0
    %1991 = vmatprep.subr.mxu0 0.0
    %1992 = vmatpush1.msra.mxu0 0.0
    %1993 = vmatprep.subr.mxu0 0.0
    %1994 = vmatpush1.msra.mxu0 0.0
    %1995 = vmatprep.subr.mxu0 0.0
    %1996 = vmatpush1.msra.mxu0 0.0
    %1997 = vmatprep.subr.mxu0 0.0
    %1998 = vmatpush1.msra.mxu0 0.0
    %1999 = vmatprep.subr.mxu0 0.0
    %2000 = vmatpush1.msra.mxu0 0.0
    %2001 = vmatprep.subr.mxu0 0.0
    %2002 = vmatpush1.msra.mxu0 0.0
    %2003 = vmatprep.subr.mxu0 0.0
    %2004 = vmatpush1.msra.mxu0 0.0
    %2005 = vmatprep.mubr.f32.mxu0 0.0
    %2006 = vmatmul.mubr.f32.gmra.mrb[0].mxu0 %v248
    %v2007 = vpop.f32.mrb[0].mxu0
    %v2008 = vadd.f32 0.0, %v2007
    %v2009 = vpop.f32.mrb[0].mxu0
    %v2010 = vadd.f32 0.0, %v2009
    %2011 = vdwg.mxu0
    %2014 = vrot.lane.b32.xlu0 %v2008, 32
    %v2015 = vpop.permute.xlu0 %2014
    %2016 = vrot.lane.b32.xlu0 %v2010, 32
    %v2017 = vpop.permute.xlu0 %2016
    %v2018 = vsel %vm243, %v2015, %v2017
    %v2020 = vsel %vm322, %v2008, %v2018
    %v2021 = vadd.f32 %v1940, %v2020
    %v2022 = vxor.u32 %v2021, 2147483648
    %v2023 = vmul.f32 %v2022, 1.442695
    %v2024 = vpow.pop %v2023
    %v2025 = vadd.f32 %v2024, 1.0
    %v2026 = vrcp.pop %v2025
    %v2027 = vmul.f32 1.0, %v2026
    %2029 = vrot.lane.b32.xlu0 %v1920, 64
    %v2030 = vpop.permute.xlu0 %2029
    %v2032 = vadd.f32 %v2020, %v2030
    %2034 = vrot.lane.b32.xlu0 %v2032, 64
    %v2035 = vpop.permute.xlu0 %2034
    %v2037 = vmul.f32 %v2027, %v2035
    %2039 = vrot.lane.b32.xlu0 %v2037, 64
    %v2040 = vpop.permute.xlu0 %2039
    %v2042 = vadd.f32 %v1940, %v2040
    %v2043 = vtanh.pop %v2042
    %v2044 = vsub.f32 0.0, %v2043
    %2046 = vrot.lane.b32.xlu0 %v2044, 96
    %v2047 = vpop.permute.xlu0 %2046
    %v2049 = vmul.f32 %v2027, %v2047
    %2051 = vrot.lane.b32.xlu0 %v2049, 32
    %v2052 = vpop.permute.xlu0 %2051
    %v2054 = vadd.f32 %v2043, %v2052
    %v2055 = vsel %vm372, %v2054, 0.0
    %v2058 = vunpack.c.l.s4 1966171168
    %v2059 = vunpack.c.0.s8 %v2058
    %v2060 = vlaneseq
    %v2061 = vshrl.u32 %v2060, 7
    %v2062 = vsub.s32 %v2059, %v2061
    %v2063 = vrot.slane %v2055, %v2062
    %v2064 = vcombine.high %v2063, %v2063
    %v2066 = vunpack.c.l.s4 1966171168
    %v2067 = vunpack.c.0.s8 %v2066
    %v2068 = vlaneseq
    %v2069 = vshrl.u32 %v2068, 7
    %v2070 = vsub.s32 %v2067, %v2069
    %v2071 = vrot.slane %v2063, %v2070
    %v2073 = vunpack.c.l.s4 1966171168
    %v2074 = vunpack.c.0.s8 %v2073
    %v2075 = vlaneseq
    %v2076 = vshrl.u32 %v2075, 7
    %v2077 = vsub.s32 %v2074, %v2076
    %v2078 = vrot.slane %v2064, %v2077
    %v2079 = vlaneseq
    %v2080 = vshrl.u32 %v2079, 7
    %v2081 = vsub.s32 0, %v2080
    %v2082 = vrot.slane %v2071, %v2081
    %v2083 = vlaneseq
    %v2084 = vshrl.u32 %v2083, 7
    %v2085 = vsub.s32 0, %v2084
    %v2086 = vrot.slane %v2078, %v2085
    %2087 = vrot.lane.b32.xlu0 %v2082, 64
    %v2088 = vpop.permute.xlu0 %2087
    %2089 = vrot.lane.b32.xlu0 %v2086, 64
    %v2090 = vpop.permute.xlu0 %2089
    %2093 = vst.msk [vmem:[#allocation12] sm:$0x1] %vm411, %v2088
    %2094 = vst.msk [vmem:[#allocation12 + $0x8] sm:$0x1] %vm411, %v2090
    %v2095 = vcombine.high %v2071, %v2071
    %v2096 = vcombine.high %v2078, %v2078
    %v2097 = vlaneseq
    %v2098 = vshrl.u32 %v2097, 7
    %v2099 = vsub.s32 0, %v2098
    %v2100 = vrot.slane %v2095, %v2099
    %v2101 = vlaneseq
    %v2102 = vshrl.u32 %v2101, 7
    %v2103 = vsub.s32 0, %v2102
    %v2104 = vrot.slane %v2096, %v2103
    %2105 = vrot.lane.b32.xlu0 %v2100, 96
    %v2106 = vpop.permute.xlu0 %2105
    %2107 = vrot.lane.b32.xlu0 %v2104, 96
    %v2108 = vpop.permute.xlu0 %2107
    %2111 = vst.msk [vmem:[#allocation12 + $0x7] sm:$0x1] %vm430, %v2106
    %2112 = vst.msk [vmem:[#allocation12 + $0xf] sm:$0x1] %vm430, %v2108
    %v2113 = vrot.slane %v1902, 1
    %v2114 = vsel %vm227, %v1908, %v2113
    %v2116 = vrot.slane %v1902, 4
    %v2117 = vrot.slane %v1908, 3
    %v2118 = vsel %vm234, %v2117, %v2116
    %v2119 = vrot.slane %v1904, 4
    %v2120 = vrot.slane %v1910, 3
    %v2121 = vsel %vm234, %v2120, %v2119
    %2122 = vrot.lane.b32.xlu0 %v2118, 32
    %v2123 = vpop.permute.xlu0 %2122
    %2124 = vrot.lane.b32.xlu0 %v2121, 32
    %v2125 = vpop.permute.xlu0 %2124
    %v2126 = vsel %vm243, %v2123, %v2125
    %v2128 = vsel %vm111, %v2114, %v2126
    %2129 = vrot.lane.b32.xlu0 %v2055, 64
    %v2130 = vpop.permute.xlu0 %2129
    %v2131 = vsel %vm243, %v2130, 0
    %2133 = vmatprep.subr.mxu0 %v1913
    %2134 = vmatpush1.msra.mxu0 %v1912
    %2135 = vmatprep.subr.mxu0 %v1915
    %2136 = vmatpush1.msra.mxu0 %v1914
    %2137 = vmatprep.subr.mxu0 %v1917
    %2138 = vmatpush1.msra.mxu0 %v1916
    %2139 = vmatprep.subr.mxu0 %v1919
    %2140 = vmatpush1.msra.mxu0 %v1918
    %2141 = vmatprep.subr.mxu0 0.0
    %2142 = vmatpush1.msra.mxu0 0.0
    %2143 = vmatprep.subr.mxu0 0.0
    %2144 = vmatpush1.msra.mxu0 0.0
    %2145 = vmatprep.subr.mxu0 0.0
    %2146 = vmatpush1.msra.mxu0 0.0
    %2147 = vmatprep.subr.mxu0 0.0
    %2148 = vmatpush1.msra.mxu0 0.0
    %2149 = vmatprep.subr.mxu0 0.0
    %2150 = vmatpush1.msra.mxu0 0.0
    %2151 = vmatprep.subr.mxu0 0.0
    %2152 = vmatpush1.msra.mxu0 0.0
    %2153 = vmatprep.subr.mxu0 0.0
    %2154 = vmatpush1.msra.mxu0 0.0
    %2155 = vmatprep.subr.mxu0 0.0
    %2156 = vmatpush1.msra.mxu0 0.0
    %2157 = vmatprep.subr.mxu0 0.0
    %2158 = vmatpush1.msra.mxu0 0.0
    %2159 = vmatprep.subr.mxu0 0.0
    %2160 = vmatpush1.msra.mxu0 0.0
    %2161 = vmatprep.subr.mxu0 0.0
    %2162 = vmatpush1.msra.mxu0 0.0
    %2163 = vmatprep.subr.mxu0 0.0
    %2164 = vmatpush1.msra.mxu0 0.0
    %2165 = vmatprep.subr.mxu0 0.0
    %2166 = vmatpush1.msra.mxu0 0.0
    %2167 = vmatprep.subr.mxu0 0.0
    %2168 = vmatpush1.msra.mxu0 0.0
    %2169 = vmatprep.subr.mxu0 0.0
    %2170 = vmatpush1.msra.mxu0 0.0
    %2171 = vmatprep.subr.mxu0 0.0
    %2172 = vmatpush1.msra.mxu0 0.0
    %2173 = vmatprep.subr.mxu0 0.0
    %2174 = vmatpush1.msra.mxu0 0.0
    %2175 = vmatprep.subr.mxu0 0.0
    %2176 = vmatpush1.msra.mxu0 0.0
    %2177 = vmatprep.subr.mxu0 0.0
    %2178 = vmatpush1.msra.mxu0 0.0
    %2179 = vmatprep.subr.mxu0 0.0
    %2180 = vmatpush1.msra.mxu0 0.0
    %2181 = vmatprep.subr.mxu0 0.0
    %2182 = vmatpush1.msra.mxu0 0.0
    %2183 = vmatprep.subr.mxu0 0.0
    %2184 = vmatpush1.msra.mxu0 0.0
    %2185 = vmatprep.subr.mxu0 0.0
    %2186 = vmatpush1.msra.mxu0 0.0
    %2187 = vmatprep.subr.mxu0 0.0
    %2188 = vmatpush1.msra.mxu0 0.0
    %2189 = vmatprep.subr.mxu0 0.0
    %2190 = vmatpush1.msra.mxu0 0.0
    %2191 = vmatprep.subr.mxu0 0.0
    %2192 = vmatpush1.msra.mxu0 0.0
    %2193 = vmatprep.subr.mxu0 0.0
    %2194 = vmatpush1.msra.mxu0 0.0
    %2195 = vmatprep.subr.mxu0 0.0
    %2196 = vmatpush1.msra.mxu0 0.0
    %2197 = vmatprep.mubr.f32.mxu0 0.0
    %2198 = vmatmul.mubr.f32.gmra.mrb[0].mxu0 %v2131
    %v2199 = vpop.f32.mrb[0].mxu0
    %v2200 = vadd.f32 0.0, %v2199
    %v2201 = vpop.f32.mrb[0].mxu0
    %v2202 = vadd.f32 0.0, %v2201
    %2203 = vdwg.mxu0
    %2206 = vrot.lane.b32.xlu0 %v2200, 32
    %v2207 = vpop.permute.xlu0 %2206
    %2208 = vrot.lane.b32.xlu0 %v2202, 32
    %v2209 = vpop.permute.xlu0 %2208
    %v2210 = vsel %vm243, %v2207, %v2209
    %v2212 = vsel %vm322, %v2200, %v2210
    %v2213 = vadd.f32 %v2128, %v2212
    %v2214 = vxor.u32 %v2213, 2147483648
    %v2215 = vmul.f32 %v2214, 1.442695
    %v2216 = vpow.pop %v2215
    %v2217 = vadd.f32 %v2216, 1.0
    %v2218 = vrcp.pop %v2217
    %v2219 = vmul.f32 1.0, %v2218
    %v2220 = vadd.f32 %v2212, %v2030
    %2222 = vrot.lane.b32.xlu0 %v2220, 64
    %v2223 = vpop.permute.xlu0 %2222
    %v2225 = vmul.f32 %v2219, %v2223
    %2227 = vrot.lane.b32.xlu0 %v2225, 64
    %v2228 = vpop.permute.xlu0 %2227
    %v2230 = vadd.f32 %v2128, %v2228
    %v2231 = vtanh.pop %v2230
    %v2232 = vsub.f32 %v2055, %v2231
    %2234 = vrot.lane.b32.xlu0 %v2232, 96
    %v2235 = vpop.permute.xlu0 %2234
    %v2237 = vmul.f32 %v2219, %v2235
    %2239 = vrot.lane.b32.xlu0 %v2237, 32
    %v2240 = vpop.permute.xlu0 %2239
    %v2242 = vadd.f32 %v2231, %v2240
    %v2243 = vsel %vm569, %v2242, 0.0
    %v2244 = vsel %vm569, %v2242, %v2055
    %v2247 = vunpack.c.l.s4 1966171168
    %v2248 = vunpack.c.0.s8 %v2247
    %v2249 = vlaneseq
    %v2250 = vshrl.u32 %v2249, 7
    %v2251 = vsub.s32 %v2248, %v2250
    %v2252 = vrot.slane %v2243, %v2251
    %v2253 = vcombine.high %v2252, %v2252
    %v2255 = vunpack.c.l.s4 1966171168
    %v2256 = vunpack.c.0.s8 %v2255
    %v2257 = vlaneseq
    %v2258 = vshrl.u32 %v2257, 7
    %v2259 = vsub.s32 %v2256, %v2258
    %v2260 = vrot.slane %v2252, %v2259
    %v2262 = vunpack.c.l.s4 1966171168
    %v2263 = vunpack.c.0.s8 %v2262
    %v2264 = vlaneseq
    %v2265 = vshrl.u32 %v2264, 7
    %v2266 = vsub.s32 %v2263, %v2265
    %v2267 = vrot.slane %v2253, %v2266
    %v2268 = vlaneseq
    %v2269 = vshrl.u32 %v2268, 7
    %v2270 = vsub.s32 0, %v2269
    %v2271 = vrot.slane %v2260, %v2270
    %v2272 = vlaneseq
    %v2273 = vshrl.u32 %v2272, 7
    %v2274 = vsub.s32 0, %v2273
    %v2275 = vrot.slane %v2267, %v2274
    %2276 = vrot.lane.b32.xlu0 %v2271, 64
    %v2277 = vpop.permute.xlu0 %2276
    %2278 = vrot.lane.b32.xlu0 %v2275, 64
    %v2279 = vpop.permute.xlu0 %2278
    %2282 = vst.msk [vmem:[#allocation12 + $0x1] sm:$0x1] %vm411, %v2277
    %2283 = vst.msk [vmem:[#allocation12 + $0x9] sm:$0x1] %vm411, %v2279
    %v2284 = vcombine.high %v2260, %v2260
    %v2285 = vcombine.high %v2267, %v2267
    %v2286 = vlaneseq
    %v2287 = vshrl.u32 %v2286, 7
    %v2288 = vsub.s32 0, %v2287
    %v2289 = vrot.slane %v2284, %v2288
    %v2290 = vlaneseq
    %v2291 = vshrl.u32 %v2290, 7
    %v2292 = vsub.s32 0, %v2291
    %v2293 = vrot.slane %v2285, %v2292
    %2294 = vrot.lane.b32.xlu0 %v2289, 96
    %v2295 = vpop.permute.xlu0 %2294
    %2296 = vrot.lane.b32.xlu0 %v2293, 96
    %v2297 = vpop.permute.xlu0 %2296
    %2300 = vst.msk [vmem:[#allocation12 + $0x6] sm:$0x1] %vm430, %v2295
    %2301 = vst.msk [vmem:[#allocation12 + $0xe] sm:$0x1] %vm430, %v2297
    %v2302 = vrot.slane %v1902, 2
    %v2303 = vrot.slane %v1908, 1
    %v2304 = vsel %vm227, %v2303, %v2302
    %v2306 = vrot.slane %v1902, 3
    %v2307 = vrot.slane %v1908, 2
    %v2308 = vsel %vm234, %v2307, %v2306
    %v2309 = vrot.slane %v1904, 3
    %v2310 = vrot.slane %v1910, 2
    %v2311 = vsel %vm234, %v2310, %v2309
    %2312 = vrot.lane.b32.xlu0 %v2308, 32
    %v2313 = vpop.permute.xlu0 %2312
    %2314 = vrot.lane.b32.xlu0 %v2311, 32
    %v2315 = vpop.permute.xlu0 %2314
    %v2316 = vsel %vm243, %v2313, %v2315
    %v2318 = vsel %vm111, %v2304, %v2316
    %2320 = vrot.lane.b32.xlu0 %v2244, 64
    %v2321 = vpop.permute.xlu0 %2320
    %v2322 = vsel %vm243, %v2321, 0
    %2324 = vmatprep.subr.mxu0 %v1913
    %2325 = vmatpush1.msra.mxu0 %v1912
    %2326 = vmatprep.subr.mxu0 %v1915
    %2327 = vmatpush1.msra.mxu0 %v1914
    %2328 = vmatprep.subr.mxu0 %v1917
    %2329 = vmatpush1.msra.mxu0 %v1916
    %2330 = vmatprep.subr.mxu0 %v1919
    %2331 = vmatpush1.msra.mxu0 %v1918
    %2332 = vmatprep.subr.mxu0 0.0
    %2333 = vmatpush1.msra.mxu0 0.0
    %2334 = vmatprep.subr.mxu0 0.0
    %2335 = vmatpush1.msra.mxu0 0.0
    %2336 = vmatprep.subr.mxu0 0.0
    %2337 = vmatpush1.msra.mxu0 0.0
    %2338 = vmatprep.subr.mxu0 0.0
    %2339 = vmatpush1.msra.mxu0 0.0
    %2340 = vmatprep.subr.mxu0 0.0
    %2341 = vmatpush1.msra.mxu0 0.0
    %2342 = vmatprep.subr.mxu0 0.0
    %2343 = vmatpush1.msra.mxu0 0.0
    %2344 = vmatprep.subr.mxu0 0.0
    %2345 = vmatpush1.msra.mxu0 0.0
    %2346 = vmatprep.subr.mxu0 0.0
    %2347 = vmatpush1.msra.mxu0 0.0
    %2348 = vmatprep.subr.mxu0 0.0
    %2349 = vmatpush1.msra.mxu0 0.0
    %2350 = vmatprep.subr.mxu0 0.0
    %2351 = vmatpush1.msra.mxu0 0.0
    %2352 = vmatprep.subr.mxu0 0.0
    %2353 = vmatpush1.msra.mxu0 0.0
    %2354 = vmatprep.subr.mxu0 0.0
    %2355 = vmatpush1.msra.mxu0 0.0
    %2356 = vmatprep.subr.mxu0 0.0
    %2357 = vmatpush1.msra.mxu0 0.0
    %2358 = vmatprep.subr.mxu0 0.0
    %2359 = vmatpush1.msra.mxu0 0.0
    %2360 = vmatprep.subr.mxu0 0.0
    %2361 = vmatpush1.msra.mxu0 0.0
    %2362 = vmatprep.subr.mxu0 0.0
    %2363 = vmatpush1.msra.mxu0 0.0
    %2364 = vmatprep.subr.mxu0 0.0
    %2365 = vmatpush1.msra.mxu0 0.0
    %2366 = vmatprep.subr.mxu0 0.0
    %2367 = vmatpush1.msra.mxu0 0.0
    %2368 = vmatprep.subr.mxu0 0.0
    %2369 = vmatpush1.msra.mxu0 0.0
    %2370 = vmatprep.subr.mxu0 0.0
    %2371 = vmatpush1.msra.mxu0 0.0
    %2372 = vmatprep.subr.mxu0 0.0
    %2373 = vmatpush1.msra.mxu0 0.0
    %2374 = vmatprep.subr.mxu0 0.0
    %2375 = vmatpush1.msra.mxu0 0.0
    %2376 = vmatprep.subr.mxu0 0.0
    %2377 = vmatpush1.msra.mxu0 0.0
    %2378 = vmatprep.subr.mxu0 0.0
    %2379 = vmatpush1.msra.mxu0 0.0
    %2380 = vmatprep.subr.mxu0 0.0
    %2381 = vmatpush1.msra.mxu0 0.0
    %2382 = vmatprep.subr.mxu0 0.0
    %2383 = vmatpush1.msra.mxu0 0.0
    %2384 = vmatprep.subr.mxu0 0.0
    %2385 = vmatpush1.msra.mxu0 0.0
    %2386 = vmatprep.subr.mxu0 0.0
    %2387 = vmatpush1.msra.mxu0 0.0
    %2388 = vmatprep.mubr.f32.mxu0 0.0
    %2389 = vmatmul.mubr.f32.gmra.mrb[0].mxu0 %v2322
    %v2390 = vpop.f32.mrb[0].mxu0
    %v2391 = vadd.f32 0.0, %v2390
    %v2392 = vpop.f32.mrb[0].mxu0
    %v2393 = vadd.f32 0.0, %v2392
    %2394 = vdwg.mxu0
    %2397 = vrot.lane.b32.xlu0 %v2391, 32
    %v2398 = vpop.permute.xlu0 %2397
    %2399 = vrot.lane.b32.xlu0 %v2393, 32
    %v2400 = vpop.permute.xlu0 %2399
    %v2401 = vsel %vm243, %v2398, %v2400
    %v2403 = vsel %vm322, %v2391, %v2401
    %v2404 = vadd.f32 %v2318, %v2403
    %v2405 = vxor.u32 %v2404, 2147483648
    %v2406 = vmul.f32 %v2405, 1.442695
    %v2407 = vpow.pop %v2406
    %v2408 = vadd.f32 %v2407, 1.0
    %v2409 = vrcp.pop %v2408
    %v2410 = vmul.f32 1.0, %v2409
    %v2411 = vadd.f32 %v2403, %v2030
    %2413 = vrot.lane.b32.xlu0 %v2411, 64
    %v2414 = vpop.permute.xlu0 %2413
    %v2416 = vmul.f32 %v2410, %v2414
    %2418 = vrot.lane.b32.xlu0 %v2416, 64
    %v2419 = vpop.permute.xlu0 %2418
    %v2421 = vadd.f32 %v2318, %v2419
    %v2422 = vtanh.pop %v2421
    %v2423 = vsub.f32 %v2244, %v2422
    %2425 = vrot.lane.b32.xlu0 %v2423, 96
    %v2426 = vpop.permute.xlu0 %2425
    %v2428 = vmul.f32 %v2410, %v2426
    %2430 = vrot.lane.b32.xlu0 %v2428, 32
    %v2431 = vpop.permute.xlu0 %2430
    %v2433 = vadd.f32 %v2422, %v2431
    %v2434 = vsel %vm767, %v2433, 0.0
    %v2435 = vsel %vm767, %v2433, %v2244
    %v2438 = vunpack.c.l.s4 1966171168
    %v2439 = vunpack.c.0.s8 %v2438
    %v2440 = vlaneseq
    %v2441 = vshrl.u32 %v2440, 7
    %v2442 = vsub.s32 %v2439, %v2441
    %v2443 = vrot.slane %v2434, %v2442
    %v2444 = vcombine.high %v2443, %v2443
    %v2446 = vunpack.c.l.s4 1966171168
    %v2447 = vunpack.c.0.s8 %v2446
    %v2448 = vlaneseq
    %v2449 = vshrl.u32 %v2448, 7
    %v2450 = vsub.s32 %v2447, %v2449
    %v2451 = vrot.slane %v2443, %v2450
    %v2453 = vunpack.c.l.s4 1966171168
    %v2454 = vunpack.c.0.s8 %v2453
    %v2455 = vlaneseq
    %v2456 = vshrl.u32 %v2455, 7
    %v2457 = vsub.s32 %v2454, %v2456
    %v2458 = vrot.slane %v2444, %v2457
    %v2459 = vlaneseq
    %v2460 = vshrl.u32 %v2459, 7
    %v2461 = vsub.s32 0, %v2460
    %v2462 = vrot.slane %v2451, %v2461
    %v2463 = vlaneseq
    %v2464 = vshrl.u32 %v2463, 7
    %v2465 = vsub.s32 0, %v2464
    %v2466 = vrot.slane %v2458, %v2465
    %2467 = vrot.lane.b32.xlu0 %v2462, 64
    %v2468 = vpop.permute.xlu0 %2467
    %2469 = vrot.lane.b32.xlu0 %v2466, 64
    %v2470 = vpop.permute.xlu0 %2469
    %2473 = vst.msk [vmem:[#allocation12 + $0x2] sm:$0x1] %vm411, %v2468
    %2474 = vst.msk [vmem:[#allocation12 + $0xa] sm:$0x1] %vm411, %v2470
    %v2475 = vcombine.high %v2451, %v2451
    %v2476 = vcombine.high %v2458, %v2458
    %v2477 = vlaneseq
    %v2478 = vshrl.u32 %v2477, 7
    %v2479 = vsub.s32 0, %v2478
    %v2480 = vrot.slane %v2475, %v2479
    %v2481 = vlaneseq
    %v2482 = vshrl.u32 %v2481, 7
    %v2483 = vsub.s32 0, %v2482
    %v2484 = vrot.slane %v2476, %v2483
    %2485 = vrot.lane.b32.xlu0 %v2480, 96
    %v2486 = vpop.permute.xlu0 %2485
    %2487 = vrot.lane.b32.xlu0 %v2484, 96
    %v2488 = vpop.permute.xlu0 %2487
    %2491 = vst.msk [vmem:[#allocation12 + $0x5] sm:$0x1] %vm430, %v2486
    %2492 = vst.msk [vmem:[#allocation12 + $0xd] sm:$0x1] %vm430, %v2488
    %v2493 = vsel %vm227, %v2307, %v2306
    %v2495 = vsel %vm234, %v2303, %v2302
    %v2496 = vrot.slane %v1904, 2
    %v2497 = vrot.slane %v1910, 1
    %v2498 = vsel %vm234, %v2497, %v2496
    %2499 = vrot.lane.b32.xlu0 %v2495, 32
    %v2500 = vpop.permute.xlu0 %2499
    %2501 = vrot.lane.b32.xlu0 %v2498, 32
    %v2502 = vpop.permute.xlu0 %2501
    %v2503 = vsel %vm243, %v2500, %v2502
    %v2505 = vsel %vm111, %v2493, %v2503
    %2507 = vrot.lane.b32.xlu0 %v2435, 64
    %v2508 = vpop.permute.xlu0 %2507
    %v2509 = vsel %vm243, %v2508, 0
    %2511 = vmatprep.subr.mxu0 %v1913
    %2512 = vmatpush1.msra.mxu0 %v1912
    %2513 = vmatprep.subr.mxu0 %v1915
    %2514 = vmatpush1.msra.mxu0 %v1914
    %2515 = vmatprep.subr.mxu0 %v1917
    %2516 = vmatpush1.msra.mxu0 %v1916
    %2517 = vmatprep.subr.mxu0 %v1919
    %2518 = vmatpush1.msra.mxu0 %v1918
    %2519 = vmatprep.subr.mxu0 0.0
    %2520 = vmatpush1.msra.mxu0 0.0
    %2521 = vmatprep.subr.mxu0 0.0
    %2522 = vmatpush1.msra.mxu0 0.0
    %2523 = vmatprep.subr.mxu0 0.0
    %2524 = vmatpush1.msra.mxu0 0.0
    %2525 = vmatprep.subr.mxu0 0.0
    %2526 = vmatpush1.msra.mxu0 0.0
    %2527 = vmatprep.subr.mxu0 0.0
    %2528 = vmatpush1.msra.mxu0 0.0
    %2529 = vmatprep.subr.mxu0 0.0
    %2530 = vmatpush1.msra.mxu0 0.0
    %2531 = vmatprep.subr.mxu0 0.0
    %2532 = vmatpush1.msra.mxu0 0.0
    %2533 = vmatprep.subr.mxu0 0.0
    %2534 = vmatpush1.msra.mxu0 0.0
    %2535 = vmatprep.subr.mxu0 0.0
    %2536 = vmatpush1.msra.mxu0 0.0
    %2537 = vmatprep.subr.mxu0 0.0
    %2538 = vmatpush1.msra.mxu0 0.0
    %2539 = vmatprep.subr.mxu0 0.0
    %2540 = vmatpush1.msra.mxu0 0.0
    %2541 = vmatprep.subr.mxu0 0.0
    %2542 = vmatpush1.msra.mxu0 0.0
    %2543 = vmatprep.subr.mxu0 0.0
    %2544 = vmatpush1.msra.mxu0 0.0
    %2545 = vmatprep.subr.mxu0 0.0
    %2546 = vmatpush1.msra.mxu0 0.0
    %2547 = vmatprep.subr.mxu0 0.0
    %2548 = vmatpush1.msra.mxu0 0.0
    %2549 = vmatprep.subr.mxu0 0.0
    %2550 = vmatpush1.msra.mxu0 0.0
    %2551 = vmatprep.subr.mxu0 0.0
    %2552 = vmatpush1.msra.mxu0 0.0
    %2553 = vmatprep.subr.mxu0 0.0
    %2554 = vmatpush1.msra.mxu0 0.0
    %2555 = vmatprep.subr.mxu0 0.0
    %2556 = vmatpush1.msra.mxu0 0.0
    %2557 = vmatprep.subr.mxu0 0.0
    %2558 = vmatpush1.msra.mxu0 0.0
    %2559 = vmatprep.subr.mxu0 0.0
    %2560 = vmatpush1.msra.mxu0 0.0
    %2561 = vmatprep.subr.mxu0 0.0
    %2562 = vmatpush1.msra.mxu0 0.0
    %2563 = vmatprep.subr.mxu0 0.0
    %2564 = vmatpush1.msra.mxu0 0.0
    %2565 = vmatprep.subr.mxu0 0.0
    %2566 = vmatpush1.msra.mxu0 0.0
    %2567 = vmatprep.subr.mxu0 0.0
    %2568 = vmatpush1.msra.mxu0 0.0
    %2569 = vmatprep.subr.mxu0 0.0
    %2570 = vmatpush1.msra.mxu0 0.0
    %2571 = vmatprep.subr.mxu0 0.0
    %2572 = vmatpush1.msra.mxu0 0.0
    %2573 = vmatprep.subr.mxu0 0.0
    %2574 = vmatpush1.msra.mxu0 0.0
    %2575 = vmatprep.mubr.f32.mxu0 0.0
    %2576 = vmatmul.mubr.f32.gmra.mrb[0].mxu0 %v2509
    %v2577 = vpop.f32.mrb[0].mxu0
    %v2578 = vadd.f32 0.0, %v2577
    %v2579 = vpop.f32.mrb[0].mxu0
    %v2580 = vadd.f32 0.0, %v2579
    %2581 = vdwg.mxu0
    %2584 = vrot.lane.b32.xlu0 %v2578, 32
    %v2585 = vpop.permute.xlu0 %2584
    %2586 = vrot.lane.b32.xlu0 %v2580, 32
    %v2587 = vpop.permute.xlu0 %2586
    %v2588 = vsel %vm243, %v2585, %v2587
    %v2590 = vsel %vm322, %v2578, %v2588
    %v2591 = vadd.f32 %v2505, %v2590
    %v2592 = vxor.u32 %v2591, 2147483648
    %v2593 = vmul.f32 %v2592, 1.442695
    %v2594 = vpow.pop %v2593
    %v2595 = vadd.f32 %v2594, 1.0
    %v2596 = vrcp.pop %v2595
    %v2597 = vmul.f32 1.0, %v2596
    %v2598 = vadd.f32 %v2590, %v2030
    %2600 = vrot.lane.b32.xlu0 %v2598, 64
    %v2601 = vpop.permute.xlu0 %2600
    %v2603 = vmul.f32 %v2597, %v2601
    %2605 = vrot.lane.b32.xlu0 %v2603, 64
    %v2606 = vpop.permute.xlu0 %2605
    %v2608 = vadd.f32 %v2505, %v2606
    %v2609 = vtanh.pop %v2608
    %v2610 = vsub.f32 %v2435, %v2609
    %2612 = vrot.lane.b32.xlu0 %v2610, 96
    %v2613 = vpop.permute.xlu0 %2612
    %v2615 = vmul.f32 %v2597, %v2613
    %2617 = vrot.lane.b32.xlu0 %v2615, 32
    %v2618 = vpop.permute.xlu0 %2617
    %v2620 = vadd.f32 %v2609, %v2618
    %v2621 = vsel %vm961, %v2620, 0.0
    %v2622 = vsel %vm961, %v2620, %v2435
    %v2625 = vunpack.c.l.s4 1966171168
    %v2626 = vunpack.c.0.s8 %v2625
    %v2627 = vlaneseq
    %v2628 = vshrl.u32 %v2627, 7
    %v2629 = vsub.s32 %v2626, %v2628
    %v2630 = vrot.slane %v2621, %v2629
    %v2631 = vcombine.high %v2630, %v2630
    %v2633 = vunpack.c.l.s4 1966171168
    %v2634 = vunpack.c.0.s8 %v2633
    %v2635 = vlaneseq
    %v2636 = vshrl.u32 %v2635, 7
    %v2637 = vsub.s32 %v2634, %v2636
    %v2638 = vrot.slane %v2630, %v2637
    %v2640 = vunpack.c.l.s4 1966171168
    %v2641 = vunpack.c.0.s8 %v2640
    %v2642 = vlaneseq
    %v2643 = vshrl.u32 %v2642, 7
    %v2644 = vsub.s32 %v2641, %v2643
    %v2645 = vrot.slane %v2631, %v2644
    %v2646 = vlaneseq
    %v2647 = vshrl.u32 %v2646, 7
    %v2648 = vsub.s32 0, %v2647
    %v2649 = vrot.slane %v2638, %v2648
    %v2650 = vlaneseq
    %v2651 = vshrl.u32 %v2650, 7
    %v2652 = vsub.s32 0, %v2651
    %v2653 = vrot.slane %v2645, %v2652
    %2654 = vrot.lane.b32.xlu0 %v2649, 64
    %v2655 = vpop.permute.xlu0 %2654
    %2656 = vrot.lane.b32.xlu0 %v2653, 64
    %v2657 = vpop.permute.xlu0 %2656
    %2660 = vst.msk [vmem:[#allocation12 + $0x3] sm:$0x1] %vm411, %v2655
    %2661 = vst.msk [vmem:[#allocation12 + $0xb] sm:$0x1] %vm411, %v2657
    %v2662 = vcombine.high %v2638, %v2638
    %v2663 = vcombine.high %v2645, %v2645
    %v2664 = vlaneseq
    %v2665 = vshrl.u32 %v2664, 7
    %v2666 = vsub.s32 0, %v2665
    %v2667 = vrot.slane %v2662, %v2666
    %v2668 = vlaneseq
    %v2669 = vshrl.u32 %v2668, 7
    %v2670 = vsub.s32 0, %v2669
    %v2671 = vrot.slane %v2663, %v2670
    %2672 = vrot.lane.b32.xlu0 %v2667, 96
    %v2673 = vpop.permute.xlu0 %2672
    %2674 = vrot.lane.b32.xlu0 %v2671, 96
    %v2675 = vpop.permute.xlu0 %2674
    %2678 = vst.msk [vmem:[#allocation12 + $0x4] sm:$0x1] %vm430, %v2673
    %2679 = vst.msk [vmem:[#allocation12 + $0xc] sm:$0x1] %vm430, %v2675
    %v2680 = vsel %vm227, %v2117, %v2116
    %v2682 = vsel %vm234, %v1908, %v2113
    %v2683 = vrot.slane %v1904, 1
    %v2684 = vsel %vm234, %v1910, %v2683
    %2685 = vrot.lane.b32.xlu0 %v2682, 32
    %v2686 = vpop.permute.xlu0 %2685
    %2687 = vrot.lane.b32.xlu0 %v2684, 32
    %v2688 = vpop.permute.xlu0 %2687
    %v2689 = vsel %vm243, %v2686, %v2688
    %v2691 = vsel %vm111, %v2680, %v2689
    %2693 = vrot.lane.b32.xlu0 %v2622, 64
    %v2694 = vpop.permute.xlu0 %2693
    %v2695 = vsel %vm243, %v2694, 0
    %2697 = vmatprep.subr.mxu0 %v1913
    %2698 = vmatpush1.msra.mxu0 %v1912
    %2699 = vmatprep.subr.mxu0 %v1915
    %2700 = vmatpush1.msra.mxu0 %v1914
    %2701 = vmatprep.subr.mxu0 %v1917
    %2702 = vmatpush1.msra.mxu0 %v1916
    %2703 = vmatprep.subr.mxu0 %v1919
    %2704 = vmatpush1.msra.mxu0 %v1918
    %2705 = vmatprep.subr.mxu0 0.0
    %2706 = vmatpush1.msra.mxu0 0.0
    %2707 = vmatprep.subr.mxu0 0.0
    %2708 = vmatpush1.msra.mxu0 0.0
    %2709 = vmatprep.subr.mxu0 0.0
    %2710 = vmatpush1.msra.mxu0 0.0
    %2711 = vmatprep.subr.mxu0 0.0
    %2712 = vmatpush1.msra.mxu0 0.0
    %2713 = vmatprep.subr.mxu0 0.0
    %2714 = vmatpush1.msra.mxu0 0.0
    %2715 = vmatprep.subr.mxu0 0.0
    %2716 = vmatpush1.msra.mxu0 0.0
    %2717 = vmatprep.subr.mxu0 0.0
    %2718 = vmatpush1.msra.mxu0 0.0
    %2719 = vmatprep.subr.mxu0 0.0
    %2720 = vmatpush1.msra.mxu0 0.0
    %2721 = vmatprep.subr.mxu0 0.0
    %2722 = vmatpush1.msra.mxu0 0.0
    %2723 = vmatprep.subr.mxu0 0.0
    %2724 = vmatpush1.msra.mxu0 0.0
    %2725 = vmatprep.subr.mxu0 0.0
    %2726 = vmatpush1.msra.mxu0 0.0
    %2727 = vmatprep.subr.mxu0 0.0
    %2728 = vmatpush1.msra.mxu0 0.0
    %2729 = vmatprep.subr.mxu0 0.0
    %2730 = vmatpush1.msra.mxu0 0.0
    %2731 = vmatprep.subr.mxu0 0.0
    %2732 = vmatpush1.msra.mxu0 0.0
    %2733 = vmatprep.subr.mxu0 0.0
    %2734 = vmatpush1.msra.mxu0 0.0
    %2735 = vmatprep.subr.mxu0 0.0
    %2736 = vmatpush1.msra.mxu0 0.0
    %2737 = vmatprep.subr.mxu0 0.0
    %2738 = vmatpush1.msra.mxu0 0.0
    %2739 = vmatprep.subr.mxu0 0.0
    %2740 = vmatpush1.msra.mxu0 0.0
    %2741 = vmatprep.subr.mxu0 0.0
    %2742 = vmatpush1.msra.mxu0 0.0
    %2743 = vmatprep.subr.mxu0 0.0
    %2744 = vmatpush1.msra.mxu0 0.0
    %2745 = vmatprep.subr.mxu0 0.0
    %2746 = vmatpush1.msra.mxu0 0.0
    %2747 = vmatprep.subr.mxu0 0.0
    %2748 = vmatpush1.msra.mxu0 0.0
    %2749 = vmatprep.subr.mxu0 0.0
    %2750 = vmatpush1.msra.mxu0 0.0
    %2751 = vmatprep.subr.mxu0 0.0
    %2752 = vmatpush1.msra.mxu0 0.0
    %2753 = vmatprep.subr.mxu0 0.0
    %2754 = vmatpush1.msra.mxu0 0.0
    %2755 = vmatprep.subr.mxu0 0.0
    %2756 = vmatpush1.msra.mxu0 0.0
    %2757 = vmatprep.subr.mxu0 0.0
    %2758 = vmatpush1.msra.mxu0 0.0
    %2759 = vmatprep.subr.mxu0 0.0
    %2760 = vmatpush1.msra.mxu0 0.0
    %2761 = vmatprep.mubr.f32.mxu0 0.0
    %2762 = vmatmul.mubr.f32.gmra.mrb[0].mxu0 %v2695
    %v2763 = vpop.f32.mrb[0].mxu0
    %v2764 = vadd.f32 0.0, %v2763
    %v2765 = vpop.f32.mrb[0].mxu0
    %v2766 = vadd.f32 0.0, %v2765
    %2767 = vdwg.mxu0
    %2770 = vrot.lane.b32.xlu0 %v2764, 32
    %v2771 = vpop.permute.xlu0 %2770
    %2772 = vrot.lane.b32.xlu0 %v2766, 32
    %v2773 = vpop.permute.xlu0 %2772
    %v2774 = vsel %vm243, %v2771, %v2773
    %v2776 = vsel %vm322, %v2764, %v2774
    %v2777 = vadd.f32 %v2691, %v2776
    %v2778 = vxor.u32 %v2777, 2147483648
    %v2779 = vmul.f32 %v2778, 1.442695
    %v2780 = vpow.pop %v2779
    %v2781 = vadd.f32 %v2780, 1.0
    %v2782 = vrcp.pop %v2781
    %v2783 = vmul.f32 1.0, %v2782
    %v2784 = vadd.f32 %v2776, %v2030
    %2786 = vrot.lane.b32.xlu0 %v2784, 64
    %v2787 = vpop.permute.xlu0 %2786
    %v2789 = vmul.f32 %v2783, %v2787
    %2791 = vrot.lane.b32.xlu0 %v2789, 64
    %v2792 = vpop.permute.xlu0 %2791
    %v2794 = vadd.f32 %v2691, %v2792
    %v2795 = vtanh.pop %v2794
    %v2796 = vsub.f32 %v2622, %v2795
    %2798 = vrot.lane.b32.xlu0 %v2796, 96
    %v2799 = vpop.permute.xlu0 %2798
    %v2801 = vmul.f32 %v2783, %v2799
    %2803 = vrot.lane.b32.xlu0 %v2801, 32
    %v2804 = vpop.permute.xlu0 %2803
    %v2806 = vadd.f32 %v2795, %v2804
    %v2807 = vsel %vm1154, %v2806, 0.0
    %v2808 = vsel %vm1154, %v2806, %v2622
    %v2811 = vunpack.c.l.s4 1966171168
    %v2812 = vunpack.c.0.s8 %v2811
    %v2813 = vlaneseq
    %v2814 = vshrl.u32 %v2813, 7
    %v2815 = vsub.s32 %v2812, %v2814
    %v2816 = vrot.slane %v2807, %v2815
    %v2817 = vcombine.high %v2816, %v2816
    %v2819 = vunpack.c.l.s4 1966171168
    %v2820 = vunpack.c.0.s8 %v2819
    %v2821 = vlaneseq
    %v2822 = vshrl.u32 %v2821, 7
    %v2823 = vsub.s32 %v2820, %v2822
    %v2824 = vrot.slane %v2816, %v2823
    %v2826 = vunpack.c.l.s4 1966171168
    %v2827 = vunpack.c.0.s8 %v2826
    %v2828 = vlaneseq
    %v2829 = vshrl.u32 %v2828, 7
    %v2830 = vsub.s32 %v2827, %v2829
    %v2831 = vrot.slane %v2817, %v2830
    %v2832 = vlaneseq
    %v2833 = vshrl.u32 %v2832, 7
    %v2834 = vsub.s32 0, %v2833
    %v2835 = vrot.slane %v2824, %v2834
    %v2836 = vlaneseq
    %v2837 = vshrl.u32 %v2836, 7
    %v2838 = vsub.s32 0, %v2837
    %v2839 = vrot.slane %v2831, %v2838
    %2840 = vrot.lane.b32.xlu0 %v2835, 64
    %v2841 = vpop.permute.xlu0 %2840
    %2842 = vrot.lane.b32.xlu0 %v2839, 64
    %v2843 = vpop.permute.xlu0 %2842
    %2846 = vst.msk [vmem:[#allocation12 + $0x4] sm:$0x1] %vm411, %v2841
    %2847 = vst.msk [vmem:[#allocation12 + $0xc] sm:$0x1] %vm411, %v2843
    %v2848 = vcombine.high %v2824, %v2824
    %v2849 = vcombine.high %v2831, %v2831
    %v2850 = vlaneseq
    %v2851 = vshrl.u32 %v2850, 7
    %v2852 = vsub.s32 0, %v2851
    %v2853 = vrot.slane %v2848, %v2852
    %v2854 = vlaneseq
    %v2855 = vshrl.u32 %v2854, 7
    %v2856 = vsub.s32 0, %v2855
    %v2857 = vrot.slane %v2849, %v2856
    %2858 = vrot.lane.b32.xlu0 %v2853, 96
    %v2859 = vpop.permute.xlu0 %2858
    %2860 = vrot.lane.b32.xlu0 %v2857, 96
    %v2861 = vpop.permute.xlu0 %2860
    %2864 = vst.msk [vmem:[#allocation12 + $0x3] sm:$0x1] %vm430, %v2859
    %2865 = vst.msk [vmem:[#allocation12 + $0xb] sm:$0x1] %vm430, %v2861
    %v2866 = vsel %vm227, %v1929, %v1928
    %v2868 = vsel %vm234, %v1923, %v1902
    %v2869 = vrot.slane %v1910, 7
    %v2870 = vsel %vm234, %v2869, %v1904
    %2871 = vrot.lane.b32.xlu0 %v2868, 32
    %v2872 = vpop.permute.xlu0 %2871
    %2873 = vrot.lane.b32.xlu0 %v2870, 32
    %v2874 = vpop.permute.xlu0 %2873
    %v2875 = vsel %vm243, %v2872, %v2874
    %v2877 = vsel %vm111, %v2866, %v2875
    %2879 = vrot.lane.b32.xlu0 %v2808, 64
    %v2880 = vpop.permute.xlu0 %2879
    %v2881 = vsel %vm243, %v2880, 0
    %2883 = vmatprep.subr.mxu0 %v1913
    %2884 = vmatpush1.msra.mxu0 %v1912
    %2885 = vmatprep.subr.mxu0 %v1915
    %2886 = vmatpush1.msra.mxu0 %v1914
    %2887 = vmatprep.subr.mxu0 %v1917
    %2888 = vmatpush1.msra.mxu0 %v1916
    %2889 = vmatprep.subr.mxu0 %v1919
    %2890 = vmatpush1.msra.mxu0 %v1918
    %2891 = vmatprep.subr.mxu0 0.0
    %2892 = vmatpush1.msra.mxu0 0.0
    %2893 = vmatprep.subr.mxu0 0.0
    %2894 = vmatpush1.msra.mxu0 0.0
    %2895 = vmatprep.subr.mxu0 0.0
    %2896 = vmatpush1.msra.mxu0 0.0
    %2897 = vmatprep.subr.mxu0 0.0
    %2898 = vmatpush1.msra.mxu0 0.0
    %2899 = vmatprep.subr.mxu0 0.0
    %2900 = vmatpush1.msra.mxu0 0.0
    %2901 = vmatprep.subr.mxu0 0.0
    %2902 = vmatpush1.msra.mxu0 0.0
    %2903 = vmatprep.subr.mxu0 0.0
    %2904 = vmatpush1.msra.mxu0 0.0
    %2905 = vmatprep.subr.mxu0 0.0
    %2906 = vmatpush1.msra.mxu0 0.0
    %2907 = vmatprep.subr.mxu0 0.0
    %2908 = vmatpush1.msra.mxu0 0.0
    %2909 = vmatprep.subr.mxu0 0.0
    %2910 = vmatpush1.msra.mxu0 0.0
    %2911 = vmatprep.subr.mxu0 0.0
    %2912 = vmatpush1.msra.mxu0 0.0
    %2913 = vmatprep.subr.mxu0 0.0
    %2914 = vmatpush1.msra.mxu0 0.0
    %2915 = vmatprep.subr.mxu0 0.0
    %2916 = vmatpush1.msra.mxu0 0.0
    %2917 = vmatprep.subr.mxu0 0.0
    %2918 = vmatpush1.msra.mxu0 0.0
    %2919 = vmatprep.subr.mxu0 0.0
    %2920 = vmatpush1.msra.mxu0 0.0
    %2921 = vmatprep.subr.mxu0 0.0
    %2922 = vmatpush1.msra.mxu0 0.0
    %2923 = vmatprep.subr.mxu0 0.0
    %2924 = vmatpush1.msra.mxu0 0.0
    %2925 = vmatprep.subr.mxu0 0.0
    %2926 = vmatpush1.msra.mxu0 0.0
    %2927 = vmatprep.subr.mxu0 0.0
    %2928 = vmatpush1.msra.mxu0 0.0
    %2929 = vmatprep.subr.mxu0 0.0
    %2930 = vmatpush1.msra.mxu0 0.0
    %2931 = vmatprep.subr.mxu0 0.0
    %2932 = vmatpush1.msra.mxu0 0.0
    %2933 = vmatprep.subr.mxu0 0.0
    %2934 = vmatpush1.msra.mxu0 0.0
    %2935 = vmatprep.subr.mxu0 0.0
    %2936 = vmatpush1.msra.mxu0 0.0
    %2937 = vmatprep.subr.mxu0 0.0
    %2938 = vmatpush1.msra.mxu0 0.0
    %2939 = vmatprep.subr.mxu0 0.0
    %2940 = vmatpush1.msra.mxu0 0.0
    %2941 = vmatprep.subr.mxu0 0.0
    %2942 = vmatpush1.msra.mxu0 0.0
    %2943 = vmatprep.subr.mxu0 0.0
    %2944 = vmatpush1.msra.mxu0 0.0
    %2945 = vmatprep.subr.mxu0 0.0
    %2946 = vmatpush1.msra.mxu0 0.0
    %2947 = vmatprep.mubr.f32.mxu0 0.0
    %2948 = vmatmul.mubr.f32.gmra.mrb[0].mxu0 %v2881
    %v2949 = vpop.f32.mrb[0].mxu0
    %v2950 = vadd.f32 0.0, %v2949
    %v2951 = vpop.f32.mrb[0].mxu0
    %v2952 = vadd.f32 0.0, %v2951
    %2953 = vdwg.mxu0
    %2956 = vrot.lane.b32.xlu0 %v2950, 32
    %v2957 = vpop.permute.xlu0 %2956
    %2958 = vrot.lane.b32.xlu0 %v2952, 32
    %v2959 = vpop.permute.xlu0 %2958
    %v2960 = vsel %vm243, %v2957, %v2959
    %v2962 = vsel %vm322, %v2950, %v2960
    %v2963 = vadd.f32 %v2877, %v2962
    %v2964 = vxor.u32 %v2963, 2147483648
    %v2965 = vmul.f32 %v2964, 1.442695
    %v2966 = vpow.pop %v2965
    %v2967 = vadd.f32 %v2966, 1.0
    %v2968 = vrcp.pop %v2967
    %v2969 = vmul.f32 1.0, %v2968
    %v2970 = vadd.f32 %v2962, %v2030
    %2972 = vrot.lane.b32.xlu0 %v2970, 64
    %v2973 = vpop.permute.xlu0 %2972
    %v2975 = vmul.f32 %v2969, %v2973
    %2977 = vrot.lane.b32.xlu0 %v2975, 64
    %v2978 = vpop.permute.xlu0 %2977
    %v2980 = vadd.f32 %v2877, %v2978
    %v2981 = vtanh.pop %v2980
    %v2982 = vsub.f32 %v2808, %v2981
    %2984 = vrot.lane.b32.xlu0 %v2982, 96
    %v2985 = vpop.permute.xlu0 %2984
    %v2987 = vmul.f32 %v2969, %v2985
    %2989 = vrot.lane.b32.xlu0 %v2987, 32
    %v2990 = vpop.permute.xlu0 %2989
    %v2992 = vadd.f32 %v2981, %v2990
    %v2993 = vsel %vm1347, %v2992, 0.0
    %v2994 = vsel %vm1347, %v2992, %v2808
    %v2997 = vunpack.c.l.s4 1966171168
    %v2998 = vunpack.c.0.s8 %v2997
    %v2999 = vlaneseq
    %v3000 = vshrl.u32 %v2999, 7
    %v3001 = vsub.s32 %v2998, %v3000
    %v3002 = vrot.slane %v2993, %v3001
    %v3003 = vcombine.high %v3002, %v3002
    %v3005 = vunpack.c.l.s4 1966171168
    %v3006 = vunpack.c.0.s8 %v3005
    %v3007 = vlaneseq
    %v3008 = vshrl.u32 %v3007, 7
    %v3009 = vsub.s32 %v3006, %v3008
    %v3010 = vrot.slane %v3002, %v3009
    %v3012 = vunpack.c.l.s4 1966171168
    %v3013 = vunpack.c.0.s8 %v3012
    %v3014 = vlaneseq
    %v3015 = vshrl.u32 %v3014, 7
    %v3016 = vsub.s32 %v3013, %v3015
    %v3017 = vrot.slane %v3003, %v3016
    %v3018 = vlaneseq
    %v3019 = vshrl.u32 %v3018, 7
    %v3020 = vsub.s32 0, %v3019
    %v3021 = vrot.slane %v3010, %v3020
    %v3022 = vlaneseq
    %v3023 = vshrl.u32 %v3022, 7
    %v3024 = vsub.s32 0, %v3023
    %v3025 = vrot.slane %v3017, %v3024
    %3026 = vrot.lane.b32.xlu0 %v3021, 64
    %v3027 = vpop.permute.xlu0 %3026
    %3028 = vrot.lane.b32.xlu0 %v3025, 64
    %v3029 = vpop.permute.xlu0 %3028
    %3032 = vst.msk [vmem:[#allocation12 + $0x5] sm:$0x1] %vm411, %v3027
    %3033 = vst.msk [vmem:[#allocation12 + $0xd] sm:$0x1] %vm411, %v3029
    %v3034 = vcombine.high %v3010, %v3010
    %v3035 = vcombine.high %v3017, %v3017
    %v3036 = vlaneseq
    %v3037 = vshrl.u32 %v3036, 7
    %v3038 = vsub.s32 0, %v3037
    %v3039 = vrot.slane %v3034, %v3038
    %v3040 = vlaneseq
    %v3041 = vshrl.u32 %v3040, 7
    %v3042 = vsub.s32 0, %v3041
    %v3043 = vrot.slane %v3035, %v3042
    %3044 = vrot.lane.b32.xlu0 %v3039, 96
    %v3045 = vpop.permute.xlu0 %3044
    %3046 = vrot.lane.b32.xlu0 %v3043, 96
    %v3047 = vpop.permute.xlu0 %3046
    %3050 = vst.msk [vmem:[#allocation12 + $0x2] sm:$0x1] %vm430, %v3045
    %3051 = vst.msk [vmem:[#allocation12 + $0xa] sm:$0x1] %vm430, %v3047
    %v3052 = vrot.slane %v1902, 6
    %v3053 = vrot.slane %v1908, 5
    %v3054 = vsel %vm227, %v3053, %v3052
    %v3056 = vrot.slane %v1902, 7
    %v3057 = vrot.slane %v1908, 6
    %v3058 = vsel %vm234, %v3057, %v3056
    %v3059 = vrot.slane %v1904, 7
    %v3060 = vrot.slane %v1910, 6
    %v3061 = vsel %vm234, %v3060, %v3059
    %3062 = vrot.lane.b32.xlu0 %v3058, 32
    %v3063 = vpop.permute.xlu0 %3062
    %3064 = vrot.lane.b32.xlu0 %v3061, 32
    %v3065 = vpop.permute.xlu0 %3064
    %v3066 = vsel %vm243, %v3063, %v3065
    %v3068 = vsel %vm111, %v3054, %v3066
    %3070 = vrot.lane.b32.xlu0 %v2994, 64
    %v3071 = vpop.permute.xlu0 %3070
    %v3072 = vsel %vm243, %v3071, 0
    %3074 = vmatprep.subr.mxu0 %v1913
    %3075 = vmatpush1.msra.mxu0 %v1912
    %3076 = vmatprep.subr.mxu0 %v1915
    %3077 = vmatpush1.msra.mxu0 %v1914
    %3078 = vmatprep.subr.mxu0 %v1917
    %3079 = vmatpush1.msra.mxu0 %v1916
    %3080 = vmatprep.subr.mxu0 %v1919
    %3081 = vmatpush1.msra.mxu0 %v1918
    %3082 = vmatprep.subr.mxu0 0.0
    %3083 = vmatpush1.msra.mxu0 0.0
    %3084 = vmatprep.subr.mxu0 0.0
    %3085 = vmatpush1.msra.mxu0 0.0
    %3086 = vmatprep.subr.mxu0 0.0
    %3087 = vmatpush1.msra.mxu0 0.0
    %3088 = vmatprep.subr.mxu0 0.0
    %3089 = vmatpush1.msra.mxu0 0.0
    %3090 = vmatprep.subr.mxu0 0.0
    %3091 = vmatpush1.msra.mxu0 0.0
    %3092 = vmatprep.subr.mxu0 0.0
    %3093 = vmatpush1.msra.mxu0 0.0
    %3094 = vmatprep.subr.mxu0 0.0
    %3095 = vmatpush1.msra.mxu0 0.0
    %3096 = vmatprep.subr.mxu0 0.0
    %3097 = vmatpush1.msra.mxu0 0.0
    %3098 = vmatprep.subr.mxu0 0.0
    %3099 = vmatpush1.msra.mxu0 0.0
    %3100 = vmatprep.subr.mxu0 0.0
    %3101 = vmatpush1.msra.mxu0 0.0
    %3102 = vmatprep.subr.mxu0 0.0
    %3103 = vmatpush1.msra.mxu0 0.0
    %3104 = vmatprep.subr.mxu0 0.0
    %3105 = vmatpush1.msra.mxu0 0.0
    %3106 = vmatprep.subr.mxu0 0.0
    %3107 = vmatpush1.msra.mxu0 0.0
    %3108 = vmatprep.subr.mxu0 0.0
    %3109 = vmatpush1.msra.mxu0 0.0
    %3110 = vmatprep.subr.mxu0 0.0
    %3111 = vmatpush1.msra.mxu0 0.0
    %3112 = vmatprep.subr.mxu0 0.0
    %3113 = vmatpush1.msra.mxu0 0.0
    %3114 = vmatprep.subr.mxu0 0.0
    %3115 = vmatpush1.msra.mxu0 0.0
    %3116 = vmatprep.subr.mxu0 0.0
    %3117 = vmatpush1.msra.mxu0 0.0
    %3118 = vmatprep.subr.mxu0 0.0
    %3119 = vmatpush1.msra.mxu0 0.0
    %3120 = vmatprep.subr.mxu0 0.0
    %3121 = vmatpush1.msra.mxu0 0.0
    %3122 = vmatprep.subr.mxu0 0.0
    %3123 = vmatpush1.msra.mxu0 0.0
    %3124 = vmatprep.subr.mxu0 0.0
    %3125 = vmatpush1.msra.mxu0 0.0
    %3126 = vmatprep.subr.mxu0 0.0
    %3127 = vmatpush1.msra.mxu0 0.0
    %3128 = vmatprep.subr.mxu0 0.0
    %3129 = vmatpush1.msra.mxu0 0.0
    %3130 = vmatprep.subr.mxu0 0.0
    %3131 = vmatpush1.msra.mxu0 0.0
    %3132 = vmatprep.subr.mxu0 0.0
    %3133 = vmatpush1.msra.mxu0 0.0
    %3134 = vmatprep.subr.mxu0 0.0
    %3135 = vmatpush1.msra.mxu0 0.0
    %3136 = vmatprep.subr.mxu0 0.0
    %3137 = vmatpush1.msra.mxu0 0.0
    %3138 = vmatprep.mubr.f32.mxu0 0.0
    %3139 = vmatmul.mubr.f32.gmra.mrb[0].mxu0 %v3072
    %v3140 = vpop.f32.mrb[0].mxu0
    %v3141 = vadd.f32 0.0, %v3140
    %v3142 = vpop.f32.mrb[0].mxu0
    %v3143 = vadd.f32 0.0, %v3142
    %3144 = vdwg.mxu0
    %3147 = vrot.lane.b32.xlu0 %v3141, 32
    %v3148 = vpop.permute.xlu0 %3147
    %3149 = vrot.lane.b32.xlu0 %v3143, 32
    %v3150 = vpop.permute.xlu0 %3149
    %v3151 = vsel %vm243, %v3148, %v3150
    %v3153 = vsel %vm322, %v3141, %v3151
    %v3154 = vadd.f32 %v3068, %v3153
    %v3155 = vxor.u32 %v3154, 2147483648
    %v3156 = vmul.f32 %v3155, 1.442695
    %v3157 = vpow.pop %v3156
    %v3158 = vadd.f32 %v3157, 1.0
    %v3159 = vrcp.pop %v3158
    %v3160 = vmul.f32 1.0, %v3159
    %v3161 = vadd.f32 %v3153, %v2030
    %3163 = vrot.lane.b32.xlu0 %v3161, 64
    %v3164 = vpop.permute.xlu0 %3163
    %v3166 = vmul.f32 %v3160, %v3164
    %3168 = vrot.lane.b32.xlu0 %v3166, 64
    %v3169 = vpop.permute.xlu0 %3168
    %v3171 = vadd.f32 %v3068, %v3169
    %v3172 = vtanh.pop %v3171
    %v3173 = vsub.f32 %v2994, %v3172
    %3175 = vrot.lane.b32.xlu0 %v3173, 96
    %v3176 = vpop.permute.xlu0 %3175
    %v3178 = vmul.f32 %v3160, %v3176
    %3180 = vrot.lane.b32.xlu0 %v3178, 32
    %v3181 = vpop.permute.xlu0 %3180
    %v3183 = vadd.f32 %v3172, %v3181
    %v3184 = vsel %vm1545, %v3183, 0.0
    %v3185 = vsel %vm1545, %v3183, %v2994
    %v3188 = vunpack.c.l.s4 1966171168
    %v3189 = vunpack.c.0.s8 %v3188
    %v3190 = vlaneseq
    %v3191 = vshrl.u32 %v3190, 7
    %v3192 = vsub.s32 %v3189, %v3191
    %v3193 = vrot.slane %v3184, %v3192
    %v3194 = vcombine.high %v3193, %v3193
    %v3196 = vunpack.c.l.s4 1966171168
    %v3197 = vunpack.c.0.s8 %v3196
    %v3198 = vlaneseq
    %v3199 = vshrl.u32 %v3198, 7
    %v3200 = vsub.s32 %v3197, %v3199
    %v3201 = vrot.slane %v3193, %v3200
    %v3203 = vunpack.c.l.s4 1966171168
    %v3204 = vunpack.c.0.s8 %v3203
    %v3205 = vlaneseq
    %v3206 = vshrl.u32 %v3205, 7
    %v3207 = vsub.s32 %v3204, %v3206
    %v3208 = vrot.slane %v3194, %v3207
    %v3209 = vlaneseq
    %v3210 = vshrl.u32 %v3209, 7
    %v3211 = vsub.s32 0, %v3210
    %v3212 = vrot.slane %v3201, %v3211
    %v3213 = vlaneseq
    %v3214 = vshrl.u32 %v3213, 7
    %v3215 = vsub.s32 0, %v3214
    %v3216 = vrot.slane %v3208, %v3215
    %3217 = vrot.lane.b32.xlu0 %v3212, 64
    %v3218 = vpop.permute.xlu0 %3217
    %3219 = vrot.lane.b32.xlu0 %v3216, 64
    %v3220 = vpop.permute.xlu0 %3219
    %3223 = vst.msk [vmem:[#allocation12 + $0x6] sm:$0x1] %vm411, %v3218
    %3224 = vst.msk [vmem:[#allocation12 + $0xe] sm:$0x1] %vm411, %v3220
    %v3225 = vcombine.high %v3201, %v3201
    %v3226 = vcombine.high %v3208, %v3208
    %v3227 = vlaneseq
    %v3228 = vshrl.u32 %v3227, 7
    %v3229 = vsub.s32 0, %v3228
    %v3230 = vrot.slane %v3225, %v3229
    %v3231 = vlaneseq
    %v3232 = vshrl.u32 %v3231, 7
    %v3233 = vsub.s32 0, %v3232
    %v3234 = vrot.slane %v3226, %v3233
    %3235 = vrot.lane.b32.xlu0 %v3230, 96
    %v3236 = vpop.permute.xlu0 %3235
    %3237 = vrot.lane.b32.xlu0 %v3234, 96
    %v3238 = vpop.permute.xlu0 %3237
    %3241 = vst.msk [vmem:[#allocation12 + $0x1] sm:$0x1] %vm430, %v3236
    %3242 = vst.msk [vmem:[#allocation12 + $0x9] sm:$0x1] %vm430, %v3238
    %v3243 = vsel %vm227, %v3057, %v3056
    %v3245 = vsel %vm234, %v3053, %v3052
    %v3246 = vrot.slane %v1904, 6
    %v3247 = vrot.slane %v1910, 5
    %v3248 = vsel %vm234, %v3247, %v3246
    %3249 = vrot.lane.b32.xlu0 %v3245, 32
    %v3250 = vpop.permute.xlu0 %3249
    %3251 = vrot.lane.b32.xlu0 %v3248, 32
    %v3252 = vpop.permute.xlu0 %3251
    %v3253 = vsel %vm243, %v3250, %v3252
    %v3255 = vsel %vm111, %v3243, %v3253
    %3257 = vrot.lane.b32.xlu0 %v3185, 64
    %v3258 = vpop.permute.xlu0 %3257
    %v3259 = vsel %vm243, %v3258, 0
    %3261 = vmatprep.subr.mxu0 %v1913
    %3262 = vmatpush1.msra.mxu0 %v1912
    %3263 = vmatprep.subr.mxu0 %v1915
    %3264 = vmatpush1.msra.mxu0 %v1914
    %3265 = vmatprep.subr.mxu0 %v1917
    %3266 = vmatpush1.msra.mxu0 %v1916
    %3267 = vmatprep.subr.mxu0 %v1919
    %3268 = vmatpush1.msra.mxu0 %v1918
    %3269 = vmatprep.subr.mxu0 0.0
    %3270 = vmatpush1.msra.mxu0 0.0
    %3271 = vmatprep.subr.mxu0 0.0
    %3272 = vmatpush1.msra.mxu0 0.0
    %3273 = vmatprep.subr.mxu0 0.0
    %3274 = vmatpush1.msra.mxu0 0.0
    %3275 = vmatprep.subr.mxu0 0.0
    %3276 = vmatpush1.msra.mxu0 0.0
    %3277 = vmatprep.subr.mxu0 0.0
    %3278 = vmatpush1.msra.mxu0 0.0
    %3279 = vmatprep.subr.mxu0 0.0
    %3280 = vmatpush1.msra.mxu0 0.0
    %3281 = vmatprep.subr.mxu0 0.0
    %3282 = vmatpush1.msra.mxu0 0.0
    %3283 = vmatprep.subr.mxu0 0.0
    %3284 = vmatpush1.msra.mxu0 0.0
    %3285 = vmatprep.subr.mxu0 0.0
    %3286 = vmatpush1.msra.mxu0 0.0
    %3287 = vmatprep.subr.mxu0 0.0
    %3288 = vmatpush1.msra.mxu0 0.0
    %3289 = vmatprep.subr.mxu0 0.0
    %3290 = vmatpush1.msra.mxu0 0.0
    %3291 = vmatprep.subr.mxu0 0.0
    %3292 = vmatpush1.msra.mxu0 0.0
    %3293 = vmatprep.subr.mxu0 0.0
    %3294 = vmatpush1.msra.mxu0 0.0
    %3295 = vmatprep.subr.mxu0 0.0
    %3296 = vmatpush1.msra.mxu0 0.0
    %3297 = vmatprep.subr.mxu0 0.0
    %3298 = vmatpush1.msra.mxu0 0.0
    %3299 = vmatprep.subr.mxu0 0.0
    %3300 = vmatpush1.msra.mxu0 0.0
    %3301 = vmatprep.subr.mxu0 0.0
    %3302 = vmatpush1.msra.mxu0 0.0
    %3303 = vmatprep.subr.mxu0 0.0
    %3304 = vmatpush1.msra.mxu0 0.0
    %3305 = vmatprep.subr.mxu0 0.0
    %3306 = vmatpush1.msra.mxu0 0.0
    %3307 = vmatprep.subr.mxu0 0.0
    %3308 = vmatpush1.msra.mxu0 0.0
    %3309 = vmatprep.subr.mxu0 0.0
    %3310 = vmatpush1.msra.mxu0 0.0
    %3311 = vmatprep.subr.mxu0 0.0
    %3312 = vmatpush1.msra.mxu0 0.0
    %3313 = vmatprep.subr.mxu0 0.0
    %3314 = vmatpush1.msra.mxu0 0.0
    %3315 = vmatprep.subr.mxu0 0.0
    %3316 = vmatpush1.msra.mxu0 0.0
    %3317 = vmatprep.subr.mxu0 0.0
    %3318 = vmatpush1.msra.mxu0 0.0
    %3319 = vmatprep.subr.mxu0 0.0
    %3320 = vmatpush1.msra.mxu0 0.0
    %3321 = vmatprep.subr.mxu0 0.0
    %3322 = vmatpush1.msra.mxu0 0.0
    %3323 = vmatprep.subr.mxu0 0.0
    %3324 = vmatpush1.msra.mxu0 0.0
    %3325 = vmatprep.mubr.f32.mxu0 0.0
    %3326 = vmatmul.mubr.f32.gmra.mrb[0].mxu0 %v3259
    %v3327 = vpop.f32.mrb[0].mxu0
    %v3328 = vadd.f32 0.0, %v3327
    %v3329 = vpop.f32.mrb[0].mxu0
    %v3330 = vadd.f32 0.0, %v3329
    %3331 = vdwg.mxu0
    %3334 = vrot.lane.b32.xlu0 %v3328, 32
    %v3335 = vpop.permute.xlu0 %3334
    %3336 = vrot.lane.b32.xlu0 %v3330, 32
    %v3337 = vpop.permute.xlu0 %3336
    %v3338 = vsel %vm243, %v3335, %v3337
    %v3340 = vsel %vm322, %v3328, %v3338
    %v3341 = vadd.f32 %v3255, %v3340
    %v3342 = vxor.u32 %v3341, 2147483648
    %v3343 = vmul.f32 %v3342, 1.442695
    %v3344 = vpow.pop %v3343
    %v3345 = vadd.f32 %v3344, 1.0
    %v3346 = vrcp.pop %v3345
    %v3347 = vmul.f32 1.0, %v3346
    %v3348 = vadd.f32 %v3340, %v2030
    %3350 = vrot.lane.b32.xlu0 %v3348, 64
    %v3351 = vpop.permute.xlu0 %3350
    %v3353 = vmul.f32 %v3347, %v3351
    %3355 = vrot.lane.b32.xlu0 %v3353, 64
    %v3356 = vpop.permute.xlu0 %3355
    %v3358 = vadd.f32 %v3255, %v3356
    %v3359 = vtanh.pop %v3358
    %v3360 = vsub.f32 %v3185, %v3359
    %3362 = vrot.lane.b32.xlu0 %v3360, 96
    %v3363 = vpop.permute.xlu0 %3362
    %v3365 = vmul.f32 %v3347, %v3363
    %3367 = vrot.lane.b32.xlu0 %v3365, 32
    %v3368 = vpop.permute.xlu0 %3367
    %v3370 = vadd.f32 %v3359, %v3368
    %v3371 = vsel %vm1739, %v3370, 0.0
    %v3374 = vunpack.c.l.s4 1966171168
    %v3375 = vunpack.c.0.s8 %v3374
    %v3376 = vlaneseq
    %v3377 = vshrl.u32 %v3376, 7
    %v3378 = vsub.s32 %v3375, %v3377
    %v3379 = vrot.slane %v3371, %v3378
    %v3380 = vcombine.high %v3379, %v3379
    %v3382 = vunpack.c.l.s4 1966171168
    %v3383 = vunpack.c.0.s8 %v3382
    %v3384 = vlaneseq
    %v3385 = vshrl.u32 %v3384, 7
    %v3386 = vsub.s32 %v3383, %v3385
    %v3387 = vrot.slane %v3379, %v3386
    %v3389 = vunpack.c.l.s4 1966171168
    %v3390 = vunpack.c.0.s8 %v3389
    %v3391 = vlaneseq
    %v3392 = vshrl.u32 %v3391, 7
    %v3393 = vsub.s32 %v3390, %v3392
    %v3394 = vrot.slane %v3380, %v3393
    %v3395 = vlaneseq
    %v3396 = vshrl.u32 %v3395, 7
    %v3397 = vsub.s32 0, %v3396
    %v3398 = vrot.slane %v3387, %v3397
    %v3399 = vlaneseq
    %v3400 = vshrl.u32 %v3399, 7
    %v3401 = vsub.s32 0, %v3400
    %v3402 = vrot.slane %v3394, %v3401
    %3403 = vrot.lane.b32.xlu0 %v3398, 64
    %v3404 = vpop.permute.xlu0 %3403
    %3405 = vrot.lane.b32.xlu0 %v3402, 64
    %v3406 = vpop.permute.xlu0 %3405
    %3409 = vst.msk [vmem:[#allocation12 + $0x7] sm:$0x1] %vm411, %v3404
    %3410 = vst.msk [vmem:[#allocation12 + $0xf] sm:$0x1] %vm411, %v3406
    %v3411 = vcombine.high %v3387, %v3387
    %v3412 = vcombine.high %v3394, %v3394
    %v3413 = vlaneseq
    %v3414 = vshrl.u32 %v3413, 7
    %v3415 = vsub.s32 0, %v3414
    %v3416 = vrot.slane %v3411, %v3415
    %v3417 = vlaneseq
    %v3418 = vshrl.u32 %v3417, 7
    %v3419 = vsub.s32 0, %v3418
    %v3420 = vrot.slane %v3412, %v3419
    %3421 = vrot.lane.b32.xlu0 %v3416, 96
    %v3422 = vpop.permute.xlu0 %3421
    %3423 = vrot.lane.b32.xlu0 %v3420, 96
    %v3424 = vpop.permute.xlu0 %3423
    %3427 = vst.msk [vmem:[#allocation12] sm:$0x1] %vm430, %v3422
    %3428 = vst.msk [vmem:[#allocation12 + $0x8] sm:$0x1] %vm430, %v3424
    // Predicated region
    $region62: #{tpu_custom_call.1} parent=1 // pred_check
      _
    $region63: #{tpu_custom_call.1} parent=1 // pred_check_branch
      %3430 = sbr.rel (0) target = $region65
    $region64: #{tpu_custom_call.1} parent=1 // pred_region
      %s3432 = ssub.s32 256, 256
      %3433 = vsyncadd [#allocation5], %s3432
      %s3434 = sshll.u32 [#allocation12], 4
      %s3435 = int_to_ptr.vmem [resolvable:$true] %s3434
      %3440 = dma.vmem_to_hbm [thread:$0]  %s3435, 256, %s10, [#allocation5], 128, 128, 8
    $region65: #{tpu_custom_call.1} parent=1 // pred_fallthru
      _
    // Predicated region
    $region66: #{tpu_custom_call.1} parent=1 // pred_check
      _
    $region67: #{tpu_custom_call.1} parent=1 // pred_check_branch
      %3442 = sbr.rel (0) target = $region69
    $region68: #{tpu_custom_call.1} parent=1 // pred_region
      %3443 = dma.done [#allocation5], 256
    $region69: #{tpu_custom_call.1} parent=1 // pred_fallthru
      _
    %3444 = vsyncpa [#allocation4], 1
    %3445 = vsyncpa [#allocation7], 1
    %3446 = vsyncpa [#allocation10], 1
    %3447 = vsyncpa [#allocation5], 1

</llo_original>
